<compile_context>
chip_gen: v7x
topology: tpu7x:2x2x1
jax: 0.10.0
libtpu: 0.0.40
codegen_flags: <defaults>
</compile_context>

<pallas_src>
import functools

import jax
import jax.numpy as jnp
from jax import lax
from jax.experimental import pallas as pl
from jax.experimental.pallas import tpu as pltpu


def _round_up(x, m):
    return (x + m - 1) // m * m


def _pad_gate_cols(w, h, h_pad):
    """Pad the last axis (4*h, gate order [i, f, g, o]) to 4*h_pad, per gate."""
    lead = w.shape[:-1]
    w = w.reshape(*lead, 4, h)
    w = jnp.pad(w, [(0, 0)] * len(lead) + [(0, 0), (0, h_pad - h)])
    return w.reshape(*lead, 4 * h_pad)


def _default_gate_dtype():
    """bf16 gate math on chips with bf16 VPU/EUP (v6e+); f32 on v5e / non-TPU."""
    try:
        kind = jax.devices()[0].device_kind.lower()
    except Exception:
        return jnp.float32
    if ("v6" in kind) or ("v7" in kind):
        return jnp.bfloat16
    return jnp.float32


def imdb_lstm_kernel(preact_ref, len_ref, w_hh_ref, w_cls_ref, b_cls_ref,
                     out_ref, h_ref, c_ref, acc_ref,
                     *, h_pad, t_tile, unroll, gate_dtype):
    """Grid = (batch_tiles [parallel], time_tiles [arbitrary])."""
    ti = pl.program_id(1)

    @pl.when(ti == 0)
    def _init():
        h_ref[...] = jnp.zeros_like(h_ref)
        c_ref[...] = jnp.zeros_like(c_ref)
        acc_ref[...] = jnp.zeros_like(acc_ref)

    lengths = len_ref[...]                       # (b_tile, 1) int32 — hoisted
    t_base = ti * t_tile                         # global time offset of this tile

    def step(t, carry):
        h, c, acc = carry

        def gate_pre(k):
            # Lane-dense per-gate slab (h_pad is a multiple of 128).  Slicing
            # the refs per gate keeps the live set at ~1 slab instead of the
            # full (b_tile, 4*h_pad) gates tensor (no spill traffic).
            x = preact_ref[t, :, k * h_pad:(k + 1) * h_pad].astype(jnp.float32)
            return x + jnp.dot(h, w_hh_ref[:, k * h_pad:(k + 1) * h_pad],
                               preferred_element_type=jnp.float32)

        gd = gate_dtype
        # Gate nonlinearities / gate products in `gate_dtype`; state in f32.
        ig = (jax.nn.sigmoid(gate_pre(0).astype(gd))
              * jnp.tanh(gate_pre(2).astype(gd))).astype(jnp.float32)
        fg = jax.nn.sigmoid(gate_pre(1).astype(gd)).astype(jnp.float32)
        c_new = fg * c + ig
        og = jax.nn.sigmoid(gate_pre(3).astype(gd))
        h_new = (og * jnp.tanh(c_new.astype(gd))).astype(jnp.float32)

        # pack_padded_sequence semantics: padded steps contribute 0 to the sum.
        mask = (t_base + t) < lengths            # (b_tile, 1) int compare
        acc_new = acc + jnp.where(mask, h_new, 0.0)
        return h_new, c_new, acc_new

    h, c, acc = lax.fori_loop(0, t_tile, step,
                              (h_ref[...], c_ref[...], acc_ref[...]),
                              unroll=unroll)
    h_ref[...] = h
    c_ref[...] = c
    acc_ref[...] = acc

    @pl.when(ti == pl.num_programs(1) - 1)
    def _finalize():
        # seq_emb = sum_t(lstm_out) / lengths  (length-0 padded rows divide by 1)
        inv_len = 1.0 / jnp.maximum(lengths, 1).astype(jnp.float32)
        seq_emb = acc_ref[...] * inv_len                          # (b_tile, H_pad)
        # classifier: Dropout (identity at inference) -> Linear -> Sigmoid
        logits = jnp.dot(seq_emb, w_cls_ref[...],
                         preferred_element_type=jnp.float32) + b_cls_ref[...]
        out_ref[...] = jax.nn.sigmoid(logits)                     # (b_tile, O_pad)


def imdb_net_forward(input_ids, lengths, params, *, b_tile=None, t_tile=None,
                     preact_dtype=jnp.bfloat16, gate_dtype=None):
    """input_ids: (B, T) int32, lengths: (B,) int32 -> probs[:, 1]: (B,) float32."""
    emb_table = params["embedding"]          # (V+2, E)
    w_ih = params["w_ih"]                    # (E, 4H)   gate order [i, f, g, o]
    w_hh = params["w_hh"]                    # (H, 4H)
    b = params["b"]                          # (1, 4H)   (= b_ih + b_hh)
    w_cls = params["w_cls"]                  # (H, O)
    b_cls = params["b_cls"]                  # (1, O)

    B, T = input_ids.shape
    E = emb_table.shape[1]
    H = w_hh.shape[0]
    O = w_cls.shape[1]

    if gate_dtype is None:
        gate_dtype = _default_gate_dtype()

    # Lane-dense hidden / output widths.
    H_pad = _round_up(H, 128)
    O_pad = _round_up(O, 128)

    # Right-size the batch tile to the real batch (kernel is EUP/VPU bound, so
    # batch padding is a near-linear wall-clock loss); prefer >=2 batch tiles
    # when the batch allows it so "parallel" can use both v7x TensorCores.
    if b_tile is None:
        b_tile = max(16, min(128, _round_up(B, 16)))
        if B > b_tile // 2 and _round_up(B, b_tile) == b_tile and b_tile >= 32:
            b_tile //= 2
    B_pad = _round_up(max(B, b_tile), b_tile)

    # Time tile: amortize per-grid-step overhead while keeping the
    # double-buffered preact block well inside v7x's 64 MiB VMEM.
    if t_tile is None:
        bytes_per_step = b_tile * 4 * H_pad * jnp.dtype(preact_dtype).itemsize
        t_tile = int(max(8, min(128, T, (12 * 1024 * 1024) // bytes_per_step)))
    T_pad = _round_up(T, t_tile)
    unroll = t_tile if t_tile <= 8 else 8

    pad_id = emb_table.shape[0] - 1          # appended all-zero embedding row

    # Time-major ids (transpose the small int array, never the big preact
    # tensor).  Padded batch rows get length 0 and are discarded at the end.
    ids_tm = jnp.full((T_pad, B_pad), pad_id, dtype=input_ids.dtype)
    ids_tm = ids_tm.at[:T, :B].set(input_ids.T)
    len_col = (jnp.zeros((B_pad, 1), jnp.int32)
               .at[:B, 0].set(lengths.astype(jnp.int32)))

    # Per-gate padding keeps gate k in columns [k*H_pad, k*H_pad + H); zero
    # padding makes the extra hidden units exactly inert (h stays 0 there).
    w_ih_p = _pad_gate_cols(w_ih, H, H_pad).astype(jnp.float32)   # (E, 4H_pad)
    w_hh_p = jnp.pad(_pad_gate_cols(w_hh, H, H_pad),
                     ((0, H_pad - H), (0, 0))).astype(jnp.float32)  # (H_pad, 4H_pad)
    b_p = _pad_gate_cols(b, H, H_pad).astype(jnp.float32)         # (1, 4H_pad)
    w_cls_p = jnp.pad(w_cls, ((0, H_pad - H), (0, O_pad - O))).astype(jnp.float32)
    b_cls_p = jnp.pad(b_cls, ((0, 0), (0, O_pad - O))).astype(jnp.float32)

    # Hoisted input projection: embedding gather + ONE (T*B, E)@(E, 4H_pad)
    # matmul, emitted time-major with the bias folded in.  Kept f32 x f32 = f32
    # (works on MXU, XLA:CPU and interpret mode); only the storage of the
    # streamed pre-activations is narrowed to `preact_dtype`.
    embeds = jnp.take(emb_table, ids_tm, axis=0).astype(jnp.float32)  # (T_pad, B_pad, E)
    preact = embeds.reshape(T_pad * B_pad, E) @ w_ih_p                # f32
    preact = ((preact + b_p).astype(preact_dtype)
              .reshape(T_pad, B_pad, 4 * H_pad))

    grid = (B_pad // b_tile, T_pad // t_tile)
    kernel = functools.partial(imdb_lstm_kernel, h_pad=H_pad, t_tile=t_tile,
                               unroll=unroll, gate_dtype=gate_dtype)

    probs = pl.pallas_call(
        kernel,
        out_shape=jax.ShapeDtypeStruct((B_pad, O_pad), jnp.float32),
        grid_spec=pltpu.PrefetchScalarGridSpec(
            num_scalar_prefetch=0,
            grid=grid,
            in_specs=[
                # streamed, double-buffered gate pre-activations (time-major)
                pl.BlockSpec((t_tile, b_tile, 4 * H_pad),
                             lambda bi, ti: (ti, bi, 0)),
                pl.BlockSpec((b_tile, 1), lambda bi, ti: (bi, 0)),
                # weights: constant block index -> fetched once, VMEM-resident
                pl.BlockSpec((H_pad, 4 * H_pad), lambda bi, ti: (0, 0)),
                pl.BlockSpec((H_pad, O_pad), lambda bi, ti: (0, 0)),
                pl.BlockSpec((1, O_pad), lambda bi, ti: (0, 0)),
            ],
            out_specs=pl.BlockSpec((b_tile, O_pad), lambda bi, ti: (bi, 0)),
            scratch_shapes=[pltpu.VMEM((b_tile, H_pad), jnp.float32)] * 3,
        ),
        compiler_params=pltpu.CompilerParams(
            dimension_semantics=("parallel", "arbitrary"),
            # <= ~48 MiB: safe on v7x's 64 MiB/TC VMEM, plenty for v5e/v6e.
            vmem_limit_bytes=48 * 1024 * 1024,
        ),
    )(preact, len_col, w_hh_p, w_cls_p, b_cls_p)

    # logits = logits[:, 1]; logits = logits.float()
    return probs[:B, 1].astype(jnp.float32)


def reference_forward(input_ids, lengths, params):
    """Pure-JAX f32 reference with identical packed-LSTM sum semantics."""
    emb = jnp.take(params["embedding"], input_ids, axis=0).astype(jnp.float32)
    B, T, _ = emb.shape
    H = params["w_hh"].shape[0]
    h = jnp.zeros((B, H), jnp.float32)
    c = jnp.zeros((B, H), jnp.float32)
    acc = jnp.zeros((B, H), jnp.float32)
    for t in range(T):
        gates = emb[:, t] @ params["w_ih"] + h @ params["w_hh"] + params["b"]
        i = jax.nn.sigmoid(gates[:, :H])
        f = jax.nn.sigmoid(gates[:, H:2 * H])
        g = jnp.tanh(gates[:, 2 * H:3 * H])
        o = jax.nn.sigmoid(gates[:, 3 * H:])
        c = f * c + i * g
        h = o * jnp.tanh(c)
        mask = (t < lengths)[:, None]
        acc = acc + jnp.where(mask, h, 0.0)
    seq_emb = acc / lengths[:, None].astype(jnp.float32)
    probs = jax.nn.sigmoid(seq_emb @ params["w_cls"] + params["b_cls"])
    return probs[:, 1].astype(jnp.float32)


def init_params(key, vocab, emb_dim, hidden, out_dim):
    k = jax.random.split(key, 6)
    # "pretrained" embedding table + two appended zero vectors (pad/unk rows)
    emb = jax.random.normal(k[0], (vocab, emb_dim), jnp.float32) * 0.1
    emb = jnp.concatenate([emb, jnp.zeros((2, emb_dim), jnp.float32)], axis=0)
    scale = 1.0 / jnp.sqrt(hidden)
    return {
        "embedding": emb,
        "w_ih": jax.random.uniform(k[1], (emb_dim, 4 * hidden), jnp.float32,
                                   -scale, scale),
        "w_hh": jax.random.uniform(k[2], (hidden, 4 * hidden), jnp.float32,
                                   -scale, scale),
        "b": jax.random.uniform(k[3], (1, 4 * hidden), jnp.float32,
                                -scale, scale),
        "w_cls": jax.random.uniform(k[4], (hidden, out_dim), jnp.float32,
                                    -scale, scale),
        "b_cls": jax.random.uniform(k[5], (1, out_dim), jnp.float32,
                                    -scale, scale),
    }


if __name__ == "__main__":
    # Small shapes consistent with the module's forward (1-layer uni LSTM).
    B, T, E, H, O, V = 2, 8, 16, 32, 2, 50

    key = jax.random.PRNGKey(0)
    k_par, k_ids = jax.random.split(key)
    params = init_params(k_par, V, E, H, O)

    lengths = jnp.array([8, 5], dtype=jnp.int32)
    input_ids = jax.random.randint(k_ids, (B, T), 0, V, dtype=jnp.int32)
    # pad positions beyond length with the appended zero-embedding row
    t_idx = jnp.arange(T)[None, :]
    input_ids = jnp.where(t_idx < lengths[:, None], input_ids, V)

    fwd = jax.jit(imdb_net_forward)
    logits = fwd(input_ids, lengths, params)
    jax.block_until_ready(logits)
    assert logits.shape == (B,) and logits.dtype == jnp.float32

    ref = reference_forward(input_ids, lengths, params)
    assert jnp.allclose(logits, ref, atol=2e-2), (logits, ref)
    print("KERNEL_OK")
</pallas_src>

<mosaic_0001>
module attributes {stable_mosaic.version = 11 : i64} {
  func.func @imdb_lstm_kernel(%arg0: i32, %arg1: i32, %arg2: memref<8x16x512xbf16, #tpu.memory_space<vmem>>, %arg3: memref<16x1xi32, #tpu.memory_space<vmem>>, %arg4: memref<128x512xf32, #tpu.memory_space<vmem>>, %arg5: memref<128x128xf32, #tpu.memory_space<vmem>>, %arg6: memref<1x128xf32, #tpu.memory_space<vmem>>, %arg7: memref<16x128xf32, #tpu.memory_space<vmem>>, %arg8: memref<16x128xf32, #tpu.memory_space<vmem>>, %arg9: memref<16x128xf32, #tpu.memory_space<vmem>>, %arg10: memref<16x128xf32, #tpu.memory_space<vmem>>) attributes {dimension_semantics = [#tpu.dimension_semantics<parallel>, #tpu.dimension_semantics<arbitrary>], iteration_bounds = array<i64: 1, 1>, scalar_prefetch = 0 : i64, scratch_operands = 3 : i64, tpu.core_type = #tpu.core_type<tc>, window_params = [{transform_indices = @transform_0, window_bounds = array<i64: 8, 16, 512>}, {transform_indices = @transform_1, window_bounds = array<i64: 16, 1>}, {pipeline_mode = #tpu.pipeline_mode<synchronous>, transform_indices = @transform_2, window_bounds = array<i64: 128, 512>}, {pipeline_mode = #tpu.pipeline_mode<synchronous>, transform_indices = @transform_3, window_bounds = array<i64: 128, 128>}, {pipeline_mode = #tpu.pipeline_mode<synchronous>, transform_indices = @transform_4, window_bounds = array<i64: 1, 128>}, {transform_indices = @transform_5, window_bounds = array<i64: 16, 128>}]} {
    %c0_i32 = arith.constant 0 : i32
    %0 = arith.cmpi eq, %arg1, %c0_i32 : i32
    %1 = arith.extui %0 : i1 to i32
    %c0_i32_0 = arith.constant 0 : i32
    %2 = arith.cmpi ne, %1, %c0_i32_0 : i32
    scf.if %2 {
      %cst_206 = arith.constant 0.000000e+00 : f32
      %470 = vector.broadcast %cst_206 : f32 to vector<16x128xf32>
      %c0_207 = arith.constant 0 : index
      %c0_208 = arith.constant 0 : index
      %471 = vector.load %arg8[%c0_207, %c0_208] : memref<16x128xf32, #tpu.memory_space<vmem>>, vector<16x128xf32>
      tpu.vector_store %arg8[%c0_207, %c0_208], %470 {strides = array<i32>} : memref<16x128xf32, #tpu.memory_space<vmem>>, vector<16x128xf32>,
      %cst_209 = arith.constant 0.000000e+00 : f32
      %472 = vector.broadcast %cst_209 : f32 to vector<16x128xf32>
      %c0_210 = arith.constant 0 : index
      %c0_211 = arith.constant 0 : index
      %473 = vector.load %arg9[%c0_210, %c0_211] : memref<16x128xf32, #tpu.memory_space<vmem>>, vector<16x128xf32>
      tpu.vector_store %arg9[%c0_210, %c0_211], %472 {strides = array<i32>} : memref<16x128xf32, #tpu.memory_space<vmem>>, vector<16x128xf32>,
      %cst_212 = arith.constant 0.000000e+00 : f32
      %474 = vector.broadcast %cst_212 : f32 to vector<16x128xf32>
      %c0_213 = arith.constant 0 : index
      %c0_214 = arith.constant 0 : index
      %475 = vector.load %arg10[%c0_213, %c0_214] : memref<16x128xf32, #tpu.memory_space<vmem>>, vector<16x128xf32>
      tpu.vector_store %arg10[%c0_213, %c0_214], %474 {strides = array<i32>} : memref<16x128xf32, #tpu.memory_space<vmem>>, vector<16x128xf32>,
    } else {
    }
    %c0 = arith.constant 0 : index
    %c0_1 = arith.constant 0 : index
    %3 = vector.load %arg3[%c0, %c0_1] : memref<16x1xi32, #tpu.memory_space<vmem>>, vector<16x1xi32>
    %c8_i32 = arith.constant 8 : i32
    %4 = arith.muli %arg1, %c8_i32 : i32
    %c0_2 = arith.constant 0 : index
    %c0_3 = arith.constant 0 : index
    %5 = vector.load %arg8[%c0_2, %c0_3] : memref<16x128xf32, #tpu.memory_space<vmem>>, vector<16x128xf32>
    %c0_4 = arith.constant 0 : index
    %c0_5 = arith.constant 0 : index
    %6 = vector.load %arg9[%c0_4, %c0_5] : memref<16x128xf32, #tpu.memory_space<vmem>>, vector<16x128xf32>
    %c0_6 = arith.constant 0 : index
    %c0_7 = arith.constant 0 : index
    %7 = vector.load %arg10[%c0_6, %c0_7] : memref<16x128xf32, #tpu.memory_space<vmem>>, vector<16x128xf32>
    %c0_i32_8 = arith.constant 0 : i32
    %8 = arith.index_cast %c0_i32_8 : i32 to index
    %c0_9 = arith.constant 0 : index
    %c0_10 = arith.constant 0 : index
    %9 = vector.load %arg2[%8, %c0_9, %c0_10] : memref<8x16x512xbf16, #tpu.memory_space<vmem>>, vector<1x16x128xbf16>
    %10 = vector.shape_cast %9 : vector<1x16x128xbf16> to vector<16x128xbf16>
    %11 = arith.extf %10 : vector<16x128xbf16> to vector<16x128xf32>
    %c0_11 = arith.constant 0 : index
    %c0_12 = arith.constant 0 : index
    %12 = vector.load %arg4[%c0_11, %c0_12] : memref<128x512xf32, #tpu.memory_space<vmem>>, vector<128x128xf32>
    %cst = arith.constant dense<0.000000e+00> : vector<16x128xf32>
    %13 = tpu.matmul %5, %12, %cst {dimension_numbers = #tpu.dot_dimension_numbers<[1], [0], [0], [1], [0, 0, 1, 1], [], []>} : vector<16x128xf32>, vector<128x128xf32>, vector<16x128xf32> -> vector<16x128xf32>
    %14 = arith.addf %11, %13 : vector<16x128xf32>
    %15 = arith.negf %14 : vector<16x128xf32>
    %16 = math.exp %15 : vector<16x128xf32>
    %cst_13 = arith.constant 1.000000e+00 : f32
    %17 = vector.broadcast %cst_13 : f32 to vector<16x128xf32>
    %18 = arith.addf %17, %16 : vector<16x128xf32>
    %19 = arith.divf %17, %18 : vector<16x128xf32>
    %20 = arith.index_cast %c0_i32_8 : i32 to index
    %c0_14 = arith.constant 0 : index
    %c256 = arith.constant 256 : index
    %21 = vector.load %arg2[%20, %c0_14, %c256] : memref<8x16x512xbf16, #tpu.memory_space<vmem>>, vector<1x16x128xbf16>
    %22 = vector.shape_cast %21 : vector<1x16x128xbf16> to vector<16x128xbf16>
    %23 = arith.extf %22 : vector<16x128xbf16> to vector<16x128xf32>
    %c0_15 = arith.constant 0 : index
    %c256_16 = arith.constant 256 : index
    %24 = vector.load %arg4[%c0_15, %c256_16] : memref<128x512xf32, #tpu.memory_space<vmem>>, vector<128x128xf32>
    %cst_17 = arith.constant dense<0.000000e+00> : vector<16x128xf32>
    %25 = tpu.matmul %5, %24, %cst_17 {dimension_numbers = #tpu.dot_dimension_numbers<[1], [0], [0], [1], [0, 0, 1, 1], [], []>} : vector<16x128xf32>, vector<128x128xf32>, vector<16x128xf32> -> vector<16x128xf32>
    %26 = arith.addf %23, %25 : vector<16x128xf32>
    %27 = math.tanh %26 : vector<16x128xf32>
    %28 = arith.mulf %19, %27 : vector<16x128xf32>
    %29 = arith.index_cast %c0_i32_8 : i32 to index
    %c0_18 = arith.constant 0 : index
    %c128 = arith.constant 128 : index
    %30 = vector.load %arg2[%29, %c0_18, %c128] : memref<8x16x512xbf16, #tpu.memory_space<vmem>>, vector<1x16x128xbf16>
    %31 = vector.shape_cast %30 : vector<1x16x128xbf16> to vector<16x128xbf16>
    %32 = arith.extf %31 : vector<16x128xbf16> to vector<16x128xf32>
    %c0_19 = arith.constant 0 : index
    %c128_20 = arith.constant 128 : index
    %33 = vector.load %arg4[%c0_19, %c128_20] : memref<128x512xf32, #tpu.memory_space<vmem>>, vector<128x128xf32>
    %cst_21 = arith.constant dense<0.000000e+00> : vector<16x128xf32>
    %34 = tpu.matmul %5, %33, %cst_21 {dimension_numbers = #tpu.dot_dimension_numbers<[1], [0], [0], [1], [0, 0, 1, 1], [], []>} : vector<16x128xf32>, vector<128x128xf32>, vector<16x128xf32> -> vector<16x128xf32>
    %35 = arith.addf %32, %34 : vector<16x128xf32>
    %36 = arith.negf %35 : vector<16x128xf32>
    %37 = math.exp %36 : vector<16x128xf32>
    %cst_22 = arith.constant 1.000000e+00 : f32
    %38 = vector.broadcast %cst_22 : f32 to vector<16x128xf32>
    %39 = arith.addf %38, %37 : vector<16x128xf32>
    %40 = arith.divf %38, %39 : vector<16x128xf32>
    %41 = arith.mulf %40, %6 : vector<16x128xf32>
    %42 = arith.addf %41, %28 : vector<16x128xf32>
    %43 = arith.index_cast %c0_i32_8 : i32 to index
    %c0_23 = arith.constant 0 : index
    %c384 = arith.constant 384 : index
    %44 = vector.load %arg2[%43, %c0_23, %c384] : memref<8x16x512xbf16, #tpu.memory_space<vmem>>, vector<1x16x128xbf16>
    %45 = vector.shape_cast %44 : vector<1x16x128xbf16> to vector<16x128xbf16>
    %46 = arith.extf %45 : vector<16x128xbf16> to vector<16x128xf32>
    %c0_24 = arith.constant 0 : index
    %c384_25 = arith.constant 384 : index
    %47 = vector.load %arg4[%c0_24, %c384_25] : memref<128x512xf32, #tpu.memory_space<vmem>>, vector<128x128xf32>
    %cst_26 = arith.constant dense<0.000000e+00> : vector<16x128xf32>
    %48 = tpu.matmul %5, %47, %cst_26 {dimension_numbers = #tpu.dot_dimension_numbers<[1], [0], [0], [1], [0, 0, 1, 1], [], []>} : vector<16x128xf32>, vector<128x128xf32>, vector<16x128xf32> -> vector<16x128xf32>
    %49 = arith.addf %46, %48 : vector<16x128xf32>
    %50 = arith.negf %49 : vector<16x128xf32>
    %51 = math.exp %50 : vector<16x128xf32>
    %cst_27 = arith.constant 1.000000e+00 : f32
    %52 = vector.broadcast %cst_27 : f32 to vector<16x128xf32>
    %53 = arith.addf %52, %51 : vector<16x128xf32>
    %54 = arith.divf %52, %53 : vector<16x128xf32>
    %55 = math.tanh %42 : vector<16x128xf32>
    %56 = arith.mulf %54, %55 : vector<16x128xf32>
    %57 = arith.addi %4, %c0_i32_8 : i32
    %58 = vector.broadcast %57 : i32 to vector<16x1xi32>
    %59 = arith.cmpi slt, %58, %3 : vector<16x1xi32>
    %cst_28 = arith.constant 0.000000e+00 : f32
    %60 = vector.shape_cast %59 : vector<16x1xi1> to vector<16x1xi1>
    %61 = vector.broadcast %60 : vector<16x1xi1> to vector<16x128xi1>
    %62 = vector.broadcast %cst_28 : f32 to vector<16x128xf32>
    %63 = arith.select %61, %56, %62 : vector<16x128xi1>, vector<16x128xf32>
    %64 = arith.addf %7, %63 : vector<16x128xf32>
    %c1_i32 = arith.constant 1 : i32
    %65 = arith.index_cast %c1_i32 : i32 to index
    %c0_29 = arith.constant 0 : index
    %c0_30 = arith.constant 0 : index
    %66 = vector.load %arg2[%65, %c0_29, %c0_30] : memref<8x16x512xbf16, #tpu.memory_space<vmem>>, vector<1x16x128xbf16>
    %67 = vector.shape_cast %66 : vector<1x16x128xbf16> to vector<16x128xbf16>
    %68 = arith.extf %67 : vector<16x128xbf16> to vector<16x128xf32>
    %c0_31 = arith.constant 0 : index
    %c0_32 = arith.constant 0 : index
    %69 = vector.load %arg4[%c0_31, %c0_32] : memref<128x512xf32, #tpu.memory_space<vmem>>, vector<128x128xf32>
    %cst_33 = arith.constant dense<0.000000e+00> : vector<16x128xf32>
    %70 = tpu.matmul %56, %69, %cst_33 {dimension_numbers = #tpu.dot_dimension_numbers<[1], [0], [0], [1], [0, 0, 1, 1], [], []>} : vector<16x128xf32>, vector<128x128xf32>, vector<16x128xf32> -> vector<16x128xf32>
    %71 = arith.addf %68, %70 : vector<16x128xf32>
    %72 = arith.negf %71 : vector<16x128xf32>
    %73 = math.exp %72 : vector<16x128xf32>
    %cst_34 = arith.constant 1.000000e+00 : f32
    %74 = vector.broadcast %cst_34 : f32 to vector<16x128xf32>
    %75 = arith.addf %74, %73 : vector<16x128xf32>
    %76 = arith.divf %74, %75 : vector<16x128xf32>
    %77 = arith.index_cast %c1_i32 : i32 to index
    %c0_35 = arith.constant 0 : index
    %c256_36 = arith.constant 256 : index
    %78 = vector.load %arg2[%77, %c0_35, %c256_36] : memref<8x16x512xbf16, #tpu.memory_space<vmem>>, vector<1x16x128xbf16>
    %79 = vector.shape_cast %78 : vector<1x16x128xbf16> to vector<16x128xbf16>
    %80 = arith.extf %79 : vector<16x128xbf16> to vector<16x128xf32>
    %c0_37 = arith.constant 0 : index
    %c256_38 = arith.constant 256 : index
    %81 = vector.load %arg4[%c0_37, %c256_38] : memref<128x512xf32, #tpu.memory_space<vmem>>, vector<128x128xf32>
    %cst_39 = arith.constant dense<0.000000e+00> : vector<16x128xf32>
    %82 = tpu.matmul %56, %81, %cst_39 {dimension_numbers = #tpu.dot_dimension_numbers<[1], [0], [0], [1], [0, 0, 1, 1], [], []>} : vector<16x128xf32>, vector<128x128xf32>, vector<16x128xf32> -> vector<16x128xf32>
    %83 = arith.addf %80, %82 : vector<16x128xf32>
    %84 = math.tanh %83 : vector<16x128xf32>
    %85 = arith.mulf %76, %84 : vector<16x128xf32>
    %86 = arith.index_cast %c1_i32 : i32 to index
    %c0_40 = arith.constant 0 : index
    %c128_41 = arith.constant 128 : index
    %87 = vector.load %arg2[%86, %c0_40, %c128_41] : memref<8x16x512xbf16, #tpu.memory_space<vmem>>, vector<1x16x128xbf16>
    %88 = vector.shape_cast %87 : vector<1x16x128xbf16> to vector<16x128xbf16>
    %89 = arith.extf %88 : vector<16x128xbf16> to vector<16x128xf32>
    %c0_42 = arith.constant 0 : index
    %c128_43 = arith.constant 128 : index
    %90 = vector.load %arg4[%c0_42, %c128_43] : memref<128x512xf32, #tpu.memory_space<vmem>>, vector<128x128xf32>
    %cst_44 = arith.constant dense<0.000000e+00> : vector<16x128xf32>
    %91 = tpu.matmul %56, %90, %cst_44 {dimension_numbers = #tpu.dot_dimension_numbers<[1], [0], [0], [1], [0, 0, 1, 1], [], []>} : vector<16x128xf32>, vector<128x128xf32>, vector<16x128xf32> -> vector<16x128xf32>
    %92 = arith.addf %89, %91 : vector<16x128xf32>
    %93 = arith.negf %92 : vector<16x128xf32>
    %94 = math.exp %93 : vector<16x128xf32>
    %cst_45 = arith.constant 1.000000e+00 : f32
    %95 = vector.broadcast %cst_45 : f32 to vector<16x128xf32>
    %96 = arith.addf %95, %94 : vector<16x128xf32>
    %97 = arith.divf %95, %96 : vector<16x128xf32>
    %98 = arith.mulf %97, %42 : vector<16x128xf32>
    %99 = arith.addf %98, %85 : vector<16x128xf32>
    %100 = arith.index_cast %c1_i32 : i32 to index
    %c0_46 = arith.constant 0 : index
    %c384_47 = arith.constant 384 : index
    %101 = vector.load %arg2[%100, %c0_46, %c384_47] : memref<8x16x512xbf16, #tpu.memory_space<vmem>>, vector<1x16x128xbf16>
    %102 = vector.shape_cast %101 : vector<1x16x128xbf16> to vector<16x128xbf16>
    %103 = arith.extf %102 : vector<16x128xbf16> to vector<16x128xf32>
    %c0_48 = arith.constant 0 : index
    %c384_49 = arith.constant 384 : index
    %104 = vector.load %arg4[%c0_48, %c384_49] : memref<128x512xf32, #tpu.memory_space<vmem>>, vector<128x128xf32>
    %cst_50 = arith.constant dense<0.000000e+00> : vector<16x128xf32>
    %105 = tpu.matmul %56, %104, %cst_50 {dimension_numbers = #tpu.dot_dimension_numbers<[1], [0], [0], [1], [0, 0, 1, 1], [], []>} : vector<16x128xf32>, vector<128x128xf32>, vector<16x128xf32> -> vector<16x128xf32>
    %106 = arith.addf %103, %105 : vector<16x128xf32>
    %107 = arith.negf %106 : vector<16x128xf32>
    %108 = math.exp %107 : vector<16x128xf32>
    %cst_51 = arith.constant 1.000000e+00 : f32
    %109 = vector.broadcast %cst_51 : f32 to vector<16x128xf32>
    %110 = arith.addf %109, %108 : vector<16x128xf32>
    %111 = arith.divf %109, %110 : vector<16x128xf32>
    %112 = math.tanh %99 : vector<16x128xf32>
    %113 = arith.mulf %111, %112 : vector<16x128xf32>
    %114 = arith.addi %4, %c1_i32 : i32
    %115 = vector.broadcast %114 : i32 to vector<16x1xi32>
    %116 = arith.cmpi slt, %115, %3 : vector<16x1xi32>
    %cst_52 = arith.constant 0.000000e+00 : f32
    %117 = vector.shape_cast %116 : vector<16x1xi1> to vector<16x1xi1>
    %118 = vector.broadcast %117 : vector<16x1xi1> to vector<16x128xi1>
    %119 = vector.broadcast %cst_52 : f32 to vector<16x128xf32>
    %120 = arith.select %118, %113, %119 : vector<16x128xi1>, vector<16x128xf32>
    %121 = arith.addf %64, %120 : vector<16x128xf32>
    %c2_i32 = arith.constant 2 : i32
    %122 = arith.index_cast %c2_i32 : i32 to index
    %c0_53 = arith.constant 0 : index
    %c0_54 = arith.constant 0 : index
    %123 = vector.load %arg2[%122, %c0_53, %c0_54] : memref<8x16x512xbf16, #tpu.memory_space<vmem>>, vector<1x16x128xbf16>
    %124 = vector.shape_cast %123 : vector<1x16x128xbf16> to vector<16x128xbf16>
    %125 = arith.extf %124 : vector<16x128xbf16> to vector<16x128xf32>
    %c0_55 = arith.constant 0 : index
    %c0_56 = arith.constant 0 : index
    %126 = vector.load %arg4[%c0_55, %c0_56] : memref<128x512xf32, #tpu.memory_space<vmem>>, vector<128x128xf32>
    %cst_57 = arith.constant dense<0.000000e+00> : vector<16x128xf32>
    %127 = tpu.matmul %113, %126, %cst_57 {dimension_numbers = #tpu.dot_dimension_numbers<[1], [0], [0], [1], [0, 0, 1, 1], [], []>} : vector<16x128xf32>, vector<128x128xf32>, vector<16x128xf32> -> vector<16x128xf32>
    %128 = arith.addf %125, %127 : vector<16x128xf32>
    %129 = arith.negf %128 : vector<16x128xf32>
    %130 = math.exp %129 : vector<16x128xf32>
    %cst_58 = arith.constant 1.000000e+00 : f32
    %131 = vector.broadcast %cst_58 : f32 to vector<16x128xf32>
    %132 = arith.addf %131, %130 : vector<16x128xf32>
    %133 = arith.divf %131, %132 : vector<16x128xf32>
    %134 = arith.index_cast %c2_i32 : i32 to index
    %c0_59 = arith.constant 0 : index
    %c256_60 = arith.constant 256 : index
    %135 = vector.load %arg2[%134, %c0_59, %c256_60] : memref<8x16x512xbf16, #tpu.memory_space<vmem>>, vector<1x16x128xbf16>
    %136 = vector.shape_cast %135 : vector<1x16x128xbf16> to vector<16x128xbf16>
    %137 = arith.extf %136 : vector<16x128xbf16> to vector<16x128xf32>
    %c0_61 = arith.constant 0 : index
    %c256_62 = arith.constant 256 : index
    %138 = vector.load %arg4[%c0_61, %c256_62] : memref<128x512xf32, #tpu.memory_space<vmem>>, vector<128x128xf32>
    %cst_63 = arith.constant dense<0.000000e+00> : vector<16x128xf32>
    %139 = tpu.matmul %113, %138, %cst_63 {dimension_numbers = #tpu.dot_dimension_numbers<[1], [0], [0], [1], [0, 0, 1, 1], [], []>} : vector<16x128xf32>, vector<128x128xf32>, vector<16x128xf32> -> vector<16x128xf32>
    %140 = arith.addf %137, %139 : vector<16x128xf32>
    %141 = math.tanh %140 : vector<16x128xf32>
    %142 = arith.mulf %133, %141 : vector<16x128xf32>
    %143 = arith.index_cast %c2_i32 : i32 to index
    %c0_64 = arith.constant 0 : index
    %c128_65 = arith.constant 128 : index
    %144 = vector.load %arg2[%143, %c0_64, %c128_65] : memref<8x16x512xbf16, #tpu.memory_space<vmem>>, vector<1x16x128xbf16>
    %145 = vector.shape_cast %144 : vector<1x16x128xbf16> to vector<16x128xbf16>
    %146 = arith.extf %145 : vector<16x128xbf16> to vector<16x128xf32>
    %c0_66 = arith.constant 0 : index
    %c128_67 = arith.constant 128 : index
    %147 = vector.load %arg4[%c0_66, %c128_67] : memref<128x512xf32, #tpu.memory_space<vmem>>, vector<128x128xf32>
    %cst_68 = arith.constant dense<0.000000e+00> : vector<16x128xf32>
    %148 = tpu.matmul %113, %147, %cst_68 {dimension_numbers = #tpu.dot_dimension_numbers<[1], [0], [0], [1], [0, 0, 1, 1], [], []>} : vector<16x128xf32>, vector<128x128xf32>, vector<16x128xf32> -> vector<16x128xf32>
    %149 = arith.addf %146, %148 : vector<16x128xf32>
    %150 = arith.negf %149 : vector<16x128xf32>
    %151 = math.exp %150 : vector<16x128xf32>
    %cst_69 = arith.constant 1.000000e+00 : f32
    %152 = vector.broadcast %cst_69 : f32 to vector<16x128xf32>
    %153 = arith.addf %152, %151 : vector<16x128xf32>
    %154 = arith.divf %152, %153 : vector<16x128xf32>
    %155 = arith.mulf %154, %99 : vector<16x128xf32>
    %156 = arith.addf %155, %142 : vector<16x128xf32>
    %157 = arith.index_cast %c2_i32 : i32 to index
    %c0_70 = arith.constant 0 : index
    %c384_71 = arith.constant 384 : index
    %158 = vector.load %arg2[%157, %c0_70, %c384_71] : memref<8x16x512xbf16, #tpu.memory_space<vmem>>, vector<1x16x128xbf16>
    %159 = vector.shape_cast %158 : vector<1x16x128xbf16> to vector<16x128xbf16>
    %160 = arith.extf %159 : vector<16x128xbf16> to vector<16x128xf32>
    %c0_72 = arith.constant 0 : index
    %c384_73 = arith.constant 384 : index
    %161 = vector.load %arg4[%c0_72, %c384_73] : memref<128x512xf32, #tpu.memory_space<vmem>>, vector<128x128xf32>
    %cst_74 = arith.constant dense<0.000000e+00> : vector<16x128xf32>
    %162 = tpu.matmul %113, %161, %cst_74 {dimension_numbers = #tpu.dot_dimension_numbers<[1], [0], [0], [1], [0, 0, 1, 1], [], []>} : vector<16x128xf32>, vector<128x128xf32>, vector<16x128xf32> -> vector<16x128xf32>
    %163 = arith.addf %160, %162 : vector<16x128xf32>
    %164 = arith.negf %163 : vector<16x128xf32>
    %165 = math.exp %164 : vector<16x128xf32>
    %cst_75 = arith.constant 1.000000e+00 : f32
    %166 = vector.broadcast %cst_75 : f32 to vector<16x128xf32>
    %167 = arith.addf %166, %165 : vector<16x128xf32>
    %168 = arith.divf %166, %167 : vector<16x128xf32>
    %169 = math.tanh %156 : vector<16x128xf32>
    %170 = arith.mulf %168, %169 : vector<16x128xf32>
    %171 = arith.addi %4, %c2_i32 : i32
    %172 = vector.broadcast %171 : i32 to vector<16x1xi32>
    %173 = arith.cmpi slt, %172, %3 : vector<16x1xi32>
    %cst_76 = arith.constant 0.000000e+00 : f32
    %174 = vector.shape_cast %173 : vector<16x1xi1> to vector<16x1xi1>
    %175 = vector.broadcast %174 : vector<16x1xi1> to vector<16x128xi1>
    %176 = vector.broadcast %cst_76 : f32 to vector<16x128xf32>
    %177 = arith.select %175, %170, %176 : vector<16x128xi1>, vector<16x128xf32>
    %178 = arith.addf %121, %177 : vector<16x128xf32>
    %c3_i32 = arith.constant 3 : i32
    %179 = arith.index_cast %c3_i32 : i32 to index
    %c0_77 = arith.constant 0 : index
    %c0_78 = arith.constant 0 : index
    %180 = vector.load %arg2[%179, %c0_77, %c0_78] : memref<8x16x512xbf16, #tpu.memory_space<vmem>>, vector<1x16x128xbf16>
    %181 = vector.shape_cast %180 : vector<1x16x128xbf16> to vector<16x128xbf16>
    %182 = arith.extf %181 : vector<16x128xbf16> to vector<16x128xf32>
    %c0_79 = arith.constant 0 : index
    %c0_80 = arith.constant 0 : index
    %183 = vector.load %arg4[%c0_79, %c0_80] : memref<128x512xf32, #tpu.memory_space<vmem>>, vector<128x128xf32>
    %cst_81 = arith.constant dense<0.000000e+00> : vector<16x128xf32>
    %184 = tpu.matmul %170, %183, %cst_81 {dimension_numbers = #tpu.dot_dimension_numbers<[1], [0], [0], [1], [0, 0, 1, 1], [], []>} : vector<16x128xf32>, vector<128x128xf32>, vector<16x128xf32> -> vector<16x128xf32>
    %185 = arith.addf %182, %184 : vector<16x128xf32>
    %186 = arith.negf %185 : vector<16x128xf32>
    %187 = math.exp %186 : vector<16x128xf32>
    %cst_82 = arith.constant 1.000000e+00 : f32
    %188 = vector.broadcast %cst_82 : f32 to vector<16x128xf32>
    %189 = arith.addf %188, %187 : vector<16x128xf32>
    %190 = arith.divf %188, %189 : vector<16x128xf32>
    %191 = arith.index_cast %c3_i32 : i32 to index
    %c0_83 = arith.constant 0 : index
    %c256_84 = arith.constant 256 : index
    %192 = vector.load %arg2[%191, %c0_83, %c256_84] : memref<8x16x512xbf16, #tpu.memory_space<vmem>>, vector<1x16x128xbf16>
    %193 = vector.shape_cast %192 : vector<1x16x128xbf16> to vector<16x128xbf16>
    %194 = arith.extf %193 : vector<16x128xbf16> to vector<16x128xf32>
    %c0_85 = arith.constant 0 : index
    %c256_86 = arith.constant 256 : index
    %195 = vector.load %arg4[%c0_85, %c256_86] : memref<128x512xf32, #tpu.memory_space<vmem>>, vector<128x128xf32>
    %cst_87 = arith.constant dense<0.000000e+00> : vector<16x128xf32>
    %196 = tpu.matmul %170, %195, %cst_87 {dimension_numbers = #tpu.dot_dimension_numbers<[1], [0], [0], [1], [0, 0, 1, 1], [], []>} : vector<16x128xf32>, vector<128x128xf32>, vector<16x128xf32> -> vector<16x128xf32>
    %197 = arith.addf %194, %196 : vector<16x128xf32>
    %198 = math.tanh %197 : vector<16x128xf32>
    %199 = arith.mulf %190, %198 : vector<16x128xf32>
    %200 = arith.index_cast %c3_i32 : i32 to index
    %c0_88 = arith.constant 0 : index
    %c128_89 = arith.constant 128 : index
    %201 = vector.load %arg2[%200, %c0_88, %c128_89] : memref<8x16x512xbf16, #tpu.memory_space<vmem>>, vector<1x16x128xbf16>
    %202 = vector.shape_cast %201 : vector<1x16x128xbf16> to vector<16x128xbf16>
    %203 = arith.extf %202 : vector<16x128xbf16> to vector<16x128xf32>
    %c0_90 = arith.constant 0 : index
    %c128_91 = arith.constant 128 : index
    %204 = vector.load %arg4[%c0_90, %c128_91] : memref<128x512xf32, #tpu.memory_space<vmem>>, vector<128x128xf32>
    %cst_92 = arith.constant dense<0.000000e+00> : vector<16x128xf32>
    %205 = tpu.matmul %170, %204, %cst_92 {dimension_numbers = #tpu.dot_dimension_numbers<[1], [0], [0], [1], [0, 0, 1, 1], [], []>} : vector<16x128xf32>, vector<128x128xf32>, vector<16x128xf32> -> vector<16x128xf32>
    %206 = arith.addf %203, %205 : vector<16x128xf32>
    %207 = arith.negf %206 : vector<16x128xf32>
    %208 = math.exp %207 : vector<16x128xf32>
    %cst_93 = arith.constant 1.000000e+00 : f32
    %209 = vector.broadcast %cst_93 : f32 to vector<16x128xf32>
    %210 = arith.addf %209, %208 : vector<16x128xf32>
    %211 = arith.divf %209, %210 : vector<16x128xf32>
    %212 = arith.mulf %211, %156 : vector<16x128xf32>
    %213 = arith.addf %212, %199 : vector<16x128xf32>
    %214 = arith.index_cast %c3_i32 : i32 to index
    %c0_94 = arith.constant 0 : index
    %c384_95 = arith.constant 384 : index
    %215 = vector.load %arg2[%214, %c0_94, %c384_95] : memref<8x16x512xbf16, #tpu.memory_space<vmem>>, vector<1x16x128xbf16>
    %216 = vector.shape_cast %215 : vector<1x16x128xbf16> to vector<16x128xbf16>
    %217 = arith.extf %216 : vector<16x128xbf16> to vector<16x128xf32>
    %c0_96 = arith.constant 0 : index
    %c384_97 = arith.constant 384 : index
    %218 = vector.load %arg4[%c0_96, %c384_97] : memref<128x512xf32, #tpu.memory_space<vmem>>, vector<128x128xf32>
    %cst_98 = arith.constant dense<0.000000e+00> : vector<16x128xf32>
    %219 = tpu.matmul %170, %218, %cst_98 {dimension_numbers = #tpu.dot_dimension_numbers<[1], [0], [0], [1], [0, 0, 1, 1], [], []>} : vector<16x128xf32>, vector<128x128xf32>, vector<16x128xf32> -> vector<16x128xf32>
    %220 = arith.addf %217, %219 : vector<16x128xf32>
    %221 = arith.negf %220 : vector<16x128xf32>
    %222 = math.exp %221 : vector<16x128xf32>
    %cst_99 = arith.constant 1.000000e+00 : f32
    %223 = vector.broadcast %cst_99 : f32 to vector<16x128xf32>
    %224 = arith.addf %223, %222 : vector<16x128xf32>
    %225 = arith.divf %223, %224 : vector<16x128xf32>
    %226 = math.tanh %213 : vector<16x128xf32>
    %227 = arith.mulf %225, %226 : vector<16x128xf32>
    %228 = arith.addi %4, %c3_i32 : i32
    %229 = vector.broadcast %228 : i32 to vector<16x1xi32>
    %230 = arith.cmpi slt, %229, %3 : vector<16x1xi32>
    %cst_100 = arith.constant 0.000000e+00 : f32
    %231 = vector.shape_cast %230 : vector<16x1xi1> to vector<16x1xi1>
    %232 = vector.broadcast %231 : vector<16x1xi1> to vector<16x128xi1>
    %233 = vector.broadcast %cst_100 : f32 to vector<16x128xf32>
    %234 = arith.select %232, %227, %233 : vector<16x128xi1>, vector<16x128xf32>
    %235 = arith.addf %178, %234 : vector<16x128xf32>
    %c4_i32 = arith.constant 4 : i32
    %236 = arith.index_cast %c4_i32 : i32 to index
    %c0_101 = arith.constant 0 : index
    %c0_102 = arith.constant 0 : index
    %237 = vector.load %arg2[%236, %c0_101, %c0_102] : memref<8x16x512xbf16, #tpu.memory_space<vmem>>, vector<1x16x128xbf16>
    %238 = vector.shape_cast %237 : vector<1x16x128xbf16> to vector<16x128xbf16>
    %239 = arith.extf %238 : vector<16x128xbf16> to vector<16x128xf32>
    %c0_103 = arith.constant 0 : index
    %c0_104 = arith.constant 0 : index
    %240 = vector.load %arg4[%c0_103, %c0_104] : memref<128x512xf32, #tpu.memory_space<vmem>>, vector<128x128xf32>
    %cst_105 = arith.constant dense<0.000000e+00> : vector<16x128xf32>
    %241 = tpu.matmul %227, %240, %cst_105 {dimension_numbers = #tpu.dot_dimension_numbers<[1], [0], [0], [1], [0, 0, 1, 1], [], []>} : vector<16x128xf32>, vector<128x128xf32>, vector<16x128xf32> -> vector<16x128xf32>
    %242 = arith.addf %239, %241 : vector<16x128xf32>
    %243 = arith.negf %242 : vector<16x128xf32>
    %244 = math.exp %243 : vector<16x128xf32>
    %cst_106 = arith.constant 1.000000e+00 : f32
    %245 = vector.broadcast %cst_106 : f32 to vector<16x128xf32>
    %246 = arith.addf %245, %244 : vector<16x128xf32>
    %247 = arith.divf %245, %246 : vector<16x128xf32>
    %248 = arith.index_cast %c4_i32 : i32 to index
    %c0_107 = arith.constant 0 : index
    %c256_108 = arith.constant 256 : index
    %249 = vector.load %arg2[%248, %c0_107, %c256_108] : memref<8x16x512xbf16, #tpu.memory_space<vmem>>, vector<1x16x128xbf16>
    %250 = vector.shape_cast %249 : vector<1x16x128xbf16> to vector<16x128xbf16>
    %251 = arith.extf %250 : vector<16x128xbf16> to vector<16x128xf32>
    %c0_109 = arith.constant 0 : index
    %c256_110 = arith.constant 256 : index
    %252 = vector.load %arg4[%c0_109, %c256_110] : memref<128x512xf32, #tpu.memory_space<vmem>>, vector<128x128xf32>
    %cst_111 = arith.constant dense<0.000000e+00> : vector<16x128xf32>
    %253 = tpu.matmul %227, %252, %cst_111 {dimension_numbers = #tpu.dot_dimension_numbers<[1], [0], [0], [1], [0, 0, 1, 1], [], []>} : vector<16x128xf32>, vector<128x128xf32>, vector<16x128xf32> -> vector<16x128xf32>
    %254 = arith.addf %251, %253 : vector<16x128xf32>
    %255 = math.tanh %254 : vector<16x128xf32>
    %256 = arith.mulf %247, %255 : vector<16x128xf32>
    %257 = arith.index_cast %c4_i32 : i32 to index
    %c0_112 = arith.constant 0 : index
    %c128_113 = arith.constant 128 : index
    %258 = vector.load %arg2[%257, %c0_112, %c128_113] : memref<8x16x512xbf16, #tpu.memory_space<vmem>>, vector<1x16x128xbf16>
    %259 = vector.shape_cast %258 : vector<1x16x128xbf16> to vector<16x128xbf16>
    %260 = arith.extf %259 : vector<16x128xbf16> to vector<16x128xf32>
    %c0_114 = arith.constant 0 : index
    %c128_115 = arith.constant 128 : index
    %261 = vector.load %arg4[%c0_114, %c128_115] : memref<128x512xf32, #tpu.memory_space<vmem>>, vector<128x128xf32>
    %cst_116 = arith.constant dense<0.000000e+00> : vector<16x128xf32>
    %262 = tpu.matmul %227, %261, %cst_116 {dimension_numbers = #tpu.dot_dimension_numbers<[1], [0], [0], [1], [0, 0, 1, 1], [], []>} : vector<16x128xf32>, vector<128x128xf32>, vector<16x128xf32> -> vector<16x128xf32>
    %263 = arith.addf %260, %262 : vector<16x128xf32>
    %264 = arith.negf %263 : vector<16x128xf32>
    %265 = math.exp %264 : vector<16x128xf32>
    %cst_117 = arith.constant 1.000000e+00 : f32
    %266 = vector.broadcast %cst_117 : f32 to vector<16x128xf32>
    %267 = arith.addf %266, %265 : vector<16x128xf32>
    %268 = arith.divf %266, %267 : vector<16x128xf32>
    %269 = arith.mulf %268, %213 : vector<16x128xf32>
    %270 = arith.addf %269, %256 : vector<16x128xf32>
    %271 = arith.index_cast %c4_i32 : i32 to index
    %c0_118 = arith.constant 0 : index
    %c384_119 = arith.constant 384 : index
    %272 = vector.load %arg2[%271, %c0_118, %c384_119] : memref<8x16x512xbf16, #tpu.memory_space<vmem>>, vector<1x16x128xbf16>
    %273 = vector.shape_cast %272 : vector<1x16x128xbf16> to vector<16x128xbf16>
    %274 = arith.extf %273 : vector<16x128xbf16> to vector<16x128xf32>
    %c0_120 = arith.constant 0 : index
    %c384_121 = arith.constant 384 : index
    %275 = vector.load %arg4[%c0_120, %c384_121] : memref<128x512xf32, #tpu.memory_space<vmem>>, vector<128x128xf32>
    %cst_122 = arith.constant dense<0.000000e+00> : vector<16x128xf32>
    %276 = tpu.matmul %227, %275, %cst_122 {dimension_numbers = #tpu.dot_dimension_numbers<[1], [0], [0], [1], [0, 0, 1, 1], [], []>} : vector<16x128xf32>, vector<128x128xf32>, vector<16x128xf32> -> vector<16x128xf32>
    %277 = arith.addf %274, %276 : vector<16x128xf32>
    %278 = arith.negf %277 : vector<16x128xf32>
    %279 = math.exp %278 : vector<16x128xf32>
    %cst_123 = arith.constant 1.000000e+00 : f32
    %280 = vector.broadcast %cst_123 : f32 to vector<16x128xf32>
    %281 = arith.addf %280, %279 : vector<16x128xf32>
    %282 = arith.divf %280, %281 : vector<16x128xf32>
    %283 = math.tanh %270 : vector<16x128xf32>
    %284 = arith.mulf %282, %283 : vector<16x128xf32>
    %285 = arith.addi %4, %c4_i32 : i32
    %286 = vector.broadcast %285 : i32 to vector<16x1xi32>
    %287 = arith.cmpi slt, %286, %3 : vector<16x1xi32>
    %cst_124 = arith.constant 0.000000e+00 : f32
    %288 = vector.shape_cast %287 : vector<16x1xi1> to vector<16x1xi1>
    %289 = vector.broadcast %288 : vector<16x1xi1> to vector<16x128xi1>
    %290 = vector.broadcast %cst_124 : f32 to vector<16x128xf32>
    %291 = arith.select %289, %284, %290 : vector<16x128xi1>, vector<16x128xf32>
    %292 = arith.addf %235, %291 : vector<16x128xf32>
    %c5_i32 = arith.constant 5 : i32
    %293 = arith.index_cast %c5_i32 : i32 to index
    %c0_125 = arith.constant 0 : index
    %c0_126 = arith.constant 0 : index
    %294 = vector.load %arg2[%293, %c0_125, %c0_126] : memref<8x16x512xbf16, #tpu.memory_space<vmem>>, vector<1x16x128xbf16>
    %295 = vector.shape_cast %294 : vector<1x16x128xbf16> to vector<16x128xbf16>
    %296 = arith.extf %295 : vector<16x128xbf16> to vector<16x128xf32>
    %c0_127 = arith.constant 0 : index
    %c0_128 = arith.constant 0 : index
    %297 = vector.load %arg4[%c0_127, %c0_128] : memref<128x512xf32, #tpu.memory_space<vmem>>, vector<128x128xf32>
    %cst_129 = arith.constant dense<0.000000e+00> : vector<16x128xf32>
    %298 = tpu.matmul %284, %297, %cst_129 {dimension_numbers = #tpu.dot_dimension_numbers<[1], [0], [0], [1], [0, 0, 1, 1], [], []>} : vector<16x128xf32>, vector<128x128xf32>, vector<16x128xf32> -> vector<16x128xf32>
    %299 = arith.addf %296, %298 : vector<16x128xf32>
    %300 = arith.negf %299 : vector<16x128xf32>
    %301 = math.exp %300 : vector<16x128xf32>
    %cst_130 = arith.constant 1.000000e+00 : f32
    %302 = vector.broadcast %cst_130 : f32 to vector<16x128xf32>
    %303 = arith.addf %302, %301 : vector<16x128xf32>
    %304 = arith.divf %302, %303 : vector<16x128xf32>
    %305 = arith.index_cast %c5_i32 : i32 to index
    %c0_131 = arith.constant 0 : index
    %c256_132 = arith.constant 256 : index
    %306 = vector.load %arg2[%305, %c0_131, %c256_132] : memref<8x16x512xbf16, #tpu.memory_space<vmem>>, vector<1x16x128xbf16>
    %307 = vector.shape_cast %306 : vector<1x16x128xbf16> to vector<16x128xbf16>
    %308 = arith.extf %307 : vector<16x128xbf16> to vector<16x128xf32>
    %c0_133 = arith.constant 0 : index
    %c256_134 = arith.constant 256 : index
    %309 = vector.load %arg4[%c0_133, %c256_134] : memref<128x512xf32, #tpu.memory_space<vmem>>, vector<128x128xf32>
    %cst_135 = arith.constant dense<0.000000e+00> : vector<16x128xf32>
    %310 = tpu.matmul %284, %309, %cst_135 {dimension_numbers = #tpu.dot_dimension_numbers<[1], [0], [0], [1], [0, 0, 1, 1], [], []>} : vector<16x128xf32>, vector<128x128xf32>, vector<16x128xf32> -> vector<16x128xf32>
    %311 = arith.addf %308, %310 : vector<16x128xf32>
    %312 = math.tanh %311 : vector<16x128xf32>
    %313 = arith.mulf %304, %312 : vector<16x128xf32>
    %314 = arith.index_cast %c5_i32 : i32 to index
    %c0_136 = arith.constant 0 : index
    %c128_137 = arith.constant 128 : index
    %315 = vector.load %arg2[%314, %c0_136, %c128_137] : memref<8x16x512xbf16, #tpu.memory_space<vmem>>, vector<1x16x128xbf16>
    %316 = vector.shape_cast %315 : vector<1x16x128xbf16> to vector<16x128xbf16>
    %317 = arith.extf %316 : vector<16x128xbf16> to vector<16x128xf32>
    %c0_138 = arith.constant 0 : index
    %c128_139 = arith.constant 128 : index
    %318 = vector.load %arg4[%c0_138, %c128_139] : memref<128x512xf32, #tpu.memory_space<vmem>>, vector<128x128xf32>
    %cst_140 = arith.constant dense<0.000000e+00> : vector<16x128xf32>
    %319 = tpu.matmul %284, %318, %cst_140 {dimension_numbers = #tpu.dot_dimension_numbers<[1], [0], [0], [1], [0, 0, 1, 1], [], []>} : vector<16x128xf32>, vector<128x128xf32>, vector<16x128xf32> -> vector<16x128xf32>
    %320 = arith.addf %317, %319 : vector<16x128xf32>
    %321 = arith.negf %320 : vector<16x128xf32>
    %322 = math.exp %321 : vector<16x128xf32>
    %cst_141 = arith.constant 1.000000e+00 : f32
    %323 = vector.broadcast %cst_141 : f32 to vector<16x128xf32>
    %324 = arith.addf %323, %322 : vector<16x128xf32>
    %325 = arith.divf %323, %324 : vector<16x128xf32>
    %326 = arith.mulf %325, %270 : vector<16x128xf32>
    %327 = arith.addf %326, %313 : vector<16x128xf32>
    %328 = arith.index_cast %c5_i32 : i32 to index
    %c0_142 = arith.constant 0 : index
    %c384_143 = arith.constant 384 : index
    %329 = vector.load %arg2[%328, %c0_142, %c384_143] : memref<8x16x512xbf16, #tpu.memory_space<vmem>>, vector<1x16x128xbf16>
    %330 = vector.shape_cast %329 : vector<1x16x128xbf16> to vector<16x128xbf16>
    %331 = arith.extf %330 : vector<16x128xbf16> to vector<16x128xf32>
    %c0_144 = arith.constant 0 : index
    %c384_145 = arith.constant 384 : index
    %332 = vector.load %arg4[%c0_144, %c384_145] : memref<128x512xf32, #tpu.memory_space<vmem>>, vector<128x128xf32>
    %cst_146 = arith.constant dense<0.000000e+00> : vector<16x128xf32>
    %333 = tpu.matmul %284, %332, %cst_146 {dimension_numbers = #tpu.dot_dimension_numbers<[1], [0], [0], [1], [0, 0, 1, 1], [], []>} : vector<16x128xf32>, vector<128x128xf32>, vector<16x128xf32> -> vector<16x128xf32>
    %334 = arith.addf %331, %333 : vector<16x128xf32>
    %335 = arith.negf %334 : vector<16x128xf32>
    %336 = math.exp %335 : vector<16x128xf32>
    %cst_147 = arith.constant 1.000000e+00 : f32
    %337 = vector.broadcast %cst_147 : f32 to vector<16x128xf32>
    %338 = arith.addf %337, %336 : vector<16x128xf32>
    %339 = arith.divf %337, %338 : vector<16x128xf32>
    %340 = math.tanh %327 : vector<16x128xf32>
    %341 = arith.mulf %339, %340 : vector<16x128xf32>
    %342 = arith.addi %4, %c5_i32 : i32
    %343 = vector.broadcast %342 : i32 to vector<16x1xi32>
    %344 = arith.cmpi slt, %343, %3 : vector<16x1xi32>
    %cst_148 = arith.constant 0.000000e+00 : f32
    %345 = vector.shape_cast %344 : vector<16x1xi1> to vector<16x1xi1>
    %346 = vector.broadcast %345 : vector<16x1xi1> to vector<16x128xi1>
    %347 = vector.broadcast %cst_148 : f32 to vector<16x128xf32>
    %348 = arith.select %346, %341, %347 : vector<16x128xi1>, vector<16x128xf32>
    %349 = arith.addf %292, %348 : vector<16x128xf32>
    %c6_i32 = arith.constant 6 : i32
    %350 = arith.index_cast %c6_i32 : i32 to index
    %c0_149 = arith.constant 0 : index
    %c0_150 = arith.constant 0 : index
    %351 = vector.load %arg2[%350, %c0_149, %c0_150] : memref<8x16x512xbf16, #tpu.memory_space<vmem>>, vector<1x16x128xbf16>
    %352 = vector.shape_cast %351 : vector<1x16x128xbf16> to vector<16x128xbf16>
    %353 = arith.extf %352 : vector<16x128xbf16> to vector<16x128xf32>
    %c0_151 = arith.constant 0 : index
    %c0_152 = arith.constant 0 : index
    %354 = vector.load %arg4[%c0_151, %c0_152] : memref<128x512xf32, #tpu.memory_space<vmem>>, vector<128x128xf32>
    %cst_153 = arith.constant dense<0.000000e+00> : vector<16x128xf32>
    %355 = tpu.matmul %341, %354, %cst_153 {dimension_numbers = #tpu.dot_dimension_numbers<[1], [0], [0], [1], [0, 0, 1, 1], [], []>} : vector<16x128xf32>, vector<128x128xf32>, vector<16x128xf32> -> vector<16x128xf32>
    %356 = arith.addf %353, %355 : vector<16x128xf32>
    %357 = arith.negf %356 : vector<16x128xf32>
    %358 = math.exp %357 : vector<16x128xf32>
    %cst_154 = arith.constant 1.000000e+00 : f32
    %359 = vector.broadcast %cst_154 : f32 to vector<16x128xf32>
    %360 = arith.addf %359, %358 : vector<16x128xf32>
    %361 = arith.divf %359, %360 : vector<16x128xf32>
    %362 = arith.index_cast %c6_i32 : i32 to index
    %c0_155 = arith.constant 0 : index
    %c256_156 = arith.constant 256 : index
    %363 = vector.load %arg2[%362, %c0_155, %c256_156] : memref<8x16x512xbf16, #tpu.memory_space<vmem>>, vector<1x16x128xbf16>
    %364 = vector.shape_cast %363 : vector<1x16x128xbf16> to vector<16x128xbf16>
    %365 = arith.extf %364 : vector<16x128xbf16> to vector<16x128xf32>
    %c0_157 = arith.constant 0 : index
    %c256_158 = arith.constant 256 : index
    %366 = vector.load %arg4[%c0_157, %c256_158] : memref<128x512xf32, #tpu.memory_space<vmem>>, vector<128x128xf32>
    %cst_159 = arith.constant dense<0.000000e+00> : vector<16x128xf32>
    %367 = tpu.matmul %341, %366, %cst_159 {dimension_numbers = #tpu.dot_dimension_numbers<[1], [0], [0], [1], [0, 0, 1, 1], [], []>} : vector<16x128xf32>, vector<128x128xf32>, vector<16x128xf32> -> vector<16x128xf32>
    %368 = arith.addf %365, %367 : vector<16x128xf32>
    %369 = math.tanh %368 : vector<16x128xf32>
    %370 = arith.mulf %361, %369 : vector<16x128xf32>
    %371 = arith.index_cast %c6_i32 : i32 to index
    %c0_160 = arith.constant 0 : index
    %c128_161 = arith.constant 128 : index
    %372 = vector.load %arg2[%371, %c0_160, %c128_161] : memref<8x16x512xbf16, #tpu.memory_space<vmem>>, vector<1x16x128xbf16>
    %373 = vector.shape_cast %372 : vector<1x16x128xbf16> to vector<16x128xbf16>
    %374 = arith.extf %373 : vector<16x128xbf16> to vector<16x128xf32>
    %c0_162 = arith.constant 0 : index
    %c128_163 = arith.constant 128 : index
    %375 = vector.load %arg4[%c0_162, %c128_163] : memref<128x512xf32, #tpu.memory_space<vmem>>, vector<128x128xf32>
    %cst_164 = arith.constant dense<0.000000e+00> : vector<16x128xf32>
    %376 = tpu.matmul %341, %375, %cst_164 {dimension_numbers = #tpu.dot_dimension_numbers<[1], [0], [0], [1], [0, 0, 1, 1], [], []>} : vector<16x128xf32>, vector<128x128xf32>, vector<16x128xf32> -> vector<16x128xf32>
    %377 = arith.addf %374, %376 : vector<16x128xf32>
    %378 = arith.negf %377 : vector<16x128xf32>
    %379 = math.exp %378 : vector<16x128xf32>
    %cst_165 = arith.constant 1.000000e+00 : f32
    %380 = vector.broadcast %cst_165 : f32 to vector<16x128xf32>
    %381 = arith.addf %380, %379 : vector<16x128xf32>
    %382 = arith.divf %380, %381 : vector<16x128xf32>
    %383 = arith.mulf %382, %327 : vector<16x128xf32>
    %384 = arith.addf %383, %370 : vector<16x128xf32>
    %385 = arith.index_cast %c6_i32 : i32 to index
    %c0_166 = arith.constant 0 : index
    %c384_167 = arith.constant 384 : index
    %386 = vector.load %arg2[%385, %c0_166, %c384_167] : memref<8x16x512xbf16, #tpu.memory_space<vmem>>, vector<1x16x128xbf16>
    %387 = vector.shape_cast %386 : vector<1x16x128xbf16> to vector<16x128xbf16>
    %388 = arith.extf %387 : vector<16x128xbf16> to vector<16x128xf32>
    %c0_168 = arith.constant 0 : index
    %c384_169 = arith.constant 384 : index
    %389 = vector.load %arg4[%c0_168, %c384_169] : memref<128x512xf32, #tpu.memory_space<vmem>>, vector<128x128xf32>
    %cst_170 = arith.constant dense<0.000000e+00> : vector<16x128xf32>
    %390 = tpu.matmul %341, %389, %cst_170 {dimension_numbers = #tpu.dot_dimension_numbers<[1], [0], [0], [1], [0, 0, 1, 1], [], []>} : vector<16x128xf32>, vector<128x128xf32>, vector<16x128xf32> -> vector<16x128xf32>
    %391 = arith.addf %388, %390 : vector<16x128xf32>
    %392 = arith.negf %391 : vector<16x128xf32>
    %393 = math.exp %392 : vector<16x128xf32>
    %cst_171 = arith.constant 1.000000e+00 : f32
    %394 = vector.broadcast %cst_171 : f32 to vector<16x128xf32>
    %395 = arith.addf %394, %393 : vector<16x128xf32>
    %396 = arith.divf %394, %395 : vector<16x128xf32>
    %397 = math.tanh %384 : vector<16x128xf32>
    %398 = arith.mulf %396, %397 : vector<16x128xf32>
    %399 = arith.addi %4, %c6_i32 : i32
    %400 = vector.broadcast %399 : i32 to vector<16x1xi32>
    %401 = arith.cmpi slt, %400, %3 : vector<16x1xi32>
    %cst_172 = arith.constant 0.000000e+00 : f32
    %402 = vector.shape_cast %401 : vector<16x1xi1> to vector<16x1xi1>
    %403 = vector.broadcast %402 : vector<16x1xi1> to vector<16x128xi1>
    %404 = vector.broadcast %cst_172 : f32 to vector<16x128xf32>
    %405 = arith.select %403, %398, %404 : vector<16x128xi1>, vector<16x128xf32>
    %406 = arith.addf %349, %405 : vector<16x128xf32>
    %c7_i32 = arith.constant 7 : i32
    %407 = arith.index_cast %c7_i32 : i32 to index
    %c0_173 = arith.constant 0 : index
    %c0_174 = arith.constant 0 : index
    %408 = vector.load %arg2[%407, %c0_173, %c0_174] : memref<8x16x512xbf16, #tpu.memory_space<vmem>>, vector<1x16x128xbf16>
    %409 = vector.shape_cast %408 : vector<1x16x128xbf16> to vector<16x128xbf16>
    %410 = arith.extf %409 : vector<16x128xbf16> to vector<16x128xf32>
    %c0_175 = arith.constant 0 : index
    %c0_176 = arith.constant 0 : index
    %411 = vector.load %arg4[%c0_175, %c0_176] : memref<128x512xf32, #tpu.memory_space<vmem>>, vector<128x128xf32>
    %cst_177 = arith.constant dense<0.000000e+00> : vector<16x128xf32>
    %412 = tpu.matmul %398, %411, %cst_177 {dimension_numbers = #tpu.dot_dimension_numbers<[1], [0], [0], [1], [0, 0, 1, 1], [], []>} : vector<16x128xf32>, vector<128x128xf32>, vector<16x128xf32> -> vector<16x128xf32>
    %413 = arith.addf %410, %412 : vector<16x128xf32>
    %414 = arith.negf %413 : vector<16x128xf32>
    %415 = math.exp %414 : vector<16x128xf32>
    %cst_178 = arith.constant 1.000000e+00 : f32
    %416 = vector.broadcast %cst_178 : f32 to vector<16x128xf32>
    %417 = arith.addf %416, %415 : vector<16x128xf32>
    %418 = arith.divf %416, %417 : vector<16x128xf32>
    %419 = arith.index_cast %c7_i32 : i32 to index
    %c0_179 = arith.constant 0 : index
    %c256_180 = arith.constant 256 : index
    %420 = vector.load %arg2[%419, %c0_179, %c256_180] : memref<8x16x512xbf16, #tpu.memory_space<vmem>>, vector<1x16x128xbf16>
    %421 = vector.shape_cast %420 : vector<1x16x128xbf16> to vector<16x128xbf16>
    %422 = arith.extf %421 : vector<16x128xbf16> to vector<16x128xf32>
    %c0_181 = arith.constant 0 : index
    %c256_182 = arith.constant 256 : index
    %423 = vector.load %arg4[%c0_181, %c256_182] : memref<128x512xf32, #tpu.memory_space<vmem>>, vector<128x128xf32>
    %cst_183 = arith.constant dense<0.000000e+00> : vector<16x128xf32>
    %424 = tpu.matmul %398, %423, %cst_183 {dimension_numbers = #tpu.dot_dimension_numbers<[1], [0], [0], [1], [0, 0, 1, 1], [], []>} : vector<16x128xf32>, vector<128x128xf32>, vector<16x128xf32> -> vector<16x128xf32>
    %425 = arith.addf %422, %424 : vector<16x128xf32>
    %426 = math.tanh %425 : vector<16x128xf32>
    %427 = arith.mulf %418, %426 : vector<16x128xf32>
    %428 = arith.index_cast %c7_i32 : i32 to index
    %c0_184 = arith.constant 0 : index
    %c128_185 = arith.constant 128 : index
    %429 = vector.load %arg2[%428, %c0_184, %c128_185] : memref<8x16x512xbf16, #tpu.memory_space<vmem>>, vector<1x16x128xbf16>
    %430 = vector.shape_cast %429 : vector<1x16x128xbf16> to vector<16x128xbf16>
    %431 = arith.extf %430 : vector<16x128xbf16> to vector<16x128xf32>
    %c0_186 = arith.constant 0 : index
    %c128_187 = arith.constant 128 : index
    %432 = vector.load %arg4[%c0_186, %c128_187] : memref<128x512xf32, #tpu.memory_space<vmem>>, vector<128x128xf32>
    %cst_188 = arith.constant dense<0.000000e+00> : vector<16x128xf32>
    %433 = tpu.matmul %398, %432, %cst_188 {dimension_numbers = #tpu.dot_dimension_numbers<[1], [0], [0], [1], [0, 0, 1, 1], [], []>} : vector<16x128xf32>, vector<128x128xf32>, vector<16x128xf32> -> vector<16x128xf32>
    %434 = arith.addf %431, %433 : vector<16x128xf32>
    %435 = arith.negf %434 : vector<16x128xf32>
    %436 = math.exp %435 : vector<16x128xf32>
    %cst_189 = arith.constant 1.000000e+00 : f32
    %437 = vector.broadcast %cst_189 : f32 to vector<16x128xf32>
    %438 = arith.addf %437, %436 : vector<16x128xf32>
    %439 = arith.divf %437, %438 : vector<16x128xf32>
    %440 = arith.mulf %439, %384 : vector<16x128xf32>
    %441 = arith.addf %440, %427 : vector<16x128xf32>
    %442 = arith.index_cast %c7_i32 : i32 to index
    %c0_190 = arith.constant 0 : index
    %c384_191 = arith.constant 384 : index
    %443 = vector.load %arg2[%442, %c0_190, %c384_191] : memref<8x16x512xbf16, #tpu.memory_space<vmem>>, vector<1x16x128xbf16>
    %444 = vector.shape_cast %443 : vector<1x16x128xbf16> to vector<16x128xbf16>
    %445 = arith.extf %444 : vector<16x128xbf16> to vector<16x128xf32>
    %c0_192 = arith.constant 0 : index
    %c384_193 = arith.constant 384 : index
    %446 = vector.load %arg4[%c0_192, %c384_193] : memref<128x512xf32, #tpu.memory_space<vmem>>, vector<128x128xf32>
    %cst_194 = arith.constant dense<0.000000e+00> : vector<16x128xf32>
    %447 = tpu.matmul %398, %446, %cst_194 {dimension_numbers = #tpu.dot_dimension_numbers<[1], [0], [0], [1], [0, 0, 1, 1], [], []>} : vector<16x128xf32>, vector<128x128xf32>, vector<16x128xf32> -> vector<16x128xf32>
    %448 = arith.addf %445, %447 : vector<16x128xf32>
    %449 = arith.negf %448 : vector<16x128xf32>
    %450 = math.exp %449 : vector<16x128xf32>
    %cst_195 = arith.constant 1.000000e+00 : f32
    %451 = vector.broadcast %cst_195 : f32 to vector<16x128xf32>
    %452 = arith.addf %451, %450 : vector<16x128xf32>
    %453 = arith.divf %451, %452 : vector<16x128xf32>
    %454 = math.tanh %441 : vector<16x128xf32>
    %455 = arith.mulf %453, %454 : vector<16x128xf32>
    %456 = arith.addi %4, %c7_i32 : i32
    %457 = vector.broadcast %456 : i32 to vector<16x1xi32>
    %458 = arith.cmpi slt, %457, %3 : vector<16x1xi32>
    %cst_196 = arith.constant 0.000000e+00 : f32
    %459 = vector.shape_cast %458 : vector<16x1xi1> to vector<16x1xi1>
    %460 = vector.broadcast %459 : vector<16x1xi1> to vector<16x128xi1>
    %461 = vector.broadcast %cst_196 : f32 to vector<16x128xf32>
    %462 = arith.select %460, %455, %461 : vector<16x128xi1>, vector<16x128xf32>
    %463 = arith.addf %406, %462 : vector<16x128xf32>
    %c8_i32_197 = arith.constant 8 : i32
    %c0_198 = arith.constant 0 : index
    %c0_199 = arith.constant 0 : index
    %464 = vector.load %arg8[%c0_198, %c0_199] : memref<16x128xf32, #tpu.memory_space<vmem>>, vector<16x128xf32>
    tpu.vector_store %arg8[%c0_198, %c0_199], %455 {strides = array<i32>} : memref<16x128xf32, #tpu.memory_space<vmem>>, vector<16x128xf32>,
    %c0_200 = arith.constant 0 : index
    %c0_201 = arith.constant 0 : index
    %465 = vector.load %arg9[%c0_200, %c0_201] : memref<16x128xf32, #tpu.memory_space<vmem>>, vector<16x128xf32>
    tpu.vector_store %arg9[%c0_200, %c0_201], %441 {strides = array<i32>} : memref<16x128xf32, #tpu.memory_space<vmem>>, vector<16x128xf32>,
    %c0_202 = arith.constant 0 : index
    %c0_203 = arith.constant 0 : index
    %466 = vector.load %arg10[%c0_202, %c0_203] : memref<16x128xf32, #tpu.memory_space<vmem>>, vector<16x128xf32>
    tpu.vector_store %arg10[%c0_202, %c0_203], %463 {strides = array<i32>} : memref<16x128xf32, #tpu.memory_space<vmem>>, vector<16x128xf32>,
    %c0_i32_204 = arith.constant 0 : i32
    %467 = arith.cmpi eq, %arg1, %c0_i32_204 : i32
    %468 = arith.extui %467 : i1 to i32
    %c0_i32_205 = arith.constant 0 : i32
    %469 = arith.cmpi ne, %468, %c0_i32_205 : i32
    scf.if %469 {
      %c1_i32_206 = arith.constant 1 : i32
      %470 = vector.broadcast %c1_i32_206 : i32 to vector<16x1xi32>
      %471 = arith.maxsi %3, %470 : vector<16x1xi32>
      %472 = arith.sitofp %471 : vector<16x1xi32> to vector<16x1xf32>
      %cst_207 = arith.constant 1.000000e+00 : f32
      %473 = vector.broadcast %cst_207 : f32 to vector<16x1xf32>
      %474 = arith.divf %473, %472 : vector<16x1xf32>
      %c0_208 = arith.constant 0 : index
      %c0_209 = arith.constant 0 : index
      %475 = vector.load %arg10[%c0_208, %c0_209] : memref<16x128xf32, #tpu.memory_space<vmem>>, vector<16x128xf32>
      %476 = vector.broadcast %474 : vector<16x1xf32> to vector<16x128xf32>
      %477 = arith.mulf %475, %476 : vector<16x128xf32>
      %c0_210 = arith.constant 0 : index
      %c0_211 = arith.constant 0 : index
      %478 = vector.load %arg5[%c0_210, %c0_211] : memref<128x128xf32, #tpu.memory_space<vmem>>, vector<128x128xf32>
      %cst_212 = arith.constant dense<0.000000e+00> : vector<16x128xf32>
      %479 = tpu.matmul %477, %478, %cst_212 {dimension_numbers = #tpu.dot_dimension_numbers<[1], [0], [0], [1], [0, 0, 1, 1], [], []>} : vector<16x128xf32>, vector<128x128xf32>, vector<16x128xf32> -> vector<16x128xf32>
      %c0_213 = arith.constant 0 : index
      %c0_214 = arith.constant 0 : index
      %480 = vector.load %arg6[%c0_213, %c0_214] : memref<1x128xf32, #tpu.memory_space<vmem>>, vector<1x128xf32>
      %481 = vector.broadcast %480 : vector<1x128xf32> to vector<16x128xf32>
      %482 = arith.addf %479, %481 : vector<16x128xf32>
      %483 = arith.negf %482 : vector<16x128xf32>
      %484 = math.exp %483 : vector<16x128xf32>
      %cst_215 = arith.constant 1.000000e+00 : f32
      %485 = vector.broadcast %cst_215 : f32 to vector<16x128xf32>
      %486 = arith.addf %485, %484 : vector<16x128xf32>
      %487 = arith.divf %485, %486 : vector<16x128xf32>
      %c0_216 = arith.constant 0 : index
      %c0_217 = arith.constant 0 : index
      %488 = vector.load %arg7[%c0_216, %c0_217] : memref<16x128xf32, #tpu.memory_space<vmem>>, vector<16x128xf32>
      tpu.vector_store %arg7[%c0_216, %c0_217], %487 {strides = array<i32>} : memref<16x128xf32, #tpu.memory_space<vmem>>, vector<16x128xf32>,
    } else {
    }
    return
  }
  func.func @transform_0(%arg0: i32, %arg1: i32) -> (i32, i32, i32) {
    %c0_i32 = arith.constant 0 : i32
    %c0_i32_0 = arith.constant 0 : i32
    return %arg1, %arg0, %c0_i32 : i32, i32, i32
  }
  func.func @transform_1(%arg0: i32, %arg1: i32) -> (i32, i32) {
    %c0_i32 = arith.constant 0 : i32
    %c0_i32_0 = arith.constant 0 : i32
    return %arg0, %c0_i32 : i32, i32
  }
  func.func @transform_2(%arg0: i32, %arg1: i32) -> (i32, i32) {
    %c0_i32 = arith.constant 0 : i32
    %c0_i32_0 = arith.constant 0 : i32
    %c0_i32_1 = arith.constant 0 : i32
    return %c0_i32, %c0_i32_0 : i32, i32
  }
  func.func @transform_3(%arg0: i32, %arg1: i32) -> (i32, i32) {
    %c0_i32 = arith.constant 0 : i32
    %c0_i32_0 = arith.constant 0 : i32
    %c0_i32_1 = arith.constant 0 : i32
    return %c0_i32, %c0_i32_0 : i32, i32
  }
  func.func @transform_4(%arg0: i32, %arg1: i32) -> (i32, i32) {
    %c0_i32 = arith.constant 0 : i32
    %c0_i32_0 = arith.constant 0 : i32
    %c0_i32_1 = arith.constant 0 : i32
    return %c0_i32, %c0_i32_0 : i32, i32
  }
  func.func @transform_5(%arg0: i32, %arg1: i32) -> (i32, i32) {
    %c0_i32 = arith.constant 0 : i32
    %c0_i32_0 = arith.constant 0 : i32
    return %arg0, %c0_i32 : i32, i32
  }
}

</mosaic_0001>

<llo_original>
// kernel: imdb_net_forward.1
$region0: #{imdb_net_forward.1}
  #allocation0 [shape = 'u32[]', space=smem, size = 0x4, offset = 0x4, fixed_abs, tag = 'smem constant byte address 0x4 - core index']
  #allocation1 [shape = 'u32[144,128]{1,0:T(1,128)}', space=vmem, size = 0x12000, scoped, tag = 'internal scratch']
  #allocation2 [shape = 'f32[16,128]{1,0:T(8,128)}', space=vmem, size = 0x2000, scoped, tag = 'scratch operand']
  #allocation3 [shape = 'f32[16,128]{1,0:T(8,128)}', space=vmem, size = 0x2000, scoped, tag = 'scratch operand']
  #allocation4 [shape = 'f32[16,128]{1,0:T(8,128)}', space=vmem, size = 0x2000, scoped, tag = 'scratch operand']
  %s0 = inlined_call_operand.vmem [shape: bf16[8,16,512], index: 0, kind: input, shape index: {}]
  %s1 = inlined_call_operand.vmem [shape: s32[16,1], index: 1, kind: input, shape index: {}]
  %s2 = inlined_call_operand.vmem [shape: f32[128,512], index: 2, kind: input, shape index: {}]
  %s3 = inlined_call_operand.vmem [shape: f32[128,128], index: 3, kind: input, shape index: {}]
  %s4 = inlined_call_operand.vmem [shape: f32[1,128], index: 4, kind: input, shape index: {}]
  %s5 = inlined_call_operand.vmem [shape: f32[16,128], index: 5, kind: output, shape index: {}]
  %s6 = sld [smem:[#allocation0]]
  $region38: #{imdb_net_forward.1} parent=0
    _
  %s8 = ssub.s32 1, %s6
  %s9 = scalar_select 0, %s8, %s6
  // Predicated region
  $region2: #{imdb_net_forward.1} parent=0 // pred_check
    _
  $region3: #{imdb_net_forward.1} parent=0 // pred_check_branch
    %11 = sbr.rel (0) target = $region5
  $region4: #{imdb_net_forward.1} parent=0 // pred_region
    _
  $region5: #{imdb_net_forward.1} parent=0 // pred_fallthru
    _
  // Predicated region
  $region6: #{imdb_net_forward.1} parent=0 // pred_check
    _
  $region7: #{imdb_net_forward.1} parent=0 // pred_check_branch
    %13 = sbr.rel (0) target = $region9
  $region8: #{imdb_net_forward.1} parent=0 // pred_region
    _
  $region9: #{imdb_net_forward.1} parent=0 // pred_fallthru
    _
  // Predicated region
  $region10: #{imdb_net_forward.1} parent=0 // pred_check
    _
  $region11: #{imdb_net_forward.1} parent=0 // pred_check_branch
    %15 = sbr.rel (0) target = $region13
  $region12: #{imdb_net_forward.1} parent=0 // pred_region
    _
  $region13: #{imdb_net_forward.1} parent=0 // pred_fallthru
    _
  // Predicated region
  $region14: #{imdb_net_forward.1} parent=0 // pred_check
    _
  $region15: #{imdb_net_forward.1} parent=0 // pred_check_branch
    %17 = sbr.rel (0) target = $region17
  $region16: #{imdb_net_forward.1} parent=0 // pred_region
    _
  $region17: #{imdb_net_forward.1} parent=0 // pred_fallthru
    _
  // Predicated region
  $region18: #{imdb_net_forward.1} parent=0 // pred_check
    _
  $region19: #{imdb_net_forward.1} parent=0 // pred_check_branch
    %19 = sbr.rel (0) target = $region21
  $region20: #{imdb_net_forward.1} parent=0 // pred_region
    _
  $region21: #{imdb_net_forward.1} parent=0 // pred_fallthru
    _
  %p20 = scmp.eq.s32.totalorder 0, 0
  // Predicated region
  $region22: #{imdb_net_forward.1} parent=0 // pred_check
    %p21 = pneg %p20
  $region23: #{imdb_net_forward.1} parent=0 // pred_check_branch
    %23 = sbr.rel (%p21) target = $region25
  $region24: #{imdb_net_forward.1} parent=0 // pred_region
    %24 = vst [vmem:[#allocation2] sm:$0xff] 0.0
    %25 = vst [vmem:[#allocation2 + $0x8] sm:$0xff] 0.0
    %26 = vst [vmem:[#allocation3] sm:$0xff] 0.0
    %27 = vst [vmem:[#allocation3 + $0x8] sm:$0xff] 0.0
    %28 = vst [vmem:[#allocation4] sm:$0xff] 0.0
    %29 = vst [vmem:[#allocation4 + $0x8] sm:$0xff] 0.0
  $region25: #{imdb_net_forward.1} parent=0 // pred_fallthru
    _
  %v30 = vld [vmem:[%s1] sm:$0xff]
  %v31 = vld [vmem:[%s1 + $0x8] sm:$0xff]
  %s32 = smul.u32 0, 8
  %v33 = vld [vmem:[#allocation2] sm:$0xff]
  %v34 = vld [vmem:[#allocation2 + $0x8] sm:$0xff]
  %v35 = vld [vmem:[#allocation3] sm:$0xff]
  %v36 = vld [vmem:[#allocation3 + $0x8] sm:$0xff]
  %v37 = vld [vmem:[#allocation4] sm:$0xff]
  %v38 = vld [vmem:[#allocation4 + $0x8] sm:$0xff]
  %v39 = vld [vmem:[%s0] sm:$0xf]
  %v40 = vld [vmem:[%s0 + $0x10] sm:$0xf]
  %v41 = vunpack.c.l.bf16 %v39
  %v42 = vunpack.c.l.bf16 %v40
  %v43 = vld [vmem:[%s2] sm:$0xff]
  %v44 = vld [vmem:[%s2 + $0x20] sm:$0xff]
  %v45 = vld [vmem:[%s2 + $0x40] sm:$0xff]
  %v46 = vld [vmem:[%s2 + $0x60] sm:$0xff]
  %v47 = vld [vmem:[%s2 + $0x80] sm:$0xff]
  %v48 = vld [vmem:[%s2 + $0xa0] sm:$0xff]
  %v49 = vld [vmem:[%s2 + $0xc0] sm:$0xff]
  %v50 = vld [vmem:[%s2 + $0xe0] sm:$0xff]
  %v51 = vld [vmem:[%s2 + $0x100] sm:$0xff]
  %v52 = vld [vmem:[%s2 + $0x120] sm:$0xff]
  %v53 = vld [vmem:[%s2 + $0x140] sm:$0xff]
  %v54 = vld [vmem:[%s2 + $0x160] sm:$0xff]
  %v55 = vld [vmem:[%s2 + $0x180] sm:$0xff]
  %v56 = vld [vmem:[%s2 + $0x1a0] sm:$0xff]
  %v57 = vld [vmem:[%s2 + $0x1c0] sm:$0xff]
  %v58 = vld [vmem:[%s2 + $0x1e0] sm:$0xff]
  %59 = vmatprep.subr.mxu0 0.0
  %60 = vmatpush1.msra.mxu0 %v43
  %61 = vmatprep.subr.mxu0 0.0
  %62 = vmatpush1.msra.mxu0 %v44
  %63 = vmatprep.subr.mxu0 0.0
  %64 = vmatpush1.msra.mxu0 %v45
  %65 = vmatprep.subr.mxu0 0.0
  %66 = vmatpush1.msra.mxu0 %v46
  %67 = vmatprep.subr.mxu0 0.0
  %68 = vmatpush1.msra.mxu0 %v47
  %69 = vmatprep.subr.mxu0 0.0
  %70 = vmatpush1.msra.mxu0 %v48
  %71 = vmatprep.subr.mxu0 0.0
  %72 = vmatpush1.msra.mxu0 %v49
  %73 = vmatprep.subr.mxu0 0.0
  %74 = vmatpush1.msra.mxu0 %v50
  %75 = vmatprep.subr.mxu0 0.0
  %76 = vmatpush1.msra.mxu0 %v51
  %77 = vmatprep.subr.mxu0 0.0
  %78 = vmatpush1.msra.mxu0 %v52
  %79 = vmatprep.subr.mxu0 0.0
  %80 = vmatpush1.msra.mxu0 %v53
  %81 = vmatprep.subr.mxu0 0.0
  %82 = vmatpush1.msra.mxu0 %v54
  %83 = vmatprep.subr.mxu0 0.0
  %84 = vmatpush1.msra.mxu0 %v55
  %85 = vmatprep.subr.mxu0 0.0
  %86 = vmatpush1.msra.mxu0 %v56
  %87 = vmatprep.subr.mxu0 0.0
  %88 = vmatpush1.msra.mxu0 %v57
  %89 = vmatprep.subr.mxu0 0.0
  %90 = vmatpush1.msra.mxu0 %v58
  %91 = vmatprep.subr.mxu0 0.0
  %92 = vmatpush1.msra.mxu0 0.0
  %93 = vmatprep.subr.mxu0 0.0
  %94 = vmatpush1.msra.mxu0 0.0
  %95 = vmatprep.subr.mxu0 0.0
  %96 = vmatpush1.msra.mxu0 0.0
  %97 = vmatprep.subr.mxu0 0.0
  %98 = vmatpush1.msra.mxu0 0.0
  %99 = vmatprep.subr.mxu0 0.0
  %100 = vmatpush1.msra.mxu0 0.0
  %101 = vmatprep.subr.mxu0 0.0
  %102 = vmatpush1.msra.mxu0 0.0
  %103 = vmatprep.subr.mxu0 0.0
  %104 = vmatpush1.msra.mxu0 0.0
  %105 = vmatprep.subr.mxu0 0.0
  %106 = vmatpush1.msra.mxu0 0.0
  %107 = vmatprep.subr.mxu0 0.0
  %108 = vmatpush1.msra.mxu0 0.0
  %109 = vmatprep.subr.mxu0 0.0
  %110 = vmatpush1.msra.mxu0 0.0
  %111 = vmatprep.subr.mxu0 0.0
  %112 = vmatpush1.msra.mxu0 0.0
  %113 = vmatprep.subr.mxu0 0.0
  %114 = vmatpush1.msra.mxu0 0.0
  %115 = vmatprep.subr.mxu0 0.0
  %116 = vmatpush1.msra.mxu0 0.0
  %117 = vmatprep.subr.mxu0 0.0
  %118 = vmatpush1.msra.mxu0 0.0
  %119 = vmatprep.subr.mxu0 0.0
  %120 = vmatpush1.msra.mxu0 0.0
  %121 = vmatprep.subr.mxu0 0.0
  %122 = vmatpush1.msra.mxu0 0.0
  %123 = vmatprep.mubr.f32.mxu0 0.0
  %124 = vmatmul.mubr.f32.gmra.mrb[0].mxu0 %v33
  %v125 = vpop.f32.mrb[0].mxu0
  %v126 = vadd.f32 0.0, %v125
  %v127 = vpop.f32.mrb[0].mxu0
  %128 = vmatprep.mubr.f32.mxu0 0.0
  %129 = vmatmul.mubr.f32.gmra.mrb[0].mxu0 %v34
  %v130 = vpop.f32.mrb[0].mxu0
  %v131 = vadd.f32 0.0, %v130
  %v132 = vpop.f32.mrb[0].mxu0
  %133 = vdwg.mxu0
  %v134 = vadd.f32 %v41, %v126
  %v135 = vadd.f32 %v42, %v131
  %v136 = vxor.u32 %v134, 2147483648
  %v137 = vxor.u32 %v135, 2147483648
  %v138 = vmul.f32 %v136, 1.442695
  %v139 = vpow.pop %v138
  %v140 = vmul.f32 %v137, 1.442695
  %v141 = vpow.pop %v140
  %v142 = vadd.f32 %v139, 1.0
  %v143 = vadd.f32 %v141, 1.0
  %v144 = vrcp.pop %v142
  %v145 = vmul.f32 1.0, %v144
  %v146 = vrcp.pop %v143
  %v147 = vmul.f32 1.0, %v146
  %v148 = vld [vmem:[%s0 + $0x8] sm:$0xf]
  %v149 = vld [vmem:[%s0 + $0x18] sm:$0xf]
  %v150 = vunpack.c.l.bf16 %v148
  %v151 = vunpack.c.l.bf16 %v149
  %v152 = vld [vmem:[%s2 + $0x10] sm:$0xff]
  %v153 = vld [vmem:[%s2 + $0x30] sm:$0xff]
  %v154 = vld [vmem:[%s2 + $0x50] sm:$0xff]
  %v155 = vld [vmem:[%s2 + $0x70] sm:$0xff]
  %v156 = vld [vmem:[%s2 + $0x90] sm:$0xff]
  %v157 = vld [vmem:[%s2 + $0xb0] sm:$0xff]
  %v158 = vld [vmem:[%s2 + $0xd0] sm:$0xff]
  %v159 = vld [vmem:[%s2 + $0xf0] sm:$0xff]
  %v160 = vld [vmem:[%s2 + $0x110] sm:$0xff]
  %v161 = vld [vmem:[%s2 + $0x130] sm:$0xff]
  %v162 = vld [vmem:[%s2 + $0x150] sm:$0xff]
  %v163 = vld [vmem:[%s2 + $0x170] sm:$0xff]
  %v164 = vld [vmem:[%s2 + $0x190] sm:$0xff]
  %v165 = vld [vmem:[%s2 + $0x1b0] sm:$0xff]
  %v166 = vld [vmem:[%s2 + $0x1d0] sm:$0xff]
  %v167 = vld [vmem:[%s2 + $0x1f0] sm:$0xff]
  %168 = vmatprep.subr.mxu0 0.0
  %169 = vmatpush1.msra.mxu0 %v152
  %170 = vmatprep.subr.mxu0 0.0
  %171 = vmatpush1.msra.mxu0 %v153
  %172 = vmatprep.subr.mxu0 0.0
  %173 = vmatpush1.msra.mxu0 %v154
  %174 = vmatprep.subr.mxu0 0.0
  %175 = vmatpush1.msra.mxu0 %v155
  %176 = vmatprep.subr.mxu0 0.0
  %177 = vmatpush1.msra.mxu0 %v156
  %178 = vmatprep.subr.mxu0 0.0
  %179 = vmatpush1.msra.mxu0 %v157
  %180 = vmatprep.subr.mxu0 0.0
  %181 = vmatpush1.msra.mxu0 %v158
  %182 = vmatprep.subr.mxu0 0.0
  %183 = vmatpush1.msra.mxu0 %v159
  %184 = vmatprep.subr.mxu0 0.0
  %185 = vmatpush1.msra.mxu0 %v160
  %186 = vmatprep.subr.mxu0 0.0
  %187 = vmatpush1.msra.mxu0 %v161
  %188 = vmatprep.subr.mxu0 0.0
  %189 = vmatpush1.msra.mxu0 %v162
  %190 = vmatprep.subr.mxu0 0.0
  %191 = vmatpush1.msra.mxu0 %v163
  %192 = vmatprep.subr.mxu0 0.0
  %193 = vmatpush1.msra.mxu0 %v164
  %194 = vmatprep.subr.mxu0 0.0
  %195 = vmatpush1.msra.mxu0 %v165
  %196 = vmatprep.subr.mxu0 0.0
  %197 = vmatpush1.msra.mxu0 %v166
  %198 = vmatprep.subr.mxu0 0.0
  %199 = vmatpush1.msra.mxu0 %v167
  %200 = vmatprep.subr.mxu0 0.0
  %201 = vmatpush1.msra.mxu0 0.0
  %202 = vmatprep.subr.mxu0 0.0
  %203 = vmatpush1.msra.mxu0 0.0
  %204 = vmatprep.subr.mxu0 0.0
  %205 = vmatpush1.msra.mxu0 0.0
  %206 = vmatprep.subr.mxu0 0.0
  %207 = vmatpush1.msra.mxu0 0.0
  %208 = vmatprep.subr.mxu0 0.0
  %209 = vmatpush1.msra.mxu0 0.0
  %210 = vmatprep.subr.mxu0 0.0
  %211 = vmatpush1.msra.mxu0 0.0
  %212 = vmatprep.subr.mxu0 0.0
  %213 = vmatpush1.msra.mxu0 0.0
  %214 = vmatprep.subr.mxu0 0.0
  %215 = vmatpush1.msra.mxu0 0.0
  %216 = vmatprep.subr.mxu0 0.0
  %217 = vmatpush1.msra.mxu0 0.0
  %218 = vmatprep.subr.mxu0 0.0
  %219 = vmatpush1.msra.mxu0 0.0
  %220 = vmatprep.subr.mxu0 0.0
  %221 = vmatpush1.msra.mxu0 0.0
  %222 = vmatprep.subr.mxu0 0.0
  %223 = vmatpush1.msra.mxu0 0.0
  %224 = vmatprep.subr.mxu0 0.0
  %225 = vmatpush1.msra.mxu0 0.0
  %226 = vmatprep.subr.mxu0 0.0
  %227 = vmatpush1.msra.mxu0 0.0
  %228 = vmatprep.subr.mxu0 0.0
  %229 = vmatpush1.msra.mxu0 0.0
  %230 = vmatprep.subr.mxu0 0.0
  %231 = vmatpush1.msra.mxu0 0.0
  %232 = vmatprep.mubr.f32.mxu0 0.0
  %233 = vmatmul.mubr.f32.gmra.mrb[0].mxu0 %v33
  %v234 = vpop.f32.mrb[0].mxu0
  %v235 = vadd.f32 0.0, %v234
  %v236 = vpop.f32.mrb[0].mxu0
  %237 = vmatprep.mubr.f32.mxu0 0.0
  %238 = vmatmul.mubr.f32.gmra.mrb[0].mxu0 %v34
  %v239 = vpop.f32.mrb[0].mxu0
  %v240 = vadd.f32 0.0, %v239
  %v241 = vpop.f32.mrb[0].mxu0
  %242 = vdwg.mxu0
  %v243 = vadd.f32 %v150, %v235
  %v244 = vadd.f32 %v151, %v240
  %v245 = vtanh.pop %v243
  %v246 = vtanh.pop %v244
  %v247 = vmul.f32 %v145, %v245
  %v248 = vmul.f32 %v147, %v246
  %v249 = vld [vmem:[%s0 + $0x4] sm:$0xf]
  %v250 = vld [vmem:[%s0 + $0x14] sm:$0xf]
  %v251 = vunpack.c.l.bf16 %v249
  %v252 = vunpack.c.l.bf16 %v250
  %v253 = vld [vmem:[%s2 + $0x8] sm:$0xff]
  %v254 = vld [vmem:[%s2 + $0x28] sm:$0xff]
  %v255 = vld [vmem:[%s2 + $0x48] sm:$0xff]
  %v256 = vld [vmem:[%s2 + $0x68] sm:$0xff]
  %v257 = vld [vmem:[%s2 + $0x88] sm:$0xff]
  %v258 = vld [vmem:[%s2 + $0xa8] sm:$0xff]
  %v259 = vld [vmem:[%s2 + $0xc8] sm:$0xff]
  %v260 = vld [vmem:[%s2 + $0xe8] sm:$0xff]
  %v261 = vld [vmem:[%s2 + $0x108] sm:$0xff]
  %v262 = vld [vmem:[%s2 + $0x128] sm:$0xff]
  %v263 = vld [vmem:[%s2 + $0x148] sm:$0xff]
  %v264 = vld [vmem:[%s2 + $0x168] sm:$0xff]
  %v265 = vld [vmem:[%s2 + $0x188] sm:$0xff]
  %v266 = vld [vmem:[%s2 + $0x1a8] sm:$0xff]
  %v267 = vld [vmem:[%s2 + $0x1c8] sm:$0xff]
  %v268 = vld [vmem:[%s2 + $0x1e8] sm:$0xff]
  %269 = vmatprep.subr.mxu0 0.0
  %270 = vmatpush1.msra.mxu0 %v253
  %271 = vmatprep.subr.mxu0 0.0
  %272 = vmatpush1.msra.mxu0 %v254
  %273 = vmatprep.subr.mxu0 0.0
  %274 = vmatpush1.msra.mxu0 %v255
  %275 = vmatprep.subr.mxu0 0.0
  %276 = vmatpush1.msra.mxu0 %v256
  %277 = vmatprep.subr.mxu0 0.0
  %278 = vmatpush1.msra.mxu0 %v257
  %279 = vmatprep.subr.mxu0 0.0
  %280 = vmatpush1.msra.mxu0 %v258
  %281 = vmatprep.subr.mxu0 0.0
  %282 = vmatpush1.msra.mxu0 %v259
  %283 = vmatprep.subr.mxu0 0.0
  %284 = vmatpush1.msra.mxu0 %v260
  %285 = vmatprep.subr.mxu0 0.0
  %286 = vmatpush1.msra.mxu0 %v261
  %287 = vmatprep.subr.mxu0 0.0
  %288 = vmatpush1.msra.mxu0 %v262
  %289 = vmatprep.subr.mxu0 0.0
  %290 = vmatpush1.msra.mxu0 %v263
  %291 = vmatprep.subr.mxu0 0.0
  %292 = vmatpush1.msra.mxu0 %v264
  %293 = vmatprep.subr.mxu0 0.0
  %294 = vmatpush1.msra.mxu0 %v265
  %295 = vmatprep.subr.mxu0 0.0
  %296 = vmatpush1.msra.mxu0 %v266
  %297 = vmatprep.subr.mxu0 0.0
  %298 = vmatpush1.msra.mxu0 %v267
  %299 = vmatprep.subr.mxu0 0.0
  %300 = vmatpush1.msra.mxu0 %v268
  %301 = vmatprep.subr.mxu0 0.0
  %302 = vmatpush1.msra.mxu0 0.0
  %303 = vmatprep.subr.mxu0 0.0
  %304 = vmatpush1.msra.mxu0 0.0
  %305 = vmatprep.subr.mxu0 0.0
  %306 = vmatpush1.msra.mxu0 0.0
  %307 = vmatprep.subr.mxu0 0.0
  %308 = vmatpush1.msra.mxu0 0.0
  %309 = vmatprep.subr.mxu0 0.0
  %310 = vmatpush1.msra.mxu0 0.0
  %311 = vmatprep.subr.mxu0 0.0
  %312 = vmatpush1.msra.mxu0 0.0
  %313 = vmatprep.subr.mxu0 0.0
  %314 = vmatpush1.msra.mxu0 0.0
  %315 = vmatprep.subr.mxu0 0.0
  %316 = vmatpush1.msra.mxu0 0.0
  %317 = vmatprep.subr.mxu0 0.0
  %318 = vmatpush1.msra.mxu0 0.0
  %319 = vmatprep.subr.mxu0 0.0
  %320 = vmatpush1.msra.mxu0 0.0
  %321 = vmatprep.subr.mxu0 0.0
  %322 = vmatpush1.msra.mxu0 0.0
  %323 = vmatprep.subr.mxu0 0.0
  %324 = vmatpush1.msra.mxu0 0.0
  %325 = vmatprep.subr.mxu0 0.0
  %326 = vmatpush1.msra.mxu0 0.0
  %327 = vmatprep.subr.mxu0 0.0
  %328 = vmatpush1.msra.mxu0 0.0
  %329 = vmatprep.subr.mxu0 0.0
  %330 = vmatpush1.msra.mxu0 0.0
  %331 = vmatprep.subr.mxu0 0.0
  %332 = vmatpush1.msra.mxu0 0.0
  %333 = vmatprep.mubr.f32.mxu0 0.0
  %334 = vmatmul.mubr.f32.gmra.mrb[0].mxu0 %v33
  %v335 = vpop.f32.mrb[0].mxu0
  %v336 = vadd.f32 0.0, %v335
  %v337 = vpop.f32.mrb[0].mxu0
  %338 = vmatprep.mubr.f32.mxu0 0.0
  %339 = vmatmul.mubr.f32.gmra.mrb[0].mxu0 %v34
  %v340 = vpop.f32.mrb[0].mxu0
  %v341 = vadd.f32 0.0, %v340
  %v342 = vpop.f32.mrb[0].mxu0
  %343 = vdwg.mxu0
  %v344 = vadd.f32 %v251, %v336
  %v345 = vadd.f32 %v252, %v341
  %v346 = vxor.u32 %v344, 2147483648
  %v347 = vxor.u32 %v345, 2147483648
  %v348 = vmul.f32 %v346, 1.442695
  %v349 = vpow.pop %v348
  %v350 = vmul.f32 %v347, 1.442695
  %v351 = vpow.pop %v350
  %v352 = vadd.f32 %v349, 1.0
  %v353 = vadd.f32 %v351, 1.0
  %v354 = vrcp.pop %v352
  %v355 = vmul.f32 1.0, %v354
  %v356 = vrcp.pop %v353
  %v357 = vmul.f32 1.0, %v356
  %v358 = vmul.f32 %v355, %v35
  %v359 = vmul.f32 %v357, %v36
  %v360 = vadd.f32 %v358, %v247
  %v361 = vadd.f32 %v359, %v248
  %v362 = vld [vmem:[%s0 + $0xc] sm:$0xf]
  %v363 = vld [vmem:[%s0 + $0x1c] sm:$0xf]
  %v364 = vunpack.c.l.bf16 %v362
  %v365 = vunpack.c.l.bf16 %v363
  %v366 = vld [vmem:[%s2 + $0x18] sm:$0xff]
  %v367 = vld [vmem:[%s2 + $0x38] sm:$0xff]
  %v368 = vld [vmem:[%s2 + $0x58] sm:$0xff]
  %v369 = vld [vmem:[%s2 + $0x78] sm:$0xff]
  %v370 = vld [vmem:[%s2 + $0x98] sm:$0xff]
  %v371 = vld [vmem:[%s2 + $0xb8] sm:$0xff]
  %v372 = vld [vmem:[%s2 + $0xd8] sm:$0xff]
  %v373 = vld [vmem:[%s2 + $0xf8] sm:$0xff]
  %v374 = vld [vmem:[%s2 + $0x118] sm:$0xff]
  %v375 = vld [vmem:[%s2 + $0x138] sm:$0xff]
  %v376 = vld [vmem:[%s2 + $0x158] sm:$0xff]
  %v377 = vld [vmem:[%s2 + $0x178] sm:$0xff]
  %v378 = vld [vmem:[%s2 + $0x198] sm:$0xff]
  %v379 = vld [vmem:[%s2 + $0x1b8] sm:$0xff]
  %v380 = vld [vmem:[%s2 + $0x1d8] sm:$0xff]
  %v381 = vld [vmem:[%s2 + $0x1f8] sm:$0xff]
  %382 = vmatprep.subr.mxu0 0.0
  %383 = vmatpush1.msra.mxu0 %v366
  %384 = vmatprep.subr.mxu0 0.0
  %385 = vmatpush1.msra.mxu0 %v367
  %386 = vmatprep.subr.mxu0 0.0
  %387 = vmatpush1.msra.mxu0 %v368
  %388 = vmatprep.subr.mxu0 0.0
  %389 = vmatpush1.msra.mxu0 %v369
  %390 = vmatprep.subr.mxu0 0.0
  %391 = vmatpush1.msra.mxu0 %v370
  %392 = vmatprep.subr.mxu0 0.0
  %393 = vmatpush1.msra.mxu0 %v371
  %394 = vmatprep.subr.mxu0 0.0
  %395 = vmatpush1.msra.mxu0 %v372
  %396 = vmatprep.subr.mxu0 0.0
  %397 = vmatpush1.msra.mxu0 %v373
  %398 = vmatprep.subr.mxu0 0.0
  %399 = vmatpush1.msra.mxu0 %v374
  %400 = vmatprep.subr.mxu0 0.0
  %401 = vmatpush1.msra.mxu0 %v375
  %402 = vmatprep.subr.mxu0 0.0
  %403 = vmatpush1.msra.mxu0 %v376
  %404 = vmatprep.subr.mxu0 0.0
  %405 = vmatpush1.msra.mxu0 %v377
  %406 = vmatprep.subr.mxu0 0.0
  %407 = vmatpush1.msra.mxu0 %v378
  %408 = vmatprep.subr.mxu0 0.0
  %409 = vmatpush1.msra.mxu0 %v379
  %410 = vmatprep.subr.mxu0 0.0
  %411 = vmatpush1.msra.mxu0 %v380
  %412 = vmatprep.subr.mxu0 0.0
  %413 = vmatpush1.msra.mxu0 %v381
  %414 = vmatprep.subr.mxu0 0.0
  %415 = vmatpush1.msra.mxu0 0.0
  %416 = vmatprep.subr.mxu0 0.0
  %417 = vmatpush1.msra.mxu0 0.0
  %418 = vmatprep.subr.mxu0 0.0
  %419 = vmatpush1.msra.mxu0 0.0
  %420 = vmatprep.subr.mxu0 0.0
  %421 = vmatpush1.msra.mxu0 0.0
  %422 = vmatprep.subr.mxu0 0.0
  %423 = vmatpush1.msra.mxu0 0.0
  %424 = vmatprep.subr.mxu0 0.0
  %425 = vmatpush1.msra.mxu0 0.0
  %426 = vmatprep.subr.mxu0 0.0
  %427 = vmatpush1.msra.mxu0 0.0
  %428 = vmatprep.subr.mxu0 0.0
  %429 = vmatpush1.msra.mxu0 0.0
  %430 = vmatprep.subr.mxu0 0.0
  %431 = vmatpush1.msra.mxu0 0.0
  %432 = vmatprep.subr.mxu0 0.0
  %433 = vmatpush1.msra.mxu0 0.0
  %434 = vmatprep.subr.mxu0 0.0
  %435 = vmatpush1.msra.mxu0 0.0
  %436 = vmatprep.subr.mxu0 0.0
  %437 = vmatpush1.msra.mxu0 0.0
  %438 = vmatprep.subr.mxu0 0.0
  %439 = vmatpush1.msra.mxu0 0.0
  %440 = vmatprep.subr.mxu0 0.0
  %441 = vmatpush1.msra.mxu0 0.0
  %442 = vmatprep.subr.mxu0 0.0
  %443 = vmatpush1.msra.mxu0 0.0
  %444 = vmatprep.subr.mxu0 0.0
  %445 = vmatpush1.msra.mxu0 0.0
  %446 = vmatprep.mubr.f32.mxu0 0.0
  %447 = vmatmul.mubr.f32.gmra.mrb[0].mxu0 %v33
  %v448 = vpop.f32.mrb[0].mxu0
  %v449 = vadd.f32 0.0, %v448
  %v450 = vpop.f32.mrb[0].mxu0
  %451 = vmatprep.mubr.f32.mxu0 0.0
  %452 = vmatmul.mubr.f32.gmra.mrb[0].mxu0 %v34
  %v453 = vpop.f32.mrb[0].mxu0
  %v454 = vadd.f32 0.0, %v453
  %v455 = vpop.f32.mrb[0].mxu0
  %456 = vdwg.mxu0
  %v457 = vadd.f32 %v364, %v449
  %v458 = vadd.f32 %v365, %v454
  %v459 = vxor.u32 %v457, 2147483648
  %v460 = vxor.u32 %v458, 2147483648
  %v461 = vmul.f32 %v459, 1.442695
  %v462 = vpow.pop %v461
  %v463 = vmul.f32 %v460, 1.442695
  %v464 = vpow.pop %v463
  %v465 = vadd.f32 %v462, 1.0
  %v466 = vadd.f32 %v464, 1.0
  %v467 = vrcp.pop %v465
  %v468 = vmul.f32 1.0, %v467
  %v469 = vrcp.pop %v466
  %v470 = vmul.f32 1.0, %v469
  %v471 = vtanh.pop %v360
  %v472 = vtanh.pop %v361
  %v473 = vmul.f32 %v468, %v471
  %v474 = vmul.f32 %v470, %v472
  %v475 = vstv %s32
  %vm476 = vcmp.lt.s32.totalorder %v475, %v30
  %vm477 = vcmp.lt.s32.totalorder %v475, %v31
  %v478 = vsel %vm476, 1, 0
  %v479 = vsel %vm477, 1, 0
  %480 = vset.pattern.permute.xlu0 0
  %481 = vperm.xlu0 %480, %v478
  %v482 = vpop.permute.xlu0 %481
  %483 = vset.pattern.permute.xlu0 0
  %484 = vperm.xlu0 %483, %v479
  %v485 = vpop.permute.xlu0 %484
  %vm486 = vcmp.eq.s32.totalorder %v482, 1
  %vm487 = vcmp.eq.s32.totalorder %v485, 1
  %v488 = vsel %vm486, %v473, 0.0
  %v489 = vsel %vm487, %v474, 0.0
  %v490 = vadd.f32 %v37, %v488
  %v491 = vadd.f32 %v38, %v489
  %s492 = scalar_lea.vmem %s0, 32
  %v493 = vld [vmem:[%s492] sm:$0xf]
  %v494 = vld [vmem:[%s492 + $0x10] sm:$0xf]
  %v495 = vunpack.c.l.bf16 %v493
  %v496 = vunpack.c.l.bf16 %v494
  %497 = vmatprep.subr.mxu0 0.0
  %498 = vmatpush1.msra.mxu0 %v43
  %499 = vmatprep.subr.mxu0 0.0
  %500 = vmatpush1.msra.mxu0 %v44
  %501 = vmatprep.subr.mxu0 0.0
  %502 = vmatpush1.msra.mxu0 %v45
  %503 = vmatprep.subr.mxu0 0.0
  %504 = vmatpush1.msra.mxu0 %v46
  %505 = vmatprep.subr.mxu0 0.0
  %506 = vmatpush1.msra.mxu0 %v47
  %507 = vmatprep.subr.mxu0 0.0
  %508 = vmatpush1.msra.mxu0 %v48
  %509 = vmatprep.subr.mxu0 0.0
  %510 = vmatpush1.msra.mxu0 %v49
  %511 = vmatprep.subr.mxu0 0.0
  %512 = vmatpush1.msra.mxu0 %v50
  %513 = vmatprep.subr.mxu0 0.0
  %514 = vmatpush1.msra.mxu0 %v51
  %515 = vmatprep.subr.mxu0 0.0
  %516 = vmatpush1.msra.mxu0 %v52
  %517 = vmatprep.subr.mxu0 0.0
  %518 = vmatpush1.msra.mxu0 %v53
  %519 = vmatprep.subr.mxu0 0.0
  %520 = vmatpush1.msra.mxu0 %v54
  %521 = vmatprep.subr.mxu0 0.0
  %522 = vmatpush1.msra.mxu0 %v55
  %523 = vmatprep.subr.mxu0 0.0
  %524 = vmatpush1.msra.mxu0 %v56
  %525 = vmatprep.subr.mxu0 0.0
  %526 = vmatpush1.msra.mxu0 %v57
  %527 = vmatprep.subr.mxu0 0.0
  %528 = vmatpush1.msra.mxu0 %v58
  %529 = vmatprep.subr.mxu0 0.0
  %530 = vmatpush1.msra.mxu0 0.0
  %531 = vmatprep.subr.mxu0 0.0
  %532 = vmatpush1.msra.mxu0 0.0
  %533 = vmatprep.subr.mxu0 0.0
  %534 = vmatpush1.msra.mxu0 0.0
  %535 = vmatprep.subr.mxu0 0.0
  %536 = vmatpush1.msra.mxu0 0.0
  %537 = vmatprep.subr.mxu0 0.0
  %538 = vmatpush1.msra.mxu0 0.0
  %539 = vmatprep.subr.mxu0 0.0
  %540 = vmatpush1.msra.mxu0 0.0
  %541 = vmatprep.subr.mxu0 0.0
  %542 = vmatpush1.msra.mxu0 0.0
  %543 = vmatprep.subr.mxu0 0.0
  %544 = vmatpush1.msra.mxu0 0.0
  %545 = vmatprep.subr.mxu0 0.0
  %546 = vmatpush1.msra.mxu0 0.0
  %547 = vmatprep.subr.mxu0 0.0
  %548 = vmatpush1.msra.mxu0 0.0
  %549 = vmatprep.subr.mxu0 0.0
  %550 = vmatpush1.msra.mxu0 0.0
  %551 = vmatprep.subr.mxu0 0.0
  %552 = vmatpush1.msra.mxu0 0.0
  %553 = vmatprep.subr.mxu0 0.0
  %554 = vmatpush1.msra.mxu0 0.0
  %555 = vmatprep.subr.mxu0 0.0
  %556 = vmatpush1.msra.mxu0 0.0
  %557 = vmatprep.subr.mxu0 0.0
  %558 = vmatpush1.msra.mxu0 0.0
  %559 = vmatprep.subr.mxu0 0.0
  %560 = vmatpush1.msra.mxu0 0.0
  %561 = vmatprep.mubr.f32.mxu0 0.0
  %562 = vmatmul.mubr.f32.gmra.mrb[0].mxu0 %v473
  %v563 = vpop.f32.mrb[0].mxu0
  %v564 = vadd.f32 0.0, %v563
  %v565 = vpop.f32.mrb[0].mxu0
  %566 = vmatprep.mubr.f32.mxu0 0.0
  %567 = vmatmul.mubr.f32.gmra.mrb[0].mxu0 %v474
  %v568 = vpop.f32.mrb[0].mxu0
  %v569 = vadd.f32 0.0, %v568
  %v570 = vpop.f32.mrb[0].mxu0
  %571 = vdwg.mxu0
  %v572 = vadd.f32 %v495, %v564
  %v573 = vadd.f32 %v496, %v569
  %v574 = vxor.u32 %v572, 2147483648
  %v575 = vxor.u32 %v573, 2147483648
  %v576 = vmul.f32 %v574, 1.442695
  %v577 = vpow.pop %v576
  %v578 = vmul.f32 %v575, 1.442695
  %v579 = vpow.pop %v578
  %v580 = vadd.f32 %v577, 1.0
  %v581 = vadd.f32 %v579, 1.0
  %v582 = vrcp.pop %v580
  %v583 = vmul.f32 1.0, %v582
  %v584 = vrcp.pop %v581
  %v585 = vmul.f32 1.0, %v584
  %v586 = vld [vmem:[%s492 + $0x8] sm:$0xf]
  %v587 = vld [vmem:[%s492 + $0x18] sm:$0xf]
  %v588 = vunpack.c.l.bf16 %v586
  %v589 = vunpack.c.l.bf16 %v587
  %590 = vmatprep.subr.mxu0 0.0
  %591 = vmatpush1.msra.mxu0 %v152
  %592 = vmatprep.subr.mxu0 0.0
  %593 = vmatpush1.msra.mxu0 %v153
  %594 = vmatprep.subr.mxu0 0.0
  %595 = vmatpush1.msra.mxu0 %v154
  %596 = vmatprep.subr.mxu0 0.0
  %597 = vmatpush1.msra.mxu0 %v155
  %598 = vmatprep.subr.mxu0 0.0
  %599 = vmatpush1.msra.mxu0 %v156
  %600 = vmatprep.subr.mxu0 0.0
  %601 = vmatpush1.msra.mxu0 %v157
  %602 = vmatprep.subr.mxu0 0.0
  %603 = vmatpush1.msra.mxu0 %v158
  %604 = vmatprep.subr.mxu0 0.0
  %605 = vmatpush1.msra.mxu0 %v159
  %606 = vmatprep.subr.mxu0 0.0
  %607 = vmatpush1.msra.mxu0 %v160
  %608 = vmatprep.subr.mxu0 0.0
  %609 = vmatpush1.msra.mxu0 %v161
  %610 = vmatprep.subr.mxu0 0.0
  %611 = vmatpush1.msra.mxu0 %v162
  %612 = vmatprep.subr.mxu0 0.0
  %613 = vmatpush1.msra.mxu0 %v163
  %614 = vmatprep.subr.mxu0 0.0
  %615 = vmatpush1.msra.mxu0 %v164
  %616 = vmatprep.subr.mxu0 0.0
  %617 = vmatpush1.msra.mxu0 %v165
  %618 = vmatprep.subr.mxu0 0.0
  %619 = vmatpush1.msra.mxu0 %v166
  %620 = vmatprep.subr.mxu0 0.0
  %621 = vmatpush1.msra.mxu0 %v167
  %622 = vmatprep.subr.mxu0 0.0
  %623 = vmatpush1.msra.mxu0 0.0
  %624 = vmatprep.subr.mxu0 0.0
  %625 = vmatpush1.msra.mxu0 0.0
  %626 = vmatprep.subr.mxu0 0.0
  %627 = vmatpush1.msra.mxu0 0.0
  %628 = vmatprep.subr.mxu0 0.0
  %629 = vmatpush1.msra.mxu0 0.0
  %630 = vmatprep.subr.mxu0 0.0
  %631 = vmatpush1.msra.mxu0 0.0
  %632 = vmatprep.subr.mxu0 0.0
  %633 = vmatpush1.msra.mxu0 0.0
  %634 = vmatprep.subr.mxu0 0.0
  %635 = vmatpush1.msra.mxu0 0.0
  %636 = vmatprep.subr.mxu0 0.0
  %637 = vmatpush1.msra.mxu0 0.0
  %638 = vmatprep.subr.mxu0 0.0
  %639 = vmatpush1.msra.mxu0 0.0
  %640 = vmatprep.subr.mxu0 0.0
  %641 = vmatpush1.msra.mxu0 0.0
  %642 = vmatprep.subr.mxu0 0.0
  %643 = vmatpush1.msra.mxu0 0.0
  %644 = vmatprep.subr.mxu0 0.0
  %645 = vmatpush1.msra.mxu0 0.0
  %646 = vmatprep.subr.mxu0 0.0
  %647 = vmatpush1.msra.mxu0 0.0
  %648 = vmatprep.subr.mxu0 0.0
  %649 = vmatpush1.msra.mxu0 0.0
  %650 = vmatprep.subr.mxu0 0.0
  %651 = vmatpush1.msra.mxu0 0.0
  %652 = vmatprep.subr.mxu0 0.0
  %653 = vmatpush1.msra.mxu0 0.0
  %654 = vmatprep.mubr.f32.mxu0 0.0
  %655 = vmatmul.mubr.f32.gmra.mrb[0].mxu0 %v473
  %v656 = vpop.f32.mrb[0].mxu0
  %v657 = vadd.f32 0.0, %v656
  %v658 = vpop.f32.mrb[0].mxu0
  %659 = vmatprep.mubr.f32.mxu0 0.0
  %660 = vmatmul.mubr.f32.gmra.mrb[0].mxu0 %v474
  %v661 = vpop.f32.mrb[0].mxu0
  %v662 = vadd.f32 0.0, %v661
  %v663 = vpop.f32.mrb[0].mxu0
  %664 = vdwg.mxu0
  %v665 = vadd.f32 %v588, %v657
  %v666 = vadd.f32 %v589, %v662
  %v667 = vtanh.pop %v665
  %v668 = vtanh.pop %v666
  %v669 = vmul.f32 %v583, %v667
  %v670 = vmul.f32 %v585, %v668
  %v671 = vld [vmem:[%s492 + $0x4] sm:$0xf]
  %v672 = vld [vmem:[%s492 + $0x14] sm:$0xf]
  %v673 = vunpack.c.l.bf16 %v671
  %v674 = vunpack.c.l.bf16 %v672
  %675 = vmatprep.subr.mxu0 0.0
  %676 = vmatpush1.msra.mxu0 %v253
  %677 = vmatprep.subr.mxu0 0.0
  %678 = vmatpush1.msra.mxu0 %v254
  %679 = vmatprep.subr.mxu0 0.0
  %680 = vmatpush1.msra.mxu0 %v255
  %681 = vmatprep.subr.mxu0 0.0
  %682 = vmatpush1.msra.mxu0 %v256
  %683 = vmatprep.subr.mxu0 0.0
  %684 = vmatpush1.msra.mxu0 %v257
  %685 = vmatprep.subr.mxu0 0.0
  %686 = vmatpush1.msra.mxu0 %v258
  %687 = vmatprep.subr.mxu0 0.0
  %688 = vmatpush1.msra.mxu0 %v259
  %689 = vmatprep.subr.mxu0 0.0
  %690 = vmatpush1.msra.mxu0 %v260
  %691 = vmatprep.subr.mxu0 0.0
  %692 = vmatpush1.msra.mxu0 %v261
  %693 = vmatprep.subr.mxu0 0.0
  %694 = vmatpush1.msra.mxu0 %v262
  %695 = vmatprep.subr.mxu0 0.0
  %696 = vmatpush1.msra.mxu0 %v263
  %697 = vmatprep.subr.mxu0 0.0
  %698 = vmatpush1.msra.mxu0 %v264
  %699 = vmatprep.subr.mxu0 0.0
  %700 = vmatpush1.msra.mxu0 %v265
  %701 = vmatprep.subr.mxu0 0.0
  %702 = vmatpush1.msra.mxu0 %v266
  %703 = vmatprep.subr.mxu0 0.0
  %704 = vmatpush1.msra.mxu0 %v267
  %705 = vmatprep.subr.mxu0 0.0
  %706 = vmatpush1.msra.mxu0 %v268
  %707 = vmatprep.subr.mxu0 0.0
  %708 = vmatpush1.msra.mxu0 0.0
  %709 = vmatprep.subr.mxu0 0.0
  %710 = vmatpush1.msra.mxu0 0.0
  %711 = vmatprep.subr.mxu0 0.0
  %712 = vmatpush1.msra.mxu0 0.0
  %713 = vmatprep.subr.mxu0 0.0
  %714 = vmatpush1.msra.mxu0 0.0
  %715 = vmatprep.subr.mxu0 0.0
  %716 = vmatpush1.msra.mxu0 0.0
  %717 = vmatprep.subr.mxu0 0.0
  %718 = vmatpush1.msra.mxu0 0.0
  %719 = vmatprep.subr.mxu0 0.0
  %720 = vmatpush1.msra.mxu0 0.0
  %721 = vmatprep.subr.mxu0 0.0
  %722 = vmatpush1.msra.mxu0 0.0
  %723 = vmatprep.subr.mxu0 0.0
  %724 = vmatpush1.msra.mxu0 0.0
  %725 = vmatprep.subr.mxu0 0.0
  %726 = vmatpush1.msra.mxu0 0.0
  %727 = vmatprep.subr.mxu0 0.0
  %728 = vmatpush1.msra.mxu0 0.0
  %729 = vmatprep.subr.mxu0 0.0
  %730 = vmatpush1.msra.mxu0 0.0
  %731 = vmatprep.subr.mxu0 0.0
  %732 = vmatpush1.msra.mxu0 0.0
  %733 = vmatprep.subr.mxu0 0.0
  %734 = vmatpush1.msra.mxu0 0.0
  %735 = vmatprep.subr.mxu0 0.0
  %736 = vmatpush1.msra.mxu0 0.0
  %737 = vmatprep.subr.mxu0 0.0
  %738 = vmatpush1.msra.mxu0 0.0
  %739 = vmatprep.mubr.f32.mxu0 0.0
  %740 = vmatmul.mubr.f32.gmra.mrb[0].mxu0 %v473
  %v741 = vpop.f32.mrb[0].mxu0
  %v742 = vadd.f32 0.0, %v741
  %v743 = vpop.f32.mrb[0].mxu0
  %744 = vmatprep.mubr.f32.mxu0 0.0
  %745 = vmatmul.mubr.f32.gmra.mrb[0].mxu0 %v474
  %v746 = vpop.f32.mrb[0].mxu0
  %v747 = vadd.f32 0.0, %v746
  %v748 = vpop.f32.mrb[0].mxu0
  %749 = vdwg.mxu0
  %v750 = vadd.f32 %v673, %v742
  %v751 = vadd.f32 %v674, %v747
  %v752 = vxor.u32 %v750, 2147483648
  %v753 = vxor.u32 %v751, 2147483648
  %v754 = vmul.f32 %v752, 1.442695
  %v755 = vpow.pop %v754
  %v756 = vmul.f32 %v753, 1.442695
  %v757 = vpow.pop %v756
  %v758 = vadd.f32 %v755, 1.0
  %v759 = vadd.f32 %v757, 1.0
  %v760 = vrcp.pop %v758
  %v761 = vmul.f32 1.0, %v760
  %v762 = vrcp.pop %v759
  %v763 = vmul.f32 1.0, %v762
  %v764 = vmul.f32 %v761, %v360
  %v765 = vmul.f32 %v763, %v361
  %v766 = vadd.f32 %v764, %v669
  %v767 = vadd.f32 %v765, %v670
  %v768 = vld [vmem:[%s492 + $0xc] sm:$0xf]
  %v769 = vld [vmem:[%s492 + $0x1c] sm:$0xf]
  %v770 = vunpack.c.l.bf16 %v768
  %v771 = vunpack.c.l.bf16 %v769
  %772 = vmatprep.subr.mxu0 0.0
  %773 = vmatpush1.msra.mxu0 %v366
  %774 = vmatprep.subr.mxu0 0.0
  %775 = vmatpush1.msra.mxu0 %v367
  %776 = vmatprep.subr.mxu0 0.0
  %777 = vmatpush1.msra.mxu0 %v368
  %778 = vmatprep.subr.mxu0 0.0
  %779 = vmatpush1.msra.mxu0 %v369
  %780 = vmatprep.subr.mxu0 0.0
  %781 = vmatpush1.msra.mxu0 %v370
  %782 = vmatprep.subr.mxu0 0.0
  %783 = vmatpush1.msra.mxu0 %v371
  %784 = vmatprep.subr.mxu0 0.0
  %785 = vmatpush1.msra.mxu0 %v372
  %786 = vmatprep.subr.mxu0 0.0
  %787 = vmatpush1.msra.mxu0 %v373
  %788 = vmatprep.subr.mxu0 0.0
  %789 = vmatpush1.msra.mxu0 %v374
  %790 = vmatprep.subr.mxu0 0.0
  %791 = vmatpush1.msra.mxu0 %v375
  %792 = vmatprep.subr.mxu0 0.0
  %793 = vmatpush1.msra.mxu0 %v376
  %794 = vmatprep.subr.mxu0 0.0
  %795 = vmatpush1.msra.mxu0 %v377
  %796 = vmatprep.subr.mxu0 0.0
  %797 = vmatpush1.msra.mxu0 %v378
  %798 = vmatprep.subr.mxu0 0.0
  %799 = vmatpush1.msra.mxu0 %v379
  %800 = vmatprep.subr.mxu0 0.0
  %801 = vmatpush1.msra.mxu0 %v380
  %802 = vmatprep.subr.mxu0 0.0
  %803 = vmatpush1.msra.mxu0 %v381
  %804 = vmatprep.subr.mxu0 0.0
  %805 = vmatpush1.msra.mxu0 0.0
  %806 = vmatprep.subr.mxu0 0.0
  %807 = vmatpush1.msra.mxu0 0.0
  %808 = vmatprep.subr.mxu0 0.0
  %809 = vmatpush1.msra.mxu0 0.0
  %810 = vmatprep.subr.mxu0 0.0
  %811 = vmatpush1.msra.mxu0 0.0
  %812 = vmatprep.subr.mxu0 0.0
  %813 = vmatpush1.msra.mxu0 0.0
  %814 = vmatprep.subr.mxu0 0.0
  %815 = vmatpush1.msra.mxu0 0.0
  %816 = vmatprep.subr.mxu0 0.0
  %817 = vmatpush1.msra.mxu0 0.0
  %818 = vmatprep.subr.mxu0 0.0
  %819 = vmatpush1.msra.mxu0 0.0
  %820 = vmatprep.subr.mxu0 0.0
  %821 = vmatpush1.msra.mxu0 0.0
  %822 = vmatprep.subr.mxu0 0.0
  %823 = vmatpush1.msra.mxu0 0.0
  %824 = vmatprep.subr.mxu0 0.0
  %825 = vmatpush1.msra.mxu0 0.0
  %826 = vmatprep.subr.mxu0 0.0
  %827 = vmatpush1.msra.mxu0 0.0
  %828 = vmatprep.subr.mxu0 0.0
  %829 = vmatpush1.msra.mxu0 0.0
  %830 = vmatprep.subr.mxu0 0.0
  %831 = vmatpush1.msra.mxu0 0.0
  %832 = vmatprep.subr.mxu0 0.0
  %833 = vmatpush1.msra.mxu0 0.0
  %834 = vmatprep.subr.mxu0 0.0
  %835 = vmatpush1.msra.mxu0 0.0
  %836 = vmatprep.mubr.f32.mxu0 0.0
  %837 = vmatmul.mubr.f32.gmra.mrb[0].mxu0 %v473
  %v838 = vpop.f32.mrb[0].mxu0
  %v839 = vadd.f32 0.0, %v838
  %v840 = vpop.f32.mrb[0].mxu0
  %841 = vmatprep.mubr.f32.mxu0 0.0
  %842 = vmatmul.mubr.f32.gmra.mrb[0].mxu0 %v474
  %v843 = vpop.f32.mrb[0].mxu0
  %v844 = vadd.f32 0.0, %v843
  %v845 = vpop.f32.mrb[0].mxu0
  %846 = vdwg.mxu0
  %v847 = vadd.f32 %v770, %v839
  %v848 = vadd.f32 %v771, %v844
  %v849 = vxor.u32 %v847, 2147483648
  %v850 = vxor.u32 %v848, 2147483648
  %v851 = vmul.f32 %v849, 1.442695
  %v852 = vpow.pop %v851
  %v853 = vmul.f32 %v850, 1.442695
  %v854 = vpow.pop %v853
  %v855 = vadd.f32 %v852, 1.0
  %v856 = vadd.f32 %v854, 1.0
  %v857 = vrcp.pop %v855
  %v858 = vmul.f32 1.0, %v857
  %v859 = vrcp.pop %v856
  %v860 = vmul.f32 1.0, %v859
  %v861 = vtanh.pop %v766
  %v862 = vtanh.pop %v767
  %v863 = vmul.f32 %v858, %v861
  %v864 = vmul.f32 %v860, %v862
  %s865 = sadd.s32 %s32, 1
  %v866 = vstv %s865
  %vm867 = vcmp.lt.s32.totalorder %v866, %v30
  %vm868 = vcmp.lt.s32.totalorder %v866, %v31
  %v869 = vsel %vm867, 1, 0
  %v870 = vsel %vm868, 1, 0
  %871 = vset.pattern.permute.xlu0 0
  %872 = vperm.xlu0 %871, %v869
  %v873 = vpop.permute.xlu0 %872
  %874 = vset.pattern.permute.xlu0 0
  %875 = vperm.xlu0 %874, %v870
  %v876 = vpop.permute.xlu0 %875
  %vm877 = vcmp.eq.s32.totalorder %v873, 1
  %vm878 = vcmp.eq.s32.totalorder %v876, 1
  %v879 = vsel %vm877, %v863, 0.0
  %v880 = vsel %vm878, %v864, 0.0
  %v881 = vadd.f32 %v490, %v879
  %v882 = vadd.f32 %v491, %v880
  %s883 = scalar_lea.vmem %s0, 64
  %v884 = vld [vmem:[%s883] sm:$0xf]
  %v885 = vld [vmem:[%s883 + $0x10] sm:$0xf]
  %v886 = vunpack.c.l.bf16 %v884
  %v887 = vunpack.c.l.bf16 %v885
  %888 = vmatprep.subr.mxu0 0.0
  %889 = vmatpush1.msra.mxu0 %v43
  %890 = vmatprep.subr.mxu0 0.0
  %891 = vmatpush1.msra.mxu0 %v44
  %892 = vmatprep.subr.mxu0 0.0
  %893 = vmatpush1.msra.mxu0 %v45
  %894 = vmatprep.subr.mxu0 0.0
  %895 = vmatpush1.msra.mxu0 %v46
  %896 = vmatprep.subr.mxu0 0.0
  %897 = vmatpush1.msra.mxu0 %v47
  %898 = vmatprep.subr.mxu0 0.0
  %899 = vmatpush1.msra.mxu0 %v48
  %900 = vmatprep.subr.mxu0 0.0
  %901 = vmatpush1.msra.mxu0 %v49
  %902 = vmatprep.subr.mxu0 0.0
  %903 = vmatpush1.msra.mxu0 %v50
  %904 = vmatprep.subr.mxu0 0.0
  %905 = vmatpush1.msra.mxu0 %v51
  %906 = vmatprep.subr.mxu0 0.0
  %907 = vmatpush1.msra.mxu0 %v52
  %908 = vmatprep.subr.mxu0 0.0
  %909 = vmatpush1.msra.mxu0 %v53
  %910 = vmatprep.subr.mxu0 0.0
  %911 = vmatpush1.msra.mxu0 %v54
  %912 = vmatprep.subr.mxu0 0.0
  %913 = vmatpush1.msra.mxu0 %v55
  %914 = vmatprep.subr.mxu0 0.0
  %915 = vmatpush1.msra.mxu0 %v56
  %916 = vmatprep.subr.mxu0 0.0
  %917 = vmatpush1.msra.mxu0 %v57
  %918 = vmatprep.subr.mxu0 0.0
  %919 = vmatpush1.msra.mxu0 %v58
  %920 = vmatprep.subr.mxu0 0.0
  %921 = vmatpush1.msra.mxu0 0.0
  %922 = vmatprep.subr.mxu0 0.0
  %923 = vmatpush1.msra.mxu0 0.0
  %924 = vmatprep.subr.mxu0 0.0
  %925 = vmatpush1.msra.mxu0 0.0
  %926 = vmatprep.subr.mxu0 0.0
  %927 = vmatpush1.msra.mxu0 0.0
  %928 = vmatprep.subr.mxu0 0.0
  %929 = vmatpush1.msra.mxu0 0.0
  %930 = vmatprep.subr.mxu0 0.0
  %931 = vmatpush1.msra.mxu0 0.0
  %932 = vmatprep.subr.mxu0 0.0
  %933 = vmatpush1.msra.mxu0 0.0
  %934 = vmatprep.subr.mxu0 0.0
  %935 = vmatpush1.msra.mxu0 0.0
  %936 = vmatprep.subr.mxu0 0.0
  %937 = vmatpush1.msra.mxu0 0.0
  %938 = vmatprep.subr.mxu0 0.0
  %939 = vmatpush1.msra.mxu0 0.0
  %940 = vmatprep.subr.mxu0 0.0
  %941 = vmatpush1.msra.mxu0 0.0
  %942 = vmatprep.subr.mxu0 0.0
  %943 = vmatpush1.msra.mxu0 0.0
  %944 = vmatprep.subr.mxu0 0.0
  %945 = vmatpush1.msra.mxu0 0.0
  %946 = vmatprep.subr.mxu0 0.0
  %947 = vmatpush1.msra.mxu0 0.0
  %948 = vmatprep.subr.mxu0 0.0
  %949 = vmatpush1.msra.mxu0 0.0
  %950 = vmatprep.subr.mxu0 0.0
  %951 = vmatpush1.msra.mxu0 0.0
  %952 = vmatprep.mubr.f32.mxu0 0.0
  %953 = vmatmul.mubr.f32.gmra.mrb[0].mxu0 %v863
  %v954 = vpop.f32.mrb[0].mxu0
  %v955 = vadd.f32 0.0, %v954
  %v956 = vpop.f32.mrb[0].mxu0
  %957 = vmatprep.mubr.f32.mxu0 0.0
  %958 = vmatmul.mubr.f32.gmra.mrb[0].mxu0 %v864
  %v959 = vpop.f32.mrb[0].mxu0
  %v960 = vadd.f32 0.0, %v959
  %v961 = vpop.f32.mrb[0].mxu0
  %962 = vdwg.mxu0
  %v963 = vadd.f32 %v886, %v955
  %v964 = vadd.f32 %v887, %v960
  %v965 = vxor.u32 %v963, 2147483648
  %v966 = vxor.u32 %v964, 2147483648
  %v967 = vmul.f32 %v965, 1.442695
  %v968 = vpow.pop %v967
  %v969 = vmul.f32 %v966, 1.442695
  %v970 = vpow.pop %v969
  %v971 = vadd.f32 %v968, 1.0
  %v972 = vadd.f32 %v970, 1.0
  %v973 = vrcp.pop %v971
  %v974 = vmul.f32 1.0, %v973
  %v975 = vrcp.pop %v972
  %v976 = vmul.f32 1.0, %v975
  %v977 = vld [vmem:[%s883 + $0x8] sm:$0xf]
  %v978 = vld [vmem:[%s883 + $0x18] sm:$0xf]
  %v979 = vunpack.c.l.bf16 %v977
  %v980 = vunpack.c.l.bf16 %v978
  %981 = vmatprep.subr.mxu0 0.0
  %982 = vmatpush1.msra.mxu0 %v152
  %983 = vmatprep.subr.mxu0 0.0
  %984 = vmatpush1.msra.mxu0 %v153
  %985 = vmatprep.subr.mxu0 0.0
  %986 = vmatpush1.msra.mxu0 %v154
  %987 = vmatprep.subr.mxu0 0.0
  %988 = vmatpush1.msra.mxu0 %v155
  %989 = vmatprep.subr.mxu0 0.0
  %990 = vmatpush1.msra.mxu0 %v156
  %991 = vmatprep.subr.mxu0 0.0
  %992 = vmatpush1.msra.mxu0 %v157
  %993 = vmatprep.subr.mxu0 0.0
  %994 = vmatpush1.msra.mxu0 %v158
  %995 = vmatprep.subr.mxu0 0.0
  %996 = vmatpush1.msra.mxu0 %v159
  %997 = vmatprep.subr.mxu0 0.0
  %998 = vmatpush1.msra.mxu0 %v160
  %999 = vmatprep.subr.mxu0 0.0
  %1000 = vmatpush1.msra.mxu0 %v161
  %1001 = vmatprep.subr.mxu0 0.0
  %1002 = vmatpush1.msra.mxu0 %v162
  %1003 = vmatprep.subr.mxu0 0.0
  %1004 = vmatpush1.msra.mxu0 %v163
  %1005 = vmatprep.subr.mxu0 0.0
  %1006 = vmatpush1.msra.mxu0 %v164
  %1007 = vmatprep.subr.mxu0 0.0
  %1008 = vmatpush1.msra.mxu0 %v165
  %1009 = vmatprep.subr.mxu0 0.0
  %1010 = vmatpush1.msra.mxu0 %v166
  %1011 = vmatprep.subr.mxu0 0.0
  %1012 = vmatpush1.msra.mxu0 %v167
  %1013 = vmatprep.subr.mxu0 0.0
  %1014 = vmatpush1.msra.mxu0 0.0
  %1015 = vmatprep.subr.mxu0 0.0
  %1016 = vmatpush1.msra.mxu0 0.0
  %1017 = vmatprep.subr.mxu0 0.0
  %1018 = vmatpush1.msra.mxu0 0.0
  %1019 = vmatprep.subr.mxu0 0.0
  %1020 = vmatpush1.msra.mxu0 0.0
  %1021 = vmatprep.subr.mxu0 0.0
  %1022 = vmatpush1.msra.mxu0 0.0
  %1023 = vmatprep.subr.mxu0 0.0
  %1024 = vmatpush1.msra.mxu0 0.0
  %1025 = vmatprep.subr.mxu0 0.0
  %1026 = vmatpush1.msra.mxu0 0.0
  %1027 = vmatprep.subr.mxu0 0.0
  %1028 = vmatpush1.msra.mxu0 0.0
  %1029 = vmatprep.subr.mxu0 0.0
  %1030 = vmatpush1.msra.mxu0 0.0
  %1031 = vmatprep.subr.mxu0 0.0
  %1032 = vmatpush1.msra.mxu0 0.0
  %1033 = vmatprep.subr.mxu0 0.0
  %1034 = vmatpush1.msra.mxu0 0.0
  %1035 = vmatprep.subr.mxu0 0.0
  %1036 = vmatpush1.msra.mxu0 0.0
  %1037 = vmatprep.subr.mxu0 0.0
  %1038 = vmatpush1.msra.mxu0 0.0
  %1039 = vmatprep.subr.mxu0 0.0
  %1040 = vmatpush1.msra.mxu0 0.0
  %1041 = vmatprep.subr.mxu0 0.0
  %1042 = vmatpush1.msra.mxu0 0.0
  %1043 = vmatprep.subr.mxu0 0.0
  %1044 = vmatpush1.msra.mxu0 0.0
  %1045 = vmatprep.mubr.f32.mxu0 0.0
  %1046 = vmatmul.mubr.f32.gmra.mrb[0].mxu0 %v863
  %v1047 = vpop.f32.mrb[0].mxu0
  %v1048 = vadd.f32 0.0, %v1047
  %v1049 = vpop.f32.mrb[0].mxu0
  %1050 = vmatprep.mubr.f32.mxu0 0.0
  %1051 = vmatmul.mubr.f32.gmra.mrb[0].mxu0 %v864
  %v1052 = vpop.f32.mrb[0].mxu0
  %v1053 = vadd.f32 0.0, %v1052
  %v1054 = vpop.f32.mrb[0].mxu0
  %1055 = vdwg.mxu0
  %v1056 = vadd.f32 %v979, %v1048
  %v1057 = vadd.f32 %v980, %v1053
  %v1058 = vtanh.pop %v1056
  %v1059 = vtanh.pop %v1057
  %v1060 = vmul.f32 %v974, %v1058
  %v1061 = vmul.f32 %v976, %v1059
  %v1062 = vld [vmem:[%s883 + $0x4] sm:$0xf]
  %v1063 = vld [vmem:[%s883 + $0x14] sm:$0xf]
  %v1064 = vunpack.c.l.bf16 %v1062
  %v1065 = vunpack.c.l.bf16 %v1063
  %1066 = vmatprep.subr.mxu0 0.0
  %1067 = vmatpush1.msra.mxu0 %v253
  %1068 = vmatprep.subr.mxu0 0.0
  %1069 = vmatpush1.msra.mxu0 %v254
  %1070 = vmatprep.subr.mxu0 0.0
  %1071 = vmatpush1.msra.mxu0 %v255
  %1072 = vmatprep.subr.mxu0 0.0
  %1073 = vmatpush1.msra.mxu0 %v256
  %1074 = vmatprep.subr.mxu0 0.0
  %1075 = vmatpush1.msra.mxu0 %v257
  %1076 = vmatprep.subr.mxu0 0.0
  %1077 = vmatpush1.msra.mxu0 %v258
  %1078 = vmatprep.subr.mxu0 0.0
  %1079 = vmatpush1.msra.mxu0 %v259
  %1080 = vmatprep.subr.mxu0 0.0
  %1081 = vmatpush1.msra.mxu0 %v260
  %1082 = vmatprep.subr.mxu0 0.0
  %1083 = vmatpush1.msra.mxu0 %v261
  %1084 = vmatprep.subr.mxu0 0.0
  %1085 = vmatpush1.msra.mxu0 %v262
  %1086 = vmatprep.subr.mxu0 0.0
  %1087 = vmatpush1.msra.mxu0 %v263
  %1088 = vmatprep.subr.mxu0 0.0
  %1089 = vmatpush1.msra.mxu0 %v264
  %1090 = vmatprep.subr.mxu0 0.0
  %1091 = vmatpush1.msra.mxu0 %v265
  %1092 = vmatprep.subr.mxu0 0.0
  %1093 = vmatpush1.msra.mxu0 %v266
  %1094 = vmatprep.subr.mxu0 0.0
  %1095 = vmatpush1.msra.mxu0 %v267
  %1096 = vmatprep.subr.mxu0 0.0
  %1097 = vmatpush1.msra.mxu0 %v268
  %1098 = vmatprep.subr.mxu0 0.0
  %1099 = vmatpush1.msra.mxu0 0.0
  %1100 = vmatprep.subr.mxu0 0.0
  %1101 = vmatpush1.msra.mxu0 0.0
  %1102 = vmatprep.subr.mxu0 0.0
  %1103 = vmatpush1.msra.mxu0 0.0
  %1104 = vmatprep.subr.mxu0 0.0
  %1105 = vmatpush1.msra.mxu0 0.0
  %1106 = vmatprep.subr.mxu0 0.0
  %1107 = vmatpush1.msra.mxu0 0.0
  %1108 = vmatprep.subr.mxu0 0.0
  %1109 = vmatpush1.msra.mxu0 0.0
  %1110 = vmatprep.subr.mxu0 0.0
  %1111 = vmatpush1.msra.mxu0 0.0
  %1112 = vmatprep.subr.mxu0 0.0
  %1113 = vmatpush1.msra.mxu0 0.0
  %1114 = vmatprep.subr.mxu0 0.0
  %1115 = vmatpush1.msra.mxu0 0.0
  %1116 = vmatprep.subr.mxu0 0.0
  %1117 = vmatpush1.msra.mxu0 0.0
  %1118 = vmatprep.subr.mxu0 0.0
  %1119 = vmatpush1.msra.mxu0 0.0
  %1120 = vmatprep.subr.mxu0 0.0
  %1121 = vmatpush1.msra.mxu0 0.0
  %1122 = vmatprep.subr.mxu0 0.0
  %1123 = vmatpush1.msra.mxu0 0.0
  %1124 = vmatprep.subr.mxu0 0.0
  %1125 = vmatpush1.msra.mxu0 0.0
  %1126 = vmatprep.subr.mxu0 0.0
  %1127 = vmatpush1.msra.mxu0 0.0
  %1128 = vmatprep.subr.mxu0 0.0
  %1129 = vmatpush1.msra.mxu0 0.0
  %1130 = vmatprep.mubr.f32.mxu0 0.0
  %1131 = vmatmul.mubr.f32.gmra.mrb[0].mxu0 %v863
  %v1132 = vpop.f32.mrb[0].mxu0
  %v1133 = vadd.f32 0.0, %v1132
  %v1134 = vpop.f32.mrb[0].mxu0
  %1135 = vmatprep.mubr.f32.mxu0 0.0
  %1136 = vmatmul.mubr.f32.gmra.mrb[0].mxu0 %v864
  %v1137 = vpop.f32.mrb[0].mxu0
  %v1138 = vadd.f32 0.0, %v1137
  %v1139 = vpop.f32.mrb[0].mxu0
  %1140 = vdwg.mxu0
  %v1141 = vadd.f32 %v1064, %v1133
  %v1142 = vadd.f32 %v1065, %v1138
  %v1143 = vxor.u32 %v1141, 2147483648
  %v1144 = vxor.u32 %v1142, 2147483648
  %v1145 = vmul.f32 %v1143, 1.442695
  %v1146 = vpow.pop %v1145
  %v1147 = vmul.f32 %v1144, 1.442695
  %v1148 = vpow.pop %v1147
  %v1149 = vadd.f32 %v1146, 1.0
  %v1150 = vadd.f32 %v1148, 1.0
  %v1151 = vrcp.pop %v1149
  %v1152 = vmul.f32 1.0, %v1151
  %v1153 = vrcp.pop %v1150
  %v1154 = vmul.f32 1.0, %v1153
  %v1155 = vmul.f32 %v1152, %v766
  %v1156 = vmul.f32 %v1154, %v767
  %v1157 = vadd.f32 %v1155, %v1060
  %v1158 = vadd.f32 %v1156, %v1061
  %v1159 = vld [vmem:[%s883 + $0xc] sm:$0xf]
  %v1160 = vld [vmem:[%s883 + $0x1c] sm:$0xf]
  %v1161 = vunpack.c.l.bf16 %v1159
  %v1162 = vunpack.c.l.bf16 %v1160
  %1163 = vmatprep.subr.mxu0 0.0
  %1164 = vmatpush1.msra.mxu0 %v366
  %1165 = vmatprep.subr.mxu0 0.0
  %1166 = vmatpush1.msra.mxu0 %v367
  %1167 = vmatprep.subr.mxu0 0.0
  %1168 = vmatpush1.msra.mxu0 %v368
  %1169 = vmatprep.subr.mxu0 0.0
  %1170 = vmatpush1.msra.mxu0 %v369
  %1171 = vmatprep.subr.mxu0 0.0
  %1172 = vmatpush1.msra.mxu0 %v370
  %1173 = vmatprep.subr.mxu0 0.0
  %1174 = vmatpush1.msra.mxu0 %v371
  %1175 = vmatprep.subr.mxu0 0.0
  %1176 = vmatpush1.msra.mxu0 %v372
  %1177 = vmatprep.subr.mxu0 0.0
  %1178 = vmatpush1.msra.mxu0 %v373
  %1179 = vmatprep.subr.mxu0 0.0
  %1180 = vmatpush1.msra.mxu0 %v374
  %1181 = vmatprep.subr.mxu0 0.0
  %1182 = vmatpush1.msra.mxu0 %v375
  %1183 = vmatprep.subr.mxu0 0.0
  %1184 = vmatpush1.msra.mxu0 %v376
  %1185 = vmatprep.subr.mxu0 0.0
  %1186 = vmatpush1.msra.mxu0 %v377
  %1187 = vmatprep.subr.mxu0 0.0
  %1188 = vmatpush1.msra.mxu0 %v378
  %1189 = vmatprep.subr.mxu0 0.0
  %1190 = vmatpush1.msra.mxu0 %v379
  %1191 = vmatprep.subr.mxu0 0.0
  %1192 = vmatpush1.msra.mxu0 %v380
  %1193 = vmatprep.subr.mxu0 0.0
  %1194 = vmatpush1.msra.mxu0 %v381
  %1195 = vmatprep.subr.mxu0 0.0
  %1196 = vmatpush1.msra.mxu0 0.0
  %1197 = vmatprep.subr.mxu0 0.0
  %1198 = vmatpush1.msra.mxu0 0.0
  %1199 = vmatprep.subr.mxu0 0.0
  %1200 = vmatpush1.msra.mxu0 0.0
  %1201 = vmatprep.subr.mxu0 0.0
  %1202 = vmatpush1.msra.mxu0 0.0
  %1203 = vmatprep.subr.mxu0 0.0
  %1204 = vmatpush1.msra.mxu0 0.0
  %1205 = vmatprep.subr.mxu0 0.0
  %1206 = vmatpush1.msra.mxu0 0.0
  %1207 = vmatprep.subr.mxu0 0.0
  %1208 = vmatpush1.msra.mxu0 0.0
  %1209 = vmatprep.subr.mxu0 0.0
  %1210 = vmatpush1.msra.mxu0 0.0
  %1211 = vmatprep.subr.mxu0 0.0
  %1212 = vmatpush1.msra.mxu0 0.0
  %1213 = vmatprep.subr.mxu0 0.0
  %1214 = vmatpush1.msra.mxu0 0.0
  %1215 = vmatprep.subr.mxu0 0.0
  %1216 = vmatpush1.msra.mxu0 0.0
  %1217 = vmatprep.subr.mxu0 0.0
  %1218 = vmatpush1.msra.mxu0 0.0
  %1219 = vmatprep.subr.mxu0 0.0
  %1220 = vmatpush1.msra.mxu0 0.0
  %1221 = vmatprep.subr.mxu0 0.0
  %1222 = vmatpush1.msra.mxu0 0.0
  %1223 = vmatprep.subr.mxu0 0.0
  %1224 = vmatpush1.msra.mxu0 0.0
  %1225 = vmatprep.subr.mxu0 0.0
  %1226 = vmatpush1.msra.mxu0 0.0
  %1227 = vmatprep.mubr.f32.mxu0 0.0
  %1228 = vmatmul.mubr.f32.gmra.mrb[0].mxu0 %v863
  %v1229 = vpop.f32.mrb[0].mxu0
  %v1230 = vadd.f32 0.0, %v1229
  %v1231 = vpop.f32.mrb[0].mxu0
  %1232 = vmatprep.mubr.f32.mxu0 0.0
  %1233 = vmatmul.mubr.f32.gmra.mrb[0].mxu0 %v864
  %v1234 = vpop.f32.mrb[0].mxu0
  %v1235 = vadd.f32 0.0, %v1234
  %v1236 = vpop.f32.mrb[0].mxu0
  %1237 = vdwg.mxu0
  %v1238 = vadd.f32 %v1161, %v1230
  %v1239 = vadd.f32 %v1162, %v1235
  %v1240 = vxor.u32 %v1238, 2147483648
  %v1241 = vxor.u32 %v1239, 2147483648
  %v1242 = vmul.f32 %v1240, 1.442695
  %v1243 = vpow.pop %v1242
  %v1244 = vmul.f32 %v1241, 1.442695
  %v1245 = vpow.pop %v1244
  %v1246 = vadd.f32 %v1243, 1.0
  %v1247 = vadd.f32 %v1245, 1.0
  %v1248 = vrcp.pop %v1246
  %v1249 = vmul.f32 1.0, %v1248
  %v1250 = vrcp.pop %v1247
  %v1251 = vmul.f32 1.0, %v1250
  %v1252 = vtanh.pop %v1157
  %v1253 = vtanh.pop %v1158
  %v1254 = vmul.f32 %v1249, %v1252
  %v1255 = vmul.f32 %v1251, %v1253
  %s1256 = sadd.s32 %s32, 2
  %v1257 = vstv %s1256
  %vm1258 = vcmp.lt.s32.totalorder %v1257, %v30
  %vm1259 = vcmp.lt.s32.totalorder %v1257, %v31
  %v1260 = vsel %vm1258, 1, 0
  %v1261 = vsel %vm1259, 1, 0
  %1262 = vset.pattern.permute.xlu0 0
  %1263 = vperm.xlu0 %1262, %v1260
  %v1264 = vpop.permute.xlu0 %1263
  %1265 = vset.pattern.permute.xlu0 0
  %1266 = vperm.xlu0 %1265, %v1261
  %v1267 = vpop.permute.xlu0 %1266
  %vm1268 = vcmp.eq.s32.totalorder %v1264, 1
  %vm1269 = vcmp.eq.s32.totalorder %v1267, 1
  %v1270 = vsel %vm1268, %v1254, 0.0
  %v1271 = vsel %vm1269, %v1255, 0.0
  %v1272 = vadd.f32 %v881, %v1270
  %v1273 = vadd.f32 %v882, %v1271
  %s1274 = scalar_lea.vmem %s0, 96
  %v1275 = vld [vmem:[%s1274] sm:$0xf]
  %v1276 = vld [vmem:[%s1274 + $0x10] sm:$0xf]
  %v1277 = vunpack.c.l.bf16 %v1275
  %v1278 = vunpack.c.l.bf16 %v1276
  %1279 = vmatprep.subr.mxu0 0.0
  %1280 = vmatpush1.msra.mxu0 %v43
  %1281 = vmatprep.subr.mxu0 0.0
  %1282 = vmatpush1.msra.mxu0 %v44
  %1283 = vmatprep.subr.mxu0 0.0
  %1284 = vmatpush1.msra.mxu0 %v45
  %1285 = vmatprep.subr.mxu0 0.0
  %1286 = vmatpush1.msra.mxu0 %v46
  %1287 = vmatprep.subr.mxu0 0.0
  %1288 = vmatpush1.msra.mxu0 %v47
  %1289 = vmatprep.subr.mxu0 0.0
  %1290 = vmatpush1.msra.mxu0 %v48
  %1291 = vmatprep.subr.mxu0 0.0
  %1292 = vmatpush1.msra.mxu0 %v49
  %1293 = vmatprep.subr.mxu0 0.0
  %1294 = vmatpush1.msra.mxu0 %v50
  %1295 = vmatprep.subr.mxu0 0.0
  %1296 = vmatpush1.msra.mxu0 %v51
  %1297 = vmatprep.subr.mxu0 0.0
  %1298 = vmatpush1.msra.mxu0 %v52
  %1299 = vmatprep.subr.mxu0 0.0
  %1300 = vmatpush1.msra.mxu0 %v53
  %1301 = vmatprep.subr.mxu0 0.0
  %1302 = vmatpush1.msra.mxu0 %v54
  %1303 = vmatprep.subr.mxu0 0.0
  %1304 = vmatpush1.msra.mxu0 %v55
  %1305 = vmatprep.subr.mxu0 0.0
  %1306 = vmatpush1.msra.mxu0 %v56
  %1307 = vmatprep.subr.mxu0 0.0
  %1308 = vmatpush1.msra.mxu0 %v57
  %1309 = vmatprep.subr.mxu0 0.0
  %1310 = vmatpush1.msra.mxu0 %v58
  %1311 = vmatprep.subr.mxu0 0.0
  %1312 = vmatpush1.msra.mxu0 0.0
  %1313 = vmatprep.subr.mxu0 0.0
  %1314 = vmatpush1.msra.mxu0 0.0
  %1315 = vmatprep.subr.mxu0 0.0
  %1316 = vmatpush1.msra.mxu0 0.0
  %1317 = vmatprep.subr.mxu0 0.0
  %1318 = vmatpush1.msra.mxu0 0.0
  %1319 = vmatprep.subr.mxu0 0.0
  %1320 = vmatpush1.msra.mxu0 0.0
  %1321 = vmatprep.subr.mxu0 0.0
  %1322 = vmatpush1.msra.mxu0 0.0
  %1323 = vmatprep.subr.mxu0 0.0
  %1324 = vmatpush1.msra.mxu0 0.0
  %1325 = vmatprep.subr.mxu0 0.0
  %1326 = vmatpush1.msra.mxu0 0.0
  %1327 = vmatprep.subr.mxu0 0.0
  %1328 = vmatpush1.msra.mxu0 0.0
  %1329 = vmatprep.subr.mxu0 0.0
  %1330 = vmatpush1.msra.mxu0 0.0
  %1331 = vmatprep.subr.mxu0 0.0
  %1332 = vmatpush1.msra.mxu0 0.0
  %1333 = vmatprep.subr.mxu0 0.0
  %1334 = vmatpush1.msra.mxu0 0.0
  %1335 = vmatprep.subr.mxu0 0.0
  %1336 = vmatpush1.msra.mxu0 0.0
  %1337 = vmatprep.subr.mxu0 0.0
  %1338 = vmatpush1.msra.mxu0 0.0
  %1339 = vmatprep.subr.mxu0 0.0
  %1340 = vmatpush1.msra.mxu0 0.0
  %1341 = vmatprep.subr.mxu0 0.0
  %1342 = vmatpush1.msra.mxu0 0.0
  %1343 = vmatprep.mubr.f32.mxu0 0.0
  %1344 = vmatmul.mubr.f32.gmra.mrb[0].mxu0 %v1254
  %v1345 = vpop.f32.mrb[0].mxu0
  %v1346 = vadd.f32 0.0, %v1345
  %v1347 = vpop.f32.mrb[0].mxu0
  %1348 = vmatprep.mubr.f32.mxu0 0.0
  %1349 = vmatmul.mubr.f32.gmra.mrb[0].mxu0 %v1255
  %v1350 = vpop.f32.mrb[0].mxu0
  %v1351 = vadd.f32 0.0, %v1350
  %v1352 = vpop.f32.mrb[0].mxu0
  %1353 = vdwg.mxu0
  %v1354 = vadd.f32 %v1277, %v1346
  %v1355 = vadd.f32 %v1278, %v1351
  %v1356 = vxor.u32 %v1354, 2147483648
  %v1357 = vxor.u32 %v1355, 2147483648
  %v1358 = vmul.f32 %v1356, 1.442695
  %v1359 = vpow.pop %v1358
  %v1360 = vmul.f32 %v1357, 1.442695
  %v1361 = vpow.pop %v1360
  %v1362 = vadd.f32 %v1359, 1.0
  %v1363 = vadd.f32 %v1361, 1.0
  %v1364 = vrcp.pop %v1362
  %v1365 = vmul.f32 1.0, %v1364
  %v1366 = vrcp.pop %v1363
  %v1367 = vmul.f32 1.0, %v1366
  %v1368 = vld [vmem:[%s1274 + $0x8] sm:$0xf]
  %v1369 = vld [vmem:[%s1274 + $0x18] sm:$0xf]
  %v1370 = vunpack.c.l.bf16 %v1368
  %v1371 = vunpack.c.l.bf16 %v1369
  %1372 = vmatprep.subr.mxu0 0.0
  %1373 = vmatpush1.msra.mxu0 %v152
  %1374 = vmatprep.subr.mxu0 0.0
  %1375 = vmatpush1.msra.mxu0 %v153
  %1376 = vmatprep.subr.mxu0 0.0
  %1377 = vmatpush1.msra.mxu0 %v154
  %1378 = vmatprep.subr.mxu0 0.0
  %1379 = vmatpush1.msra.mxu0 %v155
  %1380 = vmatprep.subr.mxu0 0.0
  %1381 = vmatpush1.msra.mxu0 %v156
  %1382 = vmatprep.subr.mxu0 0.0
  %1383 = vmatpush1.msra.mxu0 %v157
  %1384 = vmatprep.subr.mxu0 0.0
  %1385 = vmatpush1.msra.mxu0 %v158
  %1386 = vmatprep.subr.mxu0 0.0
  %1387 = vmatpush1.msra.mxu0 %v159
  %1388 = vmatprep.subr.mxu0 0.0
  %1389 = vmatpush1.msra.mxu0 %v160
  %1390 = vmatprep.subr.mxu0 0.0
  %1391 = vmatpush1.msra.mxu0 %v161
  %1392 = vmatprep.subr.mxu0 0.0
  %1393 = vmatpush1.msra.mxu0 %v162
  %1394 = vmatprep.subr.mxu0 0.0
  %1395 = vmatpush1.msra.mxu0 %v163
  %1396 = vmatprep.subr.mxu0 0.0
  %1397 = vmatpush1.msra.mxu0 %v164
  %1398 = vmatprep.subr.mxu0 0.0
  %1399 = vmatpush1.msra.mxu0 %v165
  %1400 = vmatprep.subr.mxu0 0.0
  %1401 = vmatpush1.msra.mxu0 %v166
  %1402 = vmatprep.subr.mxu0 0.0
  %1403 = vmatpush1.msra.mxu0 %v167
  %1404 = vmatprep.subr.mxu0 0.0
  %1405 = vmatpush1.msra.mxu0 0.0
  %1406 = vmatprep.subr.mxu0 0.0
  %1407 = vmatpush1.msra.mxu0 0.0
  %1408 = vmatprep.subr.mxu0 0.0
  %1409 = vmatpush1.msra.mxu0 0.0
  %1410 = vmatprep.subr.mxu0 0.0
  %1411 = vmatpush1.msra.mxu0 0.0
  %1412 = vmatprep.subr.mxu0 0.0
  %1413 = vmatpush1.msra.mxu0 0.0
  %1414 = vmatprep.subr.mxu0 0.0
  %1415 = vmatpush1.msra.mxu0 0.0
  %1416 = vmatprep.subr.mxu0 0.0
  %1417 = vmatpush1.msra.mxu0 0.0
  %1418 = vmatprep.subr.mxu0 0.0
  %1419 = vmatpush1.msra.mxu0 0.0
  %1420 = vmatprep.subr.mxu0 0.0
  %1421 = vmatpush1.msra.mxu0 0.0
  %1422 = vmatprep.subr.mxu0 0.0
  %1423 = vmatpush1.msra.mxu0 0.0
  %1424 = vmatprep.subr.mxu0 0.0
  %1425 = vmatpush1.msra.mxu0 0.0
  %1426 = vmatprep.subr.mxu0 0.0
  %1427 = vmatpush1.msra.mxu0 0.0
  %1428 = vmatprep.subr.mxu0 0.0
  %1429 = vmatpush1.msra.mxu0 0.0
  %1430 = vmatprep.subr.mxu0 0.0
  %1431 = vmatpush1.msra.mxu0 0.0
  %1432 = vmatprep.subr.mxu0 0.0
  %1433 = vmatpush1.msra.mxu0 0.0
  %1434 = vmatprep.subr.mxu0 0.0
  %1435 = vmatpush1.msra.mxu0 0.0
  %1436 = vmatprep.mubr.f32.mxu0 0.0
  %1437 = vmatmul.mubr.f32.gmra.mrb[0].mxu0 %v1254
  %v1438 = vpop.f32.mrb[0].mxu0
  %v1439 = vadd.f32 0.0, %v1438
  %v1440 = vpop.f32.mrb[0].mxu0
  %1441 = vmatprep.mubr.f32.mxu0 0.0
  %1442 = vmatmul.mubr.f32.gmra.mrb[0].mxu0 %v1255
  %v1443 = vpop.f32.mrb[0].mxu0
  %v1444 = vadd.f32 0.0, %v1443
  %v1445 = vpop.f32.mrb[0].mxu0
  %1446 = vdwg.mxu0
  %v1447 = vadd.f32 %v1370, %v1439
  %v1448 = vadd.f32 %v1371, %v1444
  %v1449 = vtanh.pop %v1447
  %v1450 = vtanh.pop %v1448
  %v1451 = vmul.f32 %v1365, %v1449
  %v1452 = vmul.f32 %v1367, %v1450
  %v1453 = vld [vmem:[%s1274 + $0x4] sm:$0xf]
  %v1454 = vld [vmem:[%s1274 + $0x14] sm:$0xf]
  %v1455 = vunpack.c.l.bf16 %v1453
  %v1456 = vunpack.c.l.bf16 %v1454
  %1457 = vmatprep.subr.mxu0 0.0
  %1458 = vmatpush1.msra.mxu0 %v253
  %1459 = vmatprep.subr.mxu0 0.0
  %1460 = vmatpush1.msra.mxu0 %v254
  %1461 = vmatprep.subr.mxu0 0.0
  %1462 = vmatpush1.msra.mxu0 %v255
  %1463 = vmatprep.subr.mxu0 0.0
  %1464 = vmatpush1.msra.mxu0 %v256
  %1465 = vmatprep.subr.mxu0 0.0
  %1466 = vmatpush1.msra.mxu0 %v257
  %1467 = vmatprep.subr.mxu0 0.0
  %1468 = vmatpush1.msra.mxu0 %v258
  %1469 = vmatprep.subr.mxu0 0.0
  %1470 = vmatpush1.msra.mxu0 %v259
  %1471 = vmatprep.subr.mxu0 0.0
  %1472 = vmatpush1.msra.mxu0 %v260
  %1473 = vmatprep.subr.mxu0 0.0
  %1474 = vmatpush1.msra.mxu0 %v261
  %1475 = vmatprep.subr.mxu0 0.0
  %1476 = vmatpush1.msra.mxu0 %v262
  %1477 = vmatprep.subr.mxu0 0.0
  %1478 = vmatpush1.msra.mxu0 %v263
  %1479 = vmatprep.subr.mxu0 0.0
  %1480 = vmatpush1.msra.mxu0 %v264
  %1481 = vmatprep.subr.mxu0 0.0
  %1482 = vmatpush1.msra.mxu0 %v265
  %1483 = vmatprep.subr.mxu0 0.0
  %1484 = vmatpush1.msra.mxu0 %v266
  %1485 = vmatprep.subr.mxu0 0.0
  %1486 = vmatpush1.msra.mxu0 %v267
  %1487 = vmatprep.subr.mxu0 0.0
  %1488 = vmatpush1.msra.mxu0 %v268
  %1489 = vmatprep.subr.mxu0 0.0
  %1490 = vmatpush1.msra.mxu0 0.0
  %1491 = vmatprep.subr.mxu0 0.0
  %1492 = vmatpush1.msra.mxu0 0.0
  %1493 = vmatprep.subr.mxu0 0.0
  %1494 = vmatpush1.msra.mxu0 0.0
  %1495 = vmatprep.subr.mxu0 0.0
  %1496 = vmatpush1.msra.mxu0 0.0
  %1497 = vmatprep.subr.mxu0 0.0
  %1498 = vmatpush1.msra.mxu0 0.0
  %1499 = vmatprep.subr.mxu0 0.0
  %1500 = vmatpush1.msra.mxu0 0.0
  %1501 = vmatprep.subr.mxu0 0.0
  %1502 = vmatpush1.msra.mxu0 0.0
  %1503 = vmatprep.subr.mxu0 0.0
  %1504 = vmatpush1.msra.mxu0 0.0
  %1505 = vmatprep.subr.mxu0 0.0
  %1506 = vmatpush1.msra.mxu0 0.0
  %1507 = vmatprep.subr.mxu0 0.0
  %1508 = vmatpush1.msra.mxu0 0.0
  %1509 = vmatprep.subr.mxu0 0.0
  %1510 = vmatpush1.msra.mxu0 0.0
  %1511 = vmatprep.subr.mxu0 0.0
  %1512 = vmatpush1.msra.mxu0 0.0
  %1513 = vmatprep.subr.mxu0 0.0
  %1514 = vmatpush1.msra.mxu0 0.0
  %1515 = vmatprep.subr.mxu0 0.0
  %1516 = vmatpush1.msra.mxu0 0.0
  %1517 = vmatprep.subr.mxu0 0.0
  %1518 = vmatpush1.msra.mxu0 0.0
  %1519 = vmatprep.subr.mxu0 0.0
  %1520 = vmatpush1.msra.mxu0 0.0
  %1521 = vmatprep.mubr.f32.mxu0 0.0
  %1522 = vmatmul.mubr.f32.gmra.mrb[0].mxu0 %v1254
  %v1523 = vpop.f32.mrb[0].mxu0
  %v1524 = vadd.f32 0.0, %v1523
  %v1525 = vpop.f32.mrb[0].mxu0
  %1526 = vmatprep.mubr.f32.mxu0 0.0
  %1527 = vmatmul.mubr.f32.gmra.mrb[0].mxu0 %v1255
  %v1528 = vpop.f32.mrb[0].mxu0
  %v1529 = vadd.f32 0.0, %v1528
  %v1530 = vpop.f32.mrb[0].mxu0
  %1531 = vdwg.mxu0
  %v1532 = vadd.f32 %v1455, %v1524
  %v1533 = vadd.f32 %v1456, %v1529
  %v1534 = vxor.u32 %v1532, 2147483648
  %v1535 = vxor.u32 %v1533, 2147483648
  %v1536 = vmul.f32 %v1534, 1.442695
  %v1537 = vpow.pop %v1536
  %v1538 = vmul.f32 %v1535, 1.442695
  %v1539 = vpow.pop %v1538
  %v1540 = vadd.f32 %v1537, 1.0
  %v1541 = vadd.f32 %v1539, 1.0
  %v1542 = vrcp.pop %v1540
  %v1543 = vmul.f32 1.0, %v1542
  %v1544 = vrcp.pop %v1541
  %v1545 = vmul.f32 1.0, %v1544
  %v1546 = vmul.f32 %v1543, %v1157
  %v1547 = vmul.f32 %v1545, %v1158
  %v1548 = vadd.f32 %v1546, %v1451
  %v1549 = vadd.f32 %v1547, %v1452
  %v1550 = vld [vmem:[%s1274 + $0xc] sm:$0xf]
  %v1551 = vld [vmem:[%s1274 + $0x1c] sm:$0xf]
  %v1552 = vunpack.c.l.bf16 %v1550
  %v1553 = vunpack.c.l.bf16 %v1551
  %1554 = vmatprep.subr.mxu0 0.0
  %1555 = vmatpush1.msra.mxu0 %v366
  %1556 = vmatprep.subr.mxu0 0.0
  %1557 = vmatpush1.msra.mxu0 %v367
  %1558 = vmatprep.subr.mxu0 0.0
  %1559 = vmatpush1.msra.mxu0 %v368
  %1560 = vmatprep.subr.mxu0 0.0
  %1561 = vmatpush1.msra.mxu0 %v369
  %1562 = vmatprep.subr.mxu0 0.0
  %1563 = vmatpush1.msra.mxu0 %v370
  %1564 = vmatprep.subr.mxu0 0.0
  %1565 = vmatpush1.msra.mxu0 %v371
  %1566 = vmatprep.subr.mxu0 0.0
  %1567 = vmatpush1.msra.mxu0 %v372
  %1568 = vmatprep.subr.mxu0 0.0
  %1569 = vmatpush1.msra.mxu0 %v373
  %1570 = vmatprep.subr.mxu0 0.0
  %1571 = vmatpush1.msra.mxu0 %v374
  %1572 = vmatprep.subr.mxu0 0.0
  %1573 = vmatpush1.msra.mxu0 %v375
  %1574 = vmatprep.subr.mxu0 0.0
  %1575 = vmatpush1.msra.mxu0 %v376
  %1576 = vmatprep.subr.mxu0 0.0
  %1577 = vmatpush1.msra.mxu0 %v377
  %1578 = vmatprep.subr.mxu0 0.0
  %1579 = vmatpush1.msra.mxu0 %v378
  %1580 = vmatprep.subr.mxu0 0.0
  %1581 = vmatpush1.msra.mxu0 %v379
  %1582 = vmatprep.subr.mxu0 0.0
  %1583 = vmatpush1.msra.mxu0 %v380
  %1584 = vmatprep.subr.mxu0 0.0
  %1585 = vmatpush1.msra.mxu0 %v381
  %1586 = vmatprep.subr.mxu0 0.0
  %1587 = vmatpush1.msra.mxu0 0.0
  %1588 = vmatprep.subr.mxu0 0.0
  %1589 = vmatpush1.msra.mxu0 0.0
  %1590 = vmatprep.subr.mxu0 0.0
  %1591 = vmatpush1.msra.mxu0 0.0
  %1592 = vmatprep.subr.mxu0 0.0
  %1593 = vmatpush1.msra.mxu0 0.0
  %1594 = vmatprep.subr.mxu0 0.0
  %1595 = vmatpush1.msra.mxu0 0.0
  %1596 = vmatprep.subr.mxu0 0.0
  %1597 = vmatpush1.msra.mxu0 0.0
  %1598 = vmatprep.subr.mxu0 0.0
  %1599 = vmatpush1.msra.mxu0 0.0
  %1600 = vmatprep.subr.mxu0 0.0
  %1601 = vmatpush1.msra.mxu0 0.0
  %1602 = vmatprep.subr.mxu0 0.0
  %1603 = vmatpush1.msra.mxu0 0.0
  %1604 = vmatprep.subr.mxu0 0.0
  %1605 = vmatpush1.msra.mxu0 0.0
  %1606 = vmatprep.subr.mxu0 0.0
  %1607 = vmatpush1.msra.mxu0 0.0
  %1608 = vmatprep.subr.mxu0 0.0
  %1609 = vmatpush1.msra.mxu0 0.0
  %1610 = vmatprep.subr.mxu0 0.0
  %1611 = vmatpush1.msra.mxu0 0.0
  %1612 = vmatprep.subr.mxu0 0.0
  %1613 = vmatpush1.msra.mxu0 0.0
  %1614 = vmatprep.subr.mxu0 0.0
  %1615 = vmatpush1.msra.mxu0 0.0
  %1616 = vmatprep.subr.mxu0 0.0
  %1617 = vmatpush1.msra.mxu0 0.0
  %1618 = vmatprep.mubr.f32.mxu0 0.0
  %1619 = vmatmul.mubr.f32.gmra.mrb[0].mxu0 %v1254
  %v1620 = vpop.f32.mrb[0].mxu0
  %v1621 = vadd.f32 0.0, %v1620
  %v1622 = vpop.f32.mrb[0].mxu0
  %1623 = vmatprep.mubr.f32.mxu0 0.0
  %1624 = vmatmul.mubr.f32.gmra.mrb[0].mxu0 %v1255
  %v1625 = vpop.f32.mrb[0].mxu0
  %v1626 = vadd.f32 0.0, %v1625
  %v1627 = vpop.f32.mrb[0].mxu0
  %1628 = vdwg.mxu0
  %v1629 = vadd.f32 %v1552, %v1621
  %v1630 = vadd.f32 %v1553, %v1626
  %v1631 = vxor.u32 %v1629, 2147483648
  %v1632 = vxor.u32 %v1630, 2147483648
  %v1633 = vmul.f32 %v1631, 1.442695
  %v1634 = vpow.pop %v1633
  %v1635 = vmul.f32 %v1632, 1.442695
  %v1636 = vpow.pop %v1635
  %v1637 = vadd.f32 %v1634, 1.0
  %v1638 = vadd.f32 %v1636, 1.0
  %v1639 = vrcp.pop %v1637
  %v1640 = vmul.f32 1.0, %v1639
  %v1641 = vrcp.pop %v1638
  %v1642 = vmul.f32 1.0, %v1641
  %v1643 = vtanh.pop %v1548
  %v1644 = vtanh.pop %v1549
  %v1645 = vmul.f32 %v1640, %v1643
  %v1646 = vmul.f32 %v1642, %v1644
  %s1647 = sadd.s32 %s32, 3
  %v1648 = vstv %s1647
  %vm1649 = vcmp.lt.s32.totalorder %v1648, %v30
  %vm1650 = vcmp.lt.s32.totalorder %v1648, %v31
  %v1651 = vsel %vm1649, 1, 0
  %v1652 = vsel %vm1650, 1, 0
  %1653 = vset.pattern.permute.xlu0 0
  %1654 = vperm.xlu0 %1653, %v1651
  %v1655 = vpop.permute.xlu0 %1654
  %1656 = vset.pattern.permute.xlu0 0
  %1657 = vperm.xlu0 %1656, %v1652
  %v1658 = vpop.permute.xlu0 %1657
  %vm1659 = vcmp.eq.s32.totalorder %v1655, 1
  %vm1660 = vcmp.eq.s32.totalorder %v1658, 1
  %v1661 = vsel %vm1659, %v1645, 0.0
  %v1662 = vsel %vm1660, %v1646, 0.0
  %v1663 = vadd.f32 %v1272, %v1661
  %v1664 = vadd.f32 %v1273, %v1662
  %s1665 = scalar_lea.vmem %s0, 128
  %v1666 = vld [vmem:[%s1665] sm:$0xf]
  %v1667 = vld [vmem:[%s1665 + $0x10] sm:$0xf]
  %v1668 = vunpack.c.l.bf16 %v1666
  %v1669 = vunpack.c.l.bf16 %v1667
  %1670 = vmatprep.subr.mxu0 0.0
  %1671 = vmatpush1.msra.mxu0 %v43
  %1672 = vmatprep.subr.mxu0 0.0
  %1673 = vmatpush1.msra.mxu0 %v44
  %1674 = vmatprep.subr.mxu0 0.0
  %1675 = vmatpush1.msra.mxu0 %v45
  %1676 = vmatprep.subr.mxu0 0.0
  %1677 = vmatpush1.msra.mxu0 %v46
  %1678 = vmatprep.subr.mxu0 0.0
  %1679 = vmatpush1.msra.mxu0 %v47
  %1680 = vmatprep.subr.mxu0 0.0
  %1681 = vmatpush1.msra.mxu0 %v48
  %1682 = vmatprep.subr.mxu0 0.0
  %1683 = vmatpush1.msra.mxu0 %v49
  %1684 = vmatprep.subr.mxu0 0.0
  %1685 = vmatpush1.msra.mxu0 %v50
  %1686 = vmatprep.subr.mxu0 0.0
  %1687 = vmatpush1.msra.mxu0 %v51
  %1688 = vmatprep.subr.mxu0 0.0
  %1689 = vmatpush1.msra.mxu0 %v52
  %1690 = vmatprep.subr.mxu0 0.0
  %1691 = vmatpush1.msra.mxu0 %v53
  %1692 = vmatprep.subr.mxu0 0.0
  %1693 = vmatpush1.msra.mxu0 %v54
  %1694 = vmatprep.subr.mxu0 0.0
  %1695 = vmatpush1.msra.mxu0 %v55
  %1696 = vmatprep.subr.mxu0 0.0
  %1697 = vmatpush1.msra.mxu0 %v56
  %1698 = vmatprep.subr.mxu0 0.0
  %1699 = vmatpush1.msra.mxu0 %v57
  %1700 = vmatprep.subr.mxu0 0.0
  %1701 = vmatpush1.msra.mxu0 %v58
  %1702 = vmatprep.subr.mxu0 0.0
  %1703 = vmatpush1.msra.mxu0 0.0
  %1704 = vmatprep.subr.mxu0 0.0
  %1705 = vmatpush1.msra.mxu0 0.0
  %1706 = vmatprep.subr.mxu0 0.0
  %1707 = vmatpush1.msra.mxu0 0.0
  %1708 = vmatprep.subr.mxu0 0.0
  %1709 = vmatpush1.msra.mxu0 0.0
  %1710 = vmatprep.subr.mxu0 0.0
  %1711 = vmatpush1.msra.mxu0 0.0
  %1712 = vmatprep.subr.mxu0 0.0
  %1713 = vmatpush1.msra.mxu0 0.0
  %1714 = vmatprep.subr.mxu0 0.0
  %1715 = vmatpush1.msra.mxu0 0.0
  %1716 = vmatprep.subr.mxu0 0.0
  %1717 = vmatpush1.msra.mxu0 0.0
  %1718 = vmatprep.subr.mxu0 0.0
  %1719 = vmatpush1.msra.mxu0 0.0
  %1720 = vmatprep.subr.mxu0 0.0
  %1721 = vmatpush1.msra.mxu0 0.0
  %1722 = vmatprep.subr.mxu0 0.0
  %1723 = vmatpush1.msra.mxu0 0.0
  %1724 = vmatprep.subr.mxu0 0.0
  %1725 = vmatpush1.msra.mxu0 0.0
  %1726 = vmatprep.subr.mxu0 0.0
  %1727 = vmatpush1.msra.mxu0 0.0
  %1728 = vmatprep.subr.mxu0 0.0
  %1729 = vmatpush1.msra.mxu0 0.0
  %1730 = vmatprep.subr.mxu0 0.0
  %1731 = vmatpush1.msra.mxu0 0.0
  %1732 = vmatprep.subr.mxu0 0.0
  %1733 = vmatpush1.msra.mxu0 0.0
  %1734 = vmatprep.mubr.f32.mxu0 0.0
  %1735 = vmatmul.mubr.f32.gmra.mrb[0].mxu0 %v1645
  %v1736 = vpop.f32.mrb[0].mxu0
  %v1737 = vadd.f32 0.0, %v1736
  %v1738 = vpop.f32.mrb[0].mxu0
  %1739 = vmatprep.mubr.f32.mxu0 0.0
  %1740 = vmatmul.mubr.f32.gmra.mrb[0].mxu0 %v1646
  %v1741 = vpop.f32.mrb[0].mxu0
  %v1742 = vadd.f32 0.0, %v1741
  %v1743 = vpop.f32.mrb[0].mxu0
  %1744 = vdwg.mxu0
  %v1745 = vadd.f32 %v1668, %v1737
  %v1746 = vadd.f32 %v1669, %v1742
  %v1747 = vxor.u32 %v1745, 2147483648
  %v1748 = vxor.u32 %v1746, 2147483648
  %v1749 = vmul.f32 %v1747, 1.442695
  %v1750 = vpow.pop %v1749
  %v1751 = vmul.f32 %v1748, 1.442695
  %v1752 = vpow.pop %v1751
  %v1753 = vadd.f32 %v1750, 1.0
  %v1754 = vadd.f32 %v1752, 1.0
  %v1755 = vrcp.pop %v1753
  %v1756 = vmul.f32 1.0, %v1755
  %v1757 = vrcp.pop %v1754
  %v1758 = vmul.f32 1.0, %v1757
  %v1759 = vld [vmem:[%s1665 + $0x8] sm:$0xf]
  %v1760 = vld [vmem:[%s1665 + $0x18] sm:$0xf]
  %v1761 = vunpack.c.l.bf16 %v1759
  %v1762 = vunpack.c.l.bf16 %v1760
  %1763 = vmatprep.subr.mxu0 0.0
  %1764 = vmatpush1.msra.mxu0 %v152
  %1765 = vmatprep.subr.mxu0 0.0
  %1766 = vmatpush1.msra.mxu0 %v153
  %1767 = vmatprep.subr.mxu0 0.0
  %1768 = vmatpush1.msra.mxu0 %v154
  %1769 = vmatprep.subr.mxu0 0.0
  %1770 = vmatpush1.msra.mxu0 %v155
  %1771 = vmatprep.subr.mxu0 0.0
  %1772 = vmatpush1.msra.mxu0 %v156
  %1773 = vmatprep.subr.mxu0 0.0
  %1774 = vmatpush1.msra.mxu0 %v157
  %1775 = vmatprep.subr.mxu0 0.0
  %1776 = vmatpush1.msra.mxu0 %v158
  %1777 = vmatprep.subr.mxu0 0.0
  %1778 = vmatpush1.msra.mxu0 %v159
  %1779 = vmatprep.subr.mxu0 0.0
  %1780 = vmatpush1.msra.mxu0 %v160
  %1781 = vmatprep.subr.mxu0 0.0
  %1782 = vmatpush1.msra.mxu0 %v161
  %1783 = vmatprep.subr.mxu0 0.0
  %1784 = vmatpush1.msra.mxu0 %v162
  %1785 = vmatprep.subr.mxu0 0.0
  %1786 = vmatpush1.msra.mxu0 %v163
  %1787 = vmatprep.subr.mxu0 0.0
  %1788 = vmatpush1.msra.mxu0 %v164
  %1789 = vmatprep.subr.mxu0 0.0
  %1790 = vmatpush1.msra.mxu0 %v165
  %1791 = vmatprep.subr.mxu0 0.0
  %1792 = vmatpush1.msra.mxu0 %v166
  %1793 = vmatprep.subr.mxu0 0.0
  %1794 = vmatpush1.msra.mxu0 %v167
  %1795 = vmatprep.subr.mxu0 0.0
  %1796 = vmatpush1.msra.mxu0 0.0
  %1797 = vmatprep.subr.mxu0 0.0
  %1798 = vmatpush1.msra.mxu0 0.0
  %1799 = vmatprep.subr.mxu0 0.0
  %1800 = vmatpush1.msra.mxu0 0.0
  %1801 = vmatprep.subr.mxu0 0.0
  %1802 = vmatpush1.msra.mxu0 0.0
  %1803 = vmatprep.subr.mxu0 0.0
  %1804 = vmatpush1.msra.mxu0 0.0
  %1805 = vmatprep.subr.mxu0 0.0
  %1806 = vmatpush1.msra.mxu0 0.0
  %1807 = vmatprep.subr.mxu0 0.0
  %1808 = vmatpush1.msra.mxu0 0.0
  %1809 = vmatprep.subr.mxu0 0.0
  %1810 = vmatpush1.msra.mxu0 0.0
  %1811 = vmatprep.subr.mxu0 0.0
  %1812 = vmatpush1.msra.mxu0 0.0
  %1813 = vmatprep.subr.mxu0 0.0
  %1814 = vmatpush1.msra.mxu0 0.0
  %1815 = vmatprep.subr.mxu0 0.0
  %1816 = vmatpush1.msra.mxu0 0.0
  %1817 = vmatprep.subr.mxu0 0.0
  %1818 = vmatpush1.msra.mxu0 0.0
  %1819 = vmatprep.subr.mxu0 0.0
  %1820 = vmatpush1.msra.mxu0 0.0
  %1821 = vmatprep.subr.mxu0 0.0
  %1822 = vmatpush1.msra.mxu0 0.0
  %1823 = vmatprep.subr.mxu0 0.0
  %1824 = vmatpush1.msra.mxu0 0.0
  %1825 = vmatprep.subr.mxu0 0.0
  %1826 = vmatpush1.msra.mxu0 0.0
  %1827 = vmatprep.mubr.f32.mxu0 0.0
  %1828 = vmatmul.mubr.f32.gmra.mrb[0].mxu0 %v1645
  %v1829 = vpop.f32.mrb[0].mxu0
  %v1830 = vadd.f32 0.0, %v1829
  %v1831 = vpop.f32.mrb[0].mxu0
  %1832 = vmatprep.mubr.f32.mxu0 0.0
  %1833 = vmatmul.mubr.f32.gmra.mrb[0].mxu0 %v1646
  %v1834 = vpop.f32.mrb[0].mxu0
  %v1835 = vadd.f32 0.0, %v1834
  %v1836 = vpop.f32.mrb[0].mxu0
  %1837 = vdwg.mxu0
  %v1838 = vadd.f32 %v1761, %v1830
  %v1839 = vadd.f32 %v1762, %v1835
  %v1840 = vtanh.pop %v1838
  %v1841 = vtanh.pop %v1839
  %v1842 = vmul.f32 %v1756, %v1840
  %v1843 = vmul.f32 %v1758, %v1841
  %v1844 = vld [vmem:[%s1665 + $0x4] sm:$0xf]
  %v1845 = vld [vmem:[%s1665 + $0x14] sm:$0xf]
  %v1846 = vunpack.c.l.bf16 %v1844
  %v1847 = vunpack.c.l.bf16 %v1845
  %1848 = vmatprep.subr.mxu0 0.0
  %1849 = vmatpush1.msra.mxu0 %v253
  %1850 = vmatprep.subr.mxu0 0.0
  %1851 = vmatpush1.msra.mxu0 %v254
  %1852 = vmatprep.subr.mxu0 0.0
  %1853 = vmatpush1.msra.mxu0 %v255
  %1854 = vmatprep.subr.mxu0 0.0
  %1855 = vmatpush1.msra.mxu0 %v256
  %1856 = vmatprep.subr.mxu0 0.0
  %1857 = vmatpush1.msra.mxu0 %v257
  %1858 = vmatprep.subr.mxu0 0.0
  %1859 = vmatpush1.msra.mxu0 %v258
  %1860 = vmatprep.subr.mxu0 0.0
  %1861 = vmatpush1.msra.mxu0 %v259
  %1862 = vmatprep.subr.mxu0 0.0
  %1863 = vmatpush1.msra.mxu0 %v260
  %1864 = vmatprep.subr.mxu0 0.0
  %1865 = vmatpush1.msra.mxu0 %v261
  %1866 = vmatprep.subr.mxu0 0.0
  %1867 = vmatpush1.msra.mxu0 %v262
  %1868 = vmatprep.subr.mxu0 0.0
  %1869 = vmatpush1.msra.mxu0 %v263
  %1870 = vmatprep.subr.mxu0 0.0
  %1871 = vmatpush1.msra.mxu0 %v264
  %1872 = vmatprep.subr.mxu0 0.0
  %1873 = vmatpush1.msra.mxu0 %v265
  %1874 = vmatprep.subr.mxu0 0.0
  %1875 = vmatpush1.msra.mxu0 %v266
  %1876 = vmatprep.subr.mxu0 0.0
  %1877 = vmatpush1.msra.mxu0 %v267
  %1878 = vmatprep.subr.mxu0 0.0
  %1879 = vmatpush1.msra.mxu0 %v268
  %1880 = vmatprep.subr.mxu0 0.0
  %1881 = vmatpush1.msra.mxu0 0.0
  %1882 = vmatprep.subr.mxu0 0.0
  %1883 = vmatpush1.msra.mxu0 0.0
  %1884 = vmatprep.subr.mxu0 0.0
  %1885 = vmatpush1.msra.mxu0 0.0
  %1886 = vmatprep.subr.mxu0 0.0
  %1887 = vmatpush1.msra.mxu0 0.0
  %1888 = vmatprep.subr.mxu0 0.0
  %1889 = vmatpush1.msra.mxu0 0.0
  %1890 = vmatprep.subr.mxu0 0.0
  %1891 = vmatpush1.msra.mxu0 0.0
  %1892 = vmatprep.subr.mxu0 0.0
  %1893 = vmatpush1.msra.mxu0 0.0
  %1894 = vmatprep.subr.mxu0 0.0
  %1895 = vmatpush1.msra.mxu0 0.0
  %1896 = vmatprep.subr.mxu0 0.0
  %1897 = vmatpush1.msra.mxu0 0.0
  %1898 = vmatprep.subr.mxu0 0.0
  %1899 = vmatpush1.msra.mxu0 0.0
  %1900 = vmatprep.subr.mxu0 0.0
  %1901 = vmatpush1.msra.mxu0 0.0
  %1902 = vmatprep.subr.mxu0 0.0
  %1903 = vmatpush1.msra.mxu0 0.0
  %1904 = vmatprep.subr.mxu0 0.0
  %1905 = vmatpush1.msra.mxu0 0.0
  %1906 = vmatprep.subr.mxu0 0.0
  %1907 = vmatpush1.msra.mxu0 0.0
  %1908 = vmatprep.subr.mxu0 0.0
  %1909 = vmatpush1.msra.mxu0 0.0
  %1910 = vmatprep.subr.mxu0 0.0
  %1911 = vmatpush1.msra.mxu0 0.0
  %1912 = vmatprep.mubr.f32.mxu0 0.0
  %1913 = vmatmul.mubr.f32.gmra.mrb[0].mxu0 %v1645
  %v1914 = vpop.f32.mrb[0].mxu0
  %v1915 = vadd.f32 0.0, %v1914
  %v1916 = vpop.f32.mrb[0].mxu0
  %1917 = vmatprep.mubr.f32.mxu0 0.0
  %1918 = vmatmul.mubr.f32.gmra.mrb[0].mxu0 %v1646
  %v1919 = vpop.f32.mrb[0].mxu0
  %v1920 = vadd.f32 0.0, %v1919
  %v1921 = vpop.f32.mrb[0].mxu0
  %1922 = vdwg.mxu0
  %v1923 = vadd.f32 %v1846, %v1915
  %v1924 = vadd.f32 %v1847, %v1920
  %v1925 = vxor.u32 %v1923, 2147483648
  %v1926 = vxor.u32 %v1924, 2147483648
  %v1927 = vmul.f32 %v1925, 1.442695
  %v1928 = vpow.pop %v1927
  %v1929 = vmul.f32 %v1926, 1.442695
  %v1930 = vpow.pop %v1929
  %v1931 = vadd.f32 %v1928, 1.0
  %v1932 = vadd.f32 %v1930, 1.0
  %v1933 = vrcp.pop %v1931
  %v1934 = vmul.f32 1.0, %v1933
  %v1935 = vrcp.pop %v1932
  %v1936 = vmul.f32 1.0, %v1935
  %v1937 = vmul.f32 %v1934, %v1548
  %v1938 = vmul.f32 %v1936, %v1549
  %v1939 = vadd.f32 %v1937, %v1842
  %v1940 = vadd.f32 %v1938, %v1843
  %v1941 = vld [vmem:[%s1665 + $0xc] sm:$0xf]
  %v1942 = vld [vmem:[%s1665 + $0x1c] sm:$0xf]
  %v1943 = vunpack.c.l.bf16 %v1941
  %v1944 = vunpack.c.l.bf16 %v1942
  %1945 = vmatprep.subr.mxu0 0.0
  %1946 = vmatpush1.msra.mxu0 %v366
  %1947 = vmatprep.subr.mxu0 0.0
  %1948 = vmatpush1.msra.mxu0 %v367
  %1949 = vmatprep.subr.mxu0 0.0
  %1950 = vmatpush1.msra.mxu0 %v368
  %1951 = vmatprep.subr.mxu0 0.0
  %1952 = vmatpush1.msra.mxu0 %v369
  %1953 = vmatprep.subr.mxu0 0.0
  %1954 = vmatpush1.msra.mxu0 %v370
  %1955 = vmatprep.subr.mxu0 0.0
  %1956 = vmatpush1.msra.mxu0 %v371
  %1957 = vmatprep.subr.mxu0 0.0
  %1958 = vmatpush1.msra.mxu0 %v372
  %1959 = vmatprep.subr.mxu0 0.0
  %1960 = vmatpush1.msra.mxu0 %v373
  %1961 = vmatprep.subr.mxu0 0.0
  %1962 = vmatpush1.msra.mxu0 %v374
  %1963 = vmatprep.subr.mxu0 0.0
  %1964 = vmatpush1.msra.mxu0 %v375
  %1965 = vmatprep.subr.mxu0 0.0
  %1966 = vmatpush1.msra.mxu0 %v376
  %1967 = vmatprep.subr.mxu0 0.0
  %1968 = vmatpush1.msra.mxu0 %v377
  %1969 = vmatprep.subr.mxu0 0.0
  %1970 = vmatpush1.msra.mxu0 %v378
  %1971 = vmatprep.subr.mxu0 0.0
  %1972 = vmatpush1.msra.mxu0 %v379
  %1973 = vmatprep.subr.mxu0 0.0
  %1974 = vmatpush1.msra.mxu0 %v380
  %1975 = vmatprep.subr.mxu0 0.0
  %1976 = vmatpush1.msra.mxu0 %v381
  %1977 = vmatprep.subr.mxu0 0.0
  %1978 = vmatpush1.msra.mxu0 0.0
  %1979 = vmatprep.subr.mxu0 0.0
  %1980 = vmatpush1.msra.mxu0 0.0
  %1981 = vmatprep.subr.mxu0 0.0
  %1982 = vmatpush1.msra.mxu0 0.0
  %1983 = vmatprep.subr.mxu0 0.0
  %1984 = vmatpush1.msra.mxu0 0.0
  %1985 = vmatprep.subr.mxu0 0.0
  %1986 = vmatpush1.msra.mxu0 0.0
  %1987 = vmatprep.subr.mxu0 0.0
  %1988 = vmatpush1.msra.mxu0 0.0
  %1989 = vmatprep.subr.mxu0 0.0
  %1990 = vmatpush1.msra.mxu0 0.0
  %1991 = vmatprep.subr.mxu0 0.0
  %1992 = vmatpush1.msra.mxu0 0.0
  %1993 = vmatprep.subr.mxu0 0.0
  %1994 = vmatpush1.msra.mxu0 0.0
  %1995 = vmatprep.subr.mxu0 0.0
  %1996 = vmatpush1.msra.mxu0 0.0
  %1997 = vmatprep.subr.mxu0 0.0
  %1998 = vmatpush1.msra.mxu0 0.0
  %1999 = vmatprep.subr.mxu0 0.0
  %2000 = vmatpush1.msra.mxu0 0.0
  %2001 = vmatprep.subr.mxu0 0.0
  %2002 = vmatpush1.msra.mxu0 0.0
  %2003 = vmatprep.subr.mxu0 0.0
  %2004 = vmatpush1.msra.mxu0 0.0
  %2005 = vmatprep.subr.mxu0 0.0
  %2006 = vmatpush1.msra.mxu0 0.0
  %2007 = vmatprep.subr.mxu0 0.0
  %2008 = vmatpush1.msra.mxu0 0.0
  %2009 = vmatprep.mubr.f32.mxu0 0.0
  %2010 = vmatmul.mubr.f32.gmra.mrb[0].mxu0 %v1645
  %v2011 = vpop.f32.mrb[0].mxu0
  %v2012 = vadd.f32 0.0, %v2011
  %v2013 = vpop.f32.mrb[0].mxu0
  %2014 = vmatprep.mubr.f32.mxu0 0.0
  %2015 = vmatmul.mubr.f32.gmra.mrb[0].mxu0 %v1646
  %v2016 = vpop.f32.mrb[0].mxu0
  %v2017 = vadd.f32 0.0, %v2016
  %v2018 = vpop.f32.mrb[0].mxu0
  %2019 = vdwg.mxu0
  %v2020 = vadd.f32 %v1943, %v2012
  %v2021 = vadd.f32 %v1944, %v2017
  %v2022 = vxor.u32 %v2020, 2147483648
  %v2023 = vxor.u32 %v2021, 2147483648
  %v2024 = vmul.f32 %v2022, 1.442695
  %v2025 = vpow.pop %v2024
  %v2026 = vmul.f32 %v2023, 1.442695
  %v2027 = vpow.pop %v2026
  %v2028 = vadd.f32 %v2025, 1.0
  %v2029 = vadd.f32 %v2027, 1.0
  %v2030 = vrcp.pop %v2028
  %v2031 = vmul.f32 1.0, %v2030
  %v2032 = vrcp.pop %v2029
  %v2033 = vmul.f32 1.0, %v2032
  %v2034 = vtanh.pop %v1939
  %v2035 = vtanh.pop %v1940
  %v2036 = vmul.f32 %v2031, %v2034
  %v2037 = vmul.f32 %v2033, %v2035
  %s2038 = sadd.s32 %s32, 4
  %v2039 = vstv %s2038
  %vm2040 = vcmp.lt.s32.totalorder %v2039, %v30
  %vm2041 = vcmp.lt.s32.totalorder %v2039, %v31
  %v2042 = vsel %vm2040, 1, 0
  %v2043 = vsel %vm2041, 1, 0
  %2044 = vset.pattern.permute.xlu0 0
  %2045 = vperm.xlu0 %2044, %v2042
  %v2046 = vpop.permute.xlu0 %2045
  %2047 = vset.pattern.permute.xlu0 0
  %2048 = vperm.xlu0 %2047, %v2043
  %v2049 = vpop.permute.xlu0 %2048
  %vm2050 = vcmp.eq.s32.totalorder %v2046, 1
  %vm2051 = vcmp.eq.s32.totalorder %v2049, 1
  %v2052 = vsel %vm2050, %v2036, 0.0
  %v2053 = vsel %vm2051, %v2037, 0.0
  %v2054 = vadd.f32 %v1663, %v2052
  %v2055 = vadd.f32 %v1664, %v2053
  %s2056 = scalar_lea.vmem %s0, 160
  %v2057 = vld [vmem:[%s2056] sm:$0xf]
  %v2058 = vld [vmem:[%s2056 + $0x10] sm:$0xf]
  %v2059 = vunpack.c.l.bf16 %v2057
  %v2060 = vunpack.c.l.bf16 %v2058
  %2061 = vmatprep.subr.mxu0 0.0
  %2062 = vmatpush1.msra.mxu0 %v43
  %2063 = vmatprep.subr.mxu0 0.0
  %2064 = vmatpush1.msra.mxu0 %v44
  %2065 = vmatprep.subr.mxu0 0.0
  %2066 = vmatpush1.msra.mxu0 %v45
  %2067 = vmatprep.subr.mxu0 0.0
  %2068 = vmatpush1.msra.mxu0 %v46
  %2069 = vmatprep.subr.mxu0 0.0
  %2070 = vmatpush1.msra.mxu0 %v47
  %2071 = vmatprep.subr.mxu0 0.0
  %2072 = vmatpush1.msra.mxu0 %v48
  %2073 = vmatprep.subr.mxu0 0.0
  %2074 = vmatpush1.msra.mxu0 %v49
  %2075 = vmatprep.subr.mxu0 0.0
  %2076 = vmatpush1.msra.mxu0 %v50
  %2077 = vmatprep.subr.mxu0 0.0
  %2078 = vmatpush1.msra.mxu0 %v51
  %2079 = vmatprep.subr.mxu0 0.0
  %2080 = vmatpush1.msra.mxu0 %v52
  %2081 = vmatprep.subr.mxu0 0.0
  %2082 = vmatpush1.msra.mxu0 %v53
  %2083 = vmatprep.subr.mxu0 0.0
  %2084 = vmatpush1.msra.mxu0 %v54
  %2085 = vmatprep.subr.mxu0 0.0
  %2086 = vmatpush1.msra.mxu0 %v55
  %2087 = vmatprep.subr.mxu0 0.0
  %2088 = vmatpush1.msra.mxu0 %v56
  %2089 = vmatprep.subr.mxu0 0.0
  %2090 = vmatpush1.msra.mxu0 %v57
  %2091 = vmatprep.subr.mxu0 0.0
  %2092 = vmatpush1.msra.mxu0 %v58
  %2093 = vmatprep.subr.mxu0 0.0
  %2094 = vmatpush1.msra.mxu0 0.0
  %2095 = vmatprep.subr.mxu0 0.0
  %2096 = vmatpush1.msra.mxu0 0.0
  %2097 = vmatprep.subr.mxu0 0.0
  %2098 = vmatpush1.msra.mxu0 0.0
  %2099 = vmatprep.subr.mxu0 0.0
  %2100 = vmatpush1.msra.mxu0 0.0
  %2101 = vmatprep.subr.mxu0 0.0
  %2102 = vmatpush1.msra.mxu0 0.0
  %2103 = vmatprep.subr.mxu0 0.0
  %2104 = vmatpush1.msra.mxu0 0.0
  %2105 = vmatprep.subr.mxu0 0.0
  %2106 = vmatpush1.msra.mxu0 0.0
  %2107 = vmatprep.subr.mxu0 0.0
  %2108 = vmatpush1.msra.mxu0 0.0
  %2109 = vmatprep.subr.mxu0 0.0
  %2110 = vmatpush1.msra.mxu0 0.0
  %2111 = vmatprep.subr.mxu0 0.0
  %2112 = vmatpush1.msra.mxu0 0.0
  %2113 = vmatprep.subr.mxu0 0.0
  %2114 = vmatpush1.msra.mxu0 0.0
  %2115 = vmatprep.subr.mxu0 0.0
  %2116 = vmatpush1.msra.mxu0 0.0
  %2117 = vmatprep.subr.mxu0 0.0
  %2118 = vmatpush1.msra.mxu0 0.0
  %2119 = vmatprep.subr.mxu0 0.0
  %2120 = vmatpush1.msra.mxu0 0.0
  %2121 = vmatprep.subr.mxu0 0.0
  %2122 = vmatpush1.msra.mxu0 0.0
  %2123 = vmatprep.subr.mxu0 0.0
  %2124 = vmatpush1.msra.mxu0 0.0
  %2125 = vmatprep.mubr.f32.mxu0 0.0
  %2126 = vmatmul.mubr.f32.gmra.mrb[0].mxu0 %v2036
  %v2127 = vpop.f32.mrb[0].mxu0
  %v2128 = vadd.f32 0.0, %v2127
  %v2129 = vpop.f32.mrb[0].mxu0
  %2130 = vmatprep.mubr.f32.mxu0 0.0
  %2131 = vmatmul.mubr.f32.gmra.mrb[0].mxu0 %v2037
  %v2132 = vpop.f32.mrb[0].mxu0
  %v2133 = vadd.f32 0.0, %v2132
  %v2134 = vpop.f32.mrb[0].mxu0
  %2135 = vdwg.mxu0
  %v2136 = vadd.f32 %v2059, %v2128
  %v2137 = vadd.f32 %v2060, %v2133
  %v2138 = vxor.u32 %v2136, 2147483648
  %v2139 = vxor.u32 %v2137, 2147483648
  %v2140 = vmul.f32 %v2138, 1.442695
  %v2141 = vpow.pop %v2140
  %v2142 = vmul.f32 %v2139, 1.442695
  %v2143 = vpow.pop %v2142
  %v2144 = vadd.f32 %v2141, 1.0
  %v2145 = vadd.f32 %v2143, 1.0
  %v2146 = vrcp.pop %v2144
  %v2147 = vmul.f32 1.0, %v2146
  %v2148 = vrcp.pop %v2145
  %v2149 = vmul.f32 1.0, %v2148
  %v2150 = vld [vmem:[%s2056 + $0x8] sm:$0xf]
  %v2151 = vld [vmem:[%s2056 + $0x18] sm:$0xf]
  %v2152 = vunpack.c.l.bf16 %v2150
  %v2153 = vunpack.c.l.bf16 %v2151
  %2154 = vmatprep.subr.mxu0 0.0
  %2155 = vmatpush1.msra.mxu0 %v152
  %2156 = vmatprep.subr.mxu0 0.0
  %2157 = vmatpush1.msra.mxu0 %v153
  %2158 = vmatprep.subr.mxu0 0.0
  %2159 = vmatpush1.msra.mxu0 %v154
  %2160 = vmatprep.subr.mxu0 0.0
  %2161 = vmatpush1.msra.mxu0 %v155
  %2162 = vmatprep.subr.mxu0 0.0
  %2163 = vmatpush1.msra.mxu0 %v156
  %2164 = vmatprep.subr.mxu0 0.0
  %2165 = vmatpush1.msra.mxu0 %v157
  %2166 = vmatprep.subr.mxu0 0.0
  %2167 = vmatpush1.msra.mxu0 %v158
  %2168 = vmatprep.subr.mxu0 0.0
  %2169 = vmatpush1.msra.mxu0 %v159
  %2170 = vmatprep.subr.mxu0 0.0
  %2171 = vmatpush1.msra.mxu0 %v160
  %2172 = vmatprep.subr.mxu0 0.0
  %2173 = vmatpush1.msra.mxu0 %v161
  %2174 = vmatprep.subr.mxu0 0.0
  %2175 = vmatpush1.msra.mxu0 %v162
  %2176 = vmatprep.subr.mxu0 0.0
  %2177 = vmatpush1.msra.mxu0 %v163
  %2178 = vmatprep.subr.mxu0 0.0
  %2179 = vmatpush1.msra.mxu0 %v164
  %2180 = vmatprep.subr.mxu0 0.0
  %2181 = vmatpush1.msra.mxu0 %v165
  %2182 = vmatprep.subr.mxu0 0.0
  %2183 = vmatpush1.msra.mxu0 %v166
  %2184 = vmatprep.subr.mxu0 0.0
  %2185 = vmatpush1.msra.mxu0 %v167
  %2186 = vmatprep.subr.mxu0 0.0
  %2187 = vmatpush1.msra.mxu0 0.0
  %2188 = vmatprep.subr.mxu0 0.0
  %2189 = vmatpush1.msra.mxu0 0.0
  %2190 = vmatprep.subr.mxu0 0.0
  %2191 = vmatpush1.msra.mxu0 0.0
  %2192 = vmatprep.subr.mxu0 0.0
  %2193 = vmatpush1.msra.mxu0 0.0
  %2194 = vmatprep.subr.mxu0 0.0
  %2195 = vmatpush1.msra.mxu0 0.0
  %2196 = vmatprep.subr.mxu0 0.0
  %2197 = vmatpush1.msra.mxu0 0.0
  %2198 = vmatprep.subr.mxu0 0.0
  %2199 = vmatpush1.msra.mxu0 0.0
  %2200 = vmatprep.subr.mxu0 0.0
  %2201 = vmatpush1.msra.mxu0 0.0
  %2202 = vmatprep.subr.mxu0 0.0
  %2203 = vmatpush1.msra.mxu0 0.0
  %2204 = vmatprep.subr.mxu0 0.0
  %2205 = vmatpush1.msra.mxu0 0.0
  %2206 = vmatprep.subr.mxu0 0.0
  %2207 = vmatpush1.msra.mxu0 0.0
  %2208 = vmatprep.subr.mxu0 0.0
  %2209 = vmatpush1.msra.mxu0 0.0
  %2210 = vmatprep.subr.mxu0 0.0
  %2211 = vmatpush1.msra.mxu0 0.0
  %2212 = vmatprep.subr.mxu0 0.0
  %2213 = vmatpush1.msra.mxu0 0.0
  %2214 = vmatprep.subr.mxu0 0.0
  %2215 = vmatpush1.msra.mxu0 0.0
  %2216 = vmatprep.subr.mxu0 0.0
  %2217 = vmatpush1.msra.mxu0 0.0
  %2218 = vmatprep.mubr.f32.mxu0 0.0
  %2219 = vmatmul.mubr.f32.gmra.mrb[0].mxu0 %v2036
  %v2220 = vpop.f32.mrb[0].mxu0
  %v2221 = vadd.f32 0.0, %v2220
  %v2222 = vpop.f32.mrb[0].mxu0
  %2223 = vmatprep.mubr.f32.mxu0 0.0
  %2224 = vmatmul.mubr.f32.gmra.mrb[0].mxu0 %v2037
  %v2225 = vpop.f32.mrb[0].mxu0
  %v2226 = vadd.f32 0.0, %v2225
  %v2227 = vpop.f32.mrb[0].mxu0
  %2228 = vdwg.mxu0
  %v2229 = vadd.f32 %v2152, %v2221
  %v2230 = vadd.f32 %v2153, %v2226
  %v2231 = vtanh.pop %v2229
  %v2232 = vtanh.pop %v2230
  %v2233 = vmul.f32 %v2147, %v2231
  %v2234 = vmul.f32 %v2149, %v2232
  %v2235 = vld [vmem:[%s2056 + $0x4] sm:$0xf]
  %v2236 = vld [vmem:[%s2056 + $0x14] sm:$0xf]
  %v2237 = vunpack.c.l.bf16 %v2235
  %v2238 = vunpack.c.l.bf16 %v2236
  %2239 = vmatprep.subr.mxu0 0.0
  %2240 = vmatpush1.msra.mxu0 %v253
  %2241 = vmatprep.subr.mxu0 0.0
  %2242 = vmatpush1.msra.mxu0 %v254
  %2243 = vmatprep.subr.mxu0 0.0
  %2244 = vmatpush1.msra.mxu0 %v255
  %2245 = vmatprep.subr.mxu0 0.0
  %2246 = vmatpush1.msra.mxu0 %v256
  %2247 = vmatprep.subr.mxu0 0.0
  %2248 = vmatpush1.msra.mxu0 %v257
  %2249 = vmatprep.subr.mxu0 0.0
  %2250 = vmatpush1.msra.mxu0 %v258
  %2251 = vmatprep.subr.mxu0 0.0
  %2252 = vmatpush1.msra.mxu0 %v259
  %2253 = vmatprep.subr.mxu0 0.0
  %2254 = vmatpush1.msra.mxu0 %v260
  %2255 = vmatprep.subr.mxu0 0.0
  %2256 = vmatpush1.msra.mxu0 %v261
  %2257 = vmatprep.subr.mxu0 0.0
  %2258 = vmatpush1.msra.mxu0 %v262
  %2259 = vmatprep.subr.mxu0 0.0
  %2260 = vmatpush1.msra.mxu0 %v263
  %2261 = vmatprep.subr.mxu0 0.0
  %2262 = vmatpush1.msra.mxu0 %v264
  %2263 = vmatprep.subr.mxu0 0.0
  %2264 = vmatpush1.msra.mxu0 %v265
  %2265 = vmatprep.subr.mxu0 0.0
  %2266 = vmatpush1.msra.mxu0 %v266
  %2267 = vmatprep.subr.mxu0 0.0
  %2268 = vmatpush1.msra.mxu0 %v267
  %2269 = vmatprep.subr.mxu0 0.0
  %2270 = vmatpush1.msra.mxu0 %v268
  %2271 = vmatprep.subr.mxu0 0.0
  %2272 = vmatpush1.msra.mxu0 0.0
  %2273 = vmatprep.subr.mxu0 0.0
  %2274 = vmatpush1.msra.mxu0 0.0
  %2275 = vmatprep.subr.mxu0 0.0
  %2276 = vmatpush1.msra.mxu0 0.0
  %2277 = vmatprep.subr.mxu0 0.0
  %2278 = vmatpush1.msra.mxu0 0.0
  %2279 = vmatprep.subr.mxu0 0.0
  %2280 = vmatpush1.msra.mxu0 0.0
  %2281 = vmatprep.subr.mxu0 0.0
  %2282 = vmatpush1.msra.mxu0 0.0
  %2283 = vmatprep.subr.mxu0 0.0
  %2284 = vmatpush1.msra.mxu0 0.0
  %2285 = vmatprep.subr.mxu0 0.0
  %2286 = vmatpush1.msra.mxu0 0.0
  %2287 = vmatprep.subr.mxu0 0.0
  %2288 = vmatpush1.msra.mxu0 0.0
  %2289 = vmatprep.subr.mxu0 0.0
  %2290 = vmatpush1.msra.mxu0 0.0
  %2291 = vmatprep.subr.mxu0 0.0
  %2292 = vmatpush1.msra.mxu0 0.0
  %2293 = vmatprep.subr.mxu0 0.0
  %2294 = vmatpush1.msra.mxu0 0.0
  %2295 = vmatprep.subr.mxu0 0.0
  %2296 = vmatpush1.msra.mxu0 0.0
  %2297 = vmatprep.subr.mxu0 0.0
  %2298 = vmatpush1.msra.mxu0 0.0
  %2299 = vmatprep.subr.mxu0 0.0
  %2300 = vmatpush1.msra.mxu0 0.0
  %2301 = vmatprep.subr.mxu0 0.0
  %2302 = vmatpush1.msra.mxu0 0.0
  %2303 = vmatprep.mubr.f32.mxu0 0.0
  %2304 = vmatmul.mubr.f32.gmra.mrb[0].mxu0 %v2036
  %v2305 = vpop.f32.mrb[0].mxu0
  %v2306 = vadd.f32 0.0, %v2305
  %v2307 = vpop.f32.mrb[0].mxu0
  %2308 = vmatprep.mubr.f32.mxu0 0.0
  %2309 = vmatmul.mubr.f32.gmra.mrb[0].mxu0 %v2037
  %v2310 = vpop.f32.mrb[0].mxu0
  %v2311 = vadd.f32 0.0, %v2310
  %v2312 = vpop.f32.mrb[0].mxu0
  %2313 = vdwg.mxu0
  %v2314 = vadd.f32 %v2237, %v2306
  %v2315 = vadd.f32 %v2238, %v2311
  %v2316 = vxor.u32 %v2314, 2147483648
  %v2317 = vxor.u32 %v2315, 2147483648
  %v2318 = vmul.f32 %v2316, 1.442695
  %v2319 = vpow.pop %v2318
  %v2320 = vmul.f32 %v2317, 1.442695
  %v2321 = vpow.pop %v2320
  %v2322 = vadd.f32 %v2319, 1.0
  %v2323 = vadd.f32 %v2321, 1.0
  %v2324 = vrcp.pop %v2322
  %v2325 = vmul.f32 1.0, %v2324
  %v2326 = vrcp.pop %v2323
  %v2327 = vmul.f32 1.0, %v2326
  %v2328 = vmul.f32 %v2325, %v1939
  %v2329 = vmul.f32 %v2327, %v1940
  %v2330 = vadd.f32 %v2328, %v2233
  %v2331 = vadd.f32 %v2329, %v2234
  %v2332 = vld [vmem:[%s2056 + $0xc] sm:$0xf]
  %v2333 = vld [vmem:[%s2056 + $0x1c] sm:$0xf]
  %v2334 = vunpack.c.l.bf16 %v2332
  %v2335 = vunpack.c.l.bf16 %v2333
  %2336 = vmatprep.subr.mxu0 0.0
  %2337 = vmatpush1.msra.mxu0 %v366
  %2338 = vmatprep.subr.mxu0 0.0
  %2339 = vmatpush1.msra.mxu0 %v367
  %2340 = vmatprep.subr.mxu0 0.0
  %2341 = vmatpush1.msra.mxu0 %v368
  %2342 = vmatprep.subr.mxu0 0.0
  %2343 = vmatpush1.msra.mxu0 %v369
  %2344 = vmatprep.subr.mxu0 0.0
  %2345 = vmatpush1.msra.mxu0 %v370
  %2346 = vmatprep.subr.mxu0 0.0
  %2347 = vmatpush1.msra.mxu0 %v371
  %2348 = vmatprep.subr.mxu0 0.0
  %2349 = vmatpush1.msra.mxu0 %v372
  %2350 = vmatprep.subr.mxu0 0.0
  %2351 = vmatpush1.msra.mxu0 %v373
  %2352 = vmatprep.subr.mxu0 0.0
  %2353 = vmatpush1.msra.mxu0 %v374
  %2354 = vmatprep.subr.mxu0 0.0
  %2355 = vmatpush1.msra.mxu0 %v375
  %2356 = vmatprep.subr.mxu0 0.0
  %2357 = vmatpush1.msra.mxu0 %v376
  %2358 = vmatprep.subr.mxu0 0.0
  %2359 = vmatpush1.msra.mxu0 %v377
  %2360 = vmatprep.subr.mxu0 0.0
  %2361 = vmatpush1.msra.mxu0 %v378
  %2362 = vmatprep.subr.mxu0 0.0
  %2363 = vmatpush1.msra.mxu0 %v379
  %2364 = vmatprep.subr.mxu0 0.0
  %2365 = vmatpush1.msra.mxu0 %v380
  %2366 = vmatprep.subr.mxu0 0.0
  %2367 = vmatpush1.msra.mxu0 %v381
  %2368 = vmatprep.subr.mxu0 0.0
  %2369 = vmatpush1.msra.mxu0 0.0
  %2370 = vmatprep.subr.mxu0 0.0
  %2371 = vmatpush1.msra.mxu0 0.0
  %2372 = vmatprep.subr.mxu0 0.0
  %2373 = vmatpush1.msra.mxu0 0.0
  %2374 = vmatprep.subr.mxu0 0.0
  %2375 = vmatpush1.msra.mxu0 0.0
  %2376 = vmatprep.subr.mxu0 0.0
  %2377 = vmatpush1.msra.mxu0 0.0
  %2378 = vmatprep.subr.mxu0 0.0
  %2379 = vmatpush1.msra.mxu0 0.0
  %2380 = vmatprep.subr.mxu0 0.0
  %2381 = vmatpush1.msra.mxu0 0.0
  %2382 = vmatprep.subr.mxu0 0.0
  %2383 = vmatpush1.msra.mxu0 0.0
  %2384 = vmatprep.subr.mxu0 0.0
  %2385 = vmatpush1.msra.mxu0 0.0
  %2386 = vmatprep.subr.mxu0 0.0
  %2387 = vmatpush1.msra.mxu0 0.0
  %2388 = vmatprep.subr.mxu0 0.0
  %2389 = vmatpush1.msra.mxu0 0.0
  %2390 = vmatprep.subr.mxu0 0.0
  %2391 = vmatpush1.msra.mxu0 0.0
  %2392 = vmatprep.subr.mxu0 0.0
  %2393 = vmatpush1.msra.mxu0 0.0
  %2394 = vmatprep.subr.mxu0 0.0
  %2395 = vmatpush1.msra.mxu0 0.0
  %2396 = vmatprep.subr.mxu0 0.0
  %2397 = vmatpush1.msra.mxu0 0.0
  %2398 = vmatprep.subr.mxu0 0.0
  %2399 = vmatpush1.msra.mxu0 0.0
  %2400 = vmatprep.mubr.f32.mxu0 0.0
  %2401 = vmatmul.mubr.f32.gmra.mrb[0].mxu0 %v2036
  %v2402 = vpop.f32.mrb[0].mxu0
  %v2403 = vadd.f32 0.0, %v2402
  %v2404 = vpop.f32.mrb[0].mxu0
  %2405 = vmatprep.mubr.f32.mxu0 0.0
  %2406 = vmatmul.mubr.f32.gmra.mrb[0].mxu0 %v2037
  %v2407 = vpop.f32.mrb[0].mxu0
  %v2408 = vadd.f32 0.0, %v2407
  %v2409 = vpop.f32.mrb[0].mxu0
  %2410 = vdwg.mxu0
  %v2411 = vadd.f32 %v2334, %v2403
  %v2412 = vadd.f32 %v2335, %v2408
  %v2413 = vxor.u32 %v2411, 2147483648
  %v2414 = vxor.u32 %v2412, 2147483648
  %v2415 = vmul.f32 %v2413, 1.442695
  %v2416 = vpow.pop %v2415
  %v2417 = vmul.f32 %v2414, 1.442695
  %v2418 = vpow.pop %v2417
  %v2419 = vadd.f32 %v2416, 1.0
  %v2420 = vadd.f32 %v2418, 1.0
  %v2421 = vrcp.pop %v2419
  %v2422 = vmul.f32 1.0, %v2421
  %v2423 = vrcp.pop %v2420
  %v2424 = vmul.f32 1.0, %v2423
  %v2425 = vtanh.pop %v2330
  %v2426 = vtanh.pop %v2331
  %v2427 = vmul.f32 %v2422, %v2425
  %v2428 = vmul.f32 %v2424, %v2426
  %s2429 = sadd.s32 %s32, 5
  %v2430 = vstv %s2429
  %vm2431 = vcmp.lt.s32.totalorder %v2430, %v30
  %vm2432 = vcmp.lt.s32.totalorder %v2430, %v31
  %v2433 = vsel %vm2431, 1, 0
  %v2434 = vsel %vm2432, 1, 0
  %2435 = vset.pattern.permute.xlu0 0
  %2436 = vperm.xlu0 %2435, %v2433
  %v2437 = vpop.permute.xlu0 %2436
  %2438 = vset.pattern.permute.xlu0 0
  %2439 = vperm.xlu0 %2438, %v2434
  %v2440 = vpop.permute.xlu0 %2439
  %vm2441 = vcmp.eq.s32.totalorder %v2437, 1
  %vm2442 = vcmp.eq.s32.totalorder %v2440, 1
  %v2443 = vsel %vm2441, %v2427, 0.0
  %v2444 = vsel %vm2442, %v2428, 0.0
  %v2445 = vadd.f32 %v2054, %v2443
  %v2446 = vadd.f32 %v2055, %v2444
  %s2447 = scalar_lea.vmem %s0, 192
  %v2448 = vld [vmem:[%s2447] sm:$0xf]
  %v2449 = vld [vmem:[%s2447 + $0x10] sm:$0xf]
  %v2450 = vunpack.c.l.bf16 %v2448
  %v2451 = vunpack.c.l.bf16 %v2449
  %2452 = vmatprep.subr.mxu0 0.0
  %2453 = vmatpush1.msra.mxu0 %v43
  %2454 = vmatprep.subr.mxu0 0.0
  %2455 = vmatpush1.msra.mxu0 %v44
  %2456 = vmatprep.subr.mxu0 0.0
  %2457 = vmatpush1.msra.mxu0 %v45
  %2458 = vmatprep.subr.mxu0 0.0
  %2459 = vmatpush1.msra.mxu0 %v46
  %2460 = vmatprep.subr.mxu0 0.0
  %2461 = vmatpush1.msra.mxu0 %v47
  %2462 = vmatprep.subr.mxu0 0.0
  %2463 = vmatpush1.msra.mxu0 %v48
  %2464 = vmatprep.subr.mxu0 0.0
  %2465 = vmatpush1.msra.mxu0 %v49
  %2466 = vmatprep.subr.mxu0 0.0
  %2467 = vmatpush1.msra.mxu0 %v50
  %2468 = vmatprep.subr.mxu0 0.0
  %2469 = vmatpush1.msra.mxu0 %v51
  %2470 = vmatprep.subr.mxu0 0.0
  %2471 = vmatpush1.msra.mxu0 %v52
  %2472 = vmatprep.subr.mxu0 0.0
  %2473 = vmatpush1.msra.mxu0 %v53
  %2474 = vmatprep.subr.mxu0 0.0
  %2475 = vmatpush1.msra.mxu0 %v54
  %2476 = vmatprep.subr.mxu0 0.0
  %2477 = vmatpush1.msra.mxu0 %v55
  %2478 = vmatprep.subr.mxu0 0.0
  %2479 = vmatpush1.msra.mxu0 %v56
  %2480 = vmatprep.subr.mxu0 0.0
  %2481 = vmatpush1.msra.mxu0 %v57
  %2482 = vmatprep.subr.mxu0 0.0
  %2483 = vmatpush1.msra.mxu0 %v58
  %2484 = vmatprep.subr.mxu0 0.0
  %2485 = vmatpush1.msra.mxu0 0.0
  %2486 = vmatprep.subr.mxu0 0.0
  %2487 = vmatpush1.msra.mxu0 0.0
  %2488 = vmatprep.subr.mxu0 0.0
  %2489 = vmatpush1.msra.mxu0 0.0
  %2490 = vmatprep.subr.mxu0 0.0
  %2491 = vmatpush1.msra.mxu0 0.0
  %2492 = vmatprep.subr.mxu0 0.0
  %2493 = vmatpush1.msra.mxu0 0.0
  %2494 = vmatprep.subr.mxu0 0.0
  %2495 = vmatpush1.msra.mxu0 0.0
  %2496 = vmatprep.subr.mxu0 0.0
  %2497 = vmatpush1.msra.mxu0 0.0
  %2498 = vmatprep.subr.mxu0 0.0
  %2499 = vmatpush1.msra.mxu0 0.0
  %2500 = vmatprep.subr.mxu0 0.0
  %2501 = vmatpush1.msra.mxu0 0.0
  %2502 = vmatprep.subr.mxu0 0.0
  %2503 = vmatpush1.msra.mxu0 0.0
  %2504 = vmatprep.subr.mxu0 0.0
  %2505 = vmatpush1.msra.mxu0 0.0
  %2506 = vmatprep.subr.mxu0 0.0
  %2507 = vmatpush1.msra.mxu0 0.0
  %2508 = vmatprep.subr.mxu0 0.0
  %2509 = vmatpush1.msra.mxu0 0.0
  %2510 = vmatprep.subr.mxu0 0.0
  %2511 = vmatpush1.msra.mxu0 0.0
  %2512 = vmatprep.subr.mxu0 0.0
  %2513 = vmatpush1.msra.mxu0 0.0
  %2514 = vmatprep.subr.mxu0 0.0
  %2515 = vmatpush1.msra.mxu0 0.0
  %2516 = vmatprep.mubr.f32.mxu0 0.0
  %2517 = vmatmul.mubr.f32.gmra.mrb[0].mxu0 %v2427
  %v2518 = vpop.f32.mrb[0].mxu0
  %v2519 = vadd.f32 0.0, %v2518
  %v2520 = vpop.f32.mrb[0].mxu0
  %2521 = vmatprep.mubr.f32.mxu0 0.0
  %2522 = vmatmul.mubr.f32.gmra.mrb[0].mxu0 %v2428
  %v2523 = vpop.f32.mrb[0].mxu0
  %v2524 = vadd.f32 0.0, %v2523
  %v2525 = vpop.f32.mrb[0].mxu0
  %2526 = vdwg.mxu0
  %v2527 = vadd.f32 %v2450, %v2519
  %v2528 = vadd.f32 %v2451, %v2524
  %v2529 = vxor.u32 %v2527, 2147483648
  %v2530 = vxor.u32 %v2528, 2147483648
  %v2531 = vmul.f32 %v2529, 1.442695
  %v2532 = vpow.pop %v2531
  %v2533 = vmul.f32 %v2530, 1.442695
  %v2534 = vpow.pop %v2533
  %v2535 = vadd.f32 %v2532, 1.0
  %v2536 = vadd.f32 %v2534, 1.0
  %v2537 = vrcp.pop %v2535
  %v2538 = vmul.f32 1.0, %v2537
  %v2539 = vrcp.pop %v2536
  %v2540 = vmul.f32 1.0, %v2539
  %v2541 = vld [vmem:[%s2447 + $0x8] sm:$0xf]
  %v2542 = vld [vmem:[%s2447 + $0x18] sm:$0xf]
  %v2543 = vunpack.c.l.bf16 %v2541
  %v2544 = vunpack.c.l.bf16 %v2542
  %2545 = vmatprep.subr.mxu0 0.0
  %2546 = vmatpush1.msra.mxu0 %v152
  %2547 = vmatprep.subr.mxu0 0.0
  %2548 = vmatpush1.msra.mxu0 %v153
  %2549 = vmatprep.subr.mxu0 0.0
  %2550 = vmatpush1.msra.mxu0 %v154
  %2551 = vmatprep.subr.mxu0 0.0
  %2552 = vmatpush1.msra.mxu0 %v155
  %2553 = vmatprep.subr.mxu0 0.0
  %2554 = vmatpush1.msra.mxu0 %v156
  %2555 = vmatprep.subr.mxu0 0.0
  %2556 = vmatpush1.msra.mxu0 %v157
  %2557 = vmatprep.subr.mxu0 0.0
  %2558 = vmatpush1.msra.mxu0 %v158
  %2559 = vmatprep.subr.mxu0 0.0
  %2560 = vmatpush1.msra.mxu0 %v159
  %2561 = vmatprep.subr.mxu0 0.0
  %2562 = vmatpush1.msra.mxu0 %v160
  %2563 = vmatprep.subr.mxu0 0.0
  %2564 = vmatpush1.msra.mxu0 %v161
  %2565 = vmatprep.subr.mxu0 0.0
  %2566 = vmatpush1.msra.mxu0 %v162
  %2567 = vmatprep.subr.mxu0 0.0
  %2568 = vmatpush1.msra.mxu0 %v163
  %2569 = vmatprep.subr.mxu0 0.0
  %2570 = vmatpush1.msra.mxu0 %v164
  %2571 = vmatprep.subr.mxu0 0.0
  %2572 = vmatpush1.msra.mxu0 %v165
  %2573 = vmatprep.subr.mxu0 0.0
  %2574 = vmatpush1.msra.mxu0 %v166
  %2575 = vmatprep.subr.mxu0 0.0
  %2576 = vmatpush1.msra.mxu0 %v167
  %2577 = vmatprep.subr.mxu0 0.0
  %2578 = vmatpush1.msra.mxu0 0.0
  %2579 = vmatprep.subr.mxu0 0.0
  %2580 = vmatpush1.msra.mxu0 0.0
  %2581 = vmatprep.subr.mxu0 0.0
  %2582 = vmatpush1.msra.mxu0 0.0
  %2583 = vmatprep.subr.mxu0 0.0
  %2584 = vmatpush1.msra.mxu0 0.0
  %2585 = vmatprep.subr.mxu0 0.0
  %2586 = vmatpush1.msra.mxu0 0.0
  %2587 = vmatprep.subr.mxu0 0.0
  %2588 = vmatpush1.msra.mxu0 0.0
  %2589 = vmatprep.subr.mxu0 0.0
  %2590 = vmatpush1.msra.mxu0 0.0
  %2591 = vmatprep.subr.mxu0 0.0
  %2592 = vmatpush1.msra.mxu0 0.0
  %2593 = vmatprep.subr.mxu0 0.0
  %2594 = vmatpush1.msra.mxu0 0.0
  %2595 = vmatprep.subr.mxu0 0.0
  %2596 = vmatpush1.msra.mxu0 0.0
  %2597 = vmatprep.subr.mxu0 0.0
  %2598 = vmatpush1.msra.mxu0 0.0
  %2599 = vmatprep.subr.mxu0 0.0
  %2600 = vmatpush1.msra.mxu0 0.0
  %2601 = vmatprep.subr.mxu0 0.0
  %2602 = vmatpush1.msra.mxu0 0.0
  %2603 = vmatprep.subr.mxu0 0.0
  %2604 = vmatpush1.msra.mxu0 0.0
  %2605 = vmatprep.subr.mxu0 0.0
  %2606 = vmatpush1.msra.mxu0 0.0
  %2607 = vmatprep.subr.mxu0 0.0
  %2608 = vmatpush1.msra.mxu0 0.0
  %2609 = vmatprep.mubr.f32.mxu0 0.0
  %2610 = vmatmul.mubr.f32.gmra.mrb[0].mxu0 %v2427
  %v2611 = vpop.f32.mrb[0].mxu0
  %v2612 = vadd.f32 0.0, %v2611
  %v2613 = vpop.f32.mrb[0].mxu0
  %2614 = vmatprep.mubr.f32.mxu0 0.0
  %2615 = vmatmul.mubr.f32.gmra.mrb[0].mxu0 %v2428
  %v2616 = vpop.f32.mrb[0].mxu0
  %v2617 = vadd.f32 0.0, %v2616
  %v2618 = vpop.f32.mrb[0].mxu0
  %2619 = vdwg.mxu0
  %v2620 = vadd.f32 %v2543, %v2612
  %v2621 = vadd.f32 %v2544, %v2617
  %v2622 = vtanh.pop %v2620
  %v2623 = vtanh.pop %v2621
  %v2624 = vmul.f32 %v2538, %v2622
  %v2625 = vmul.f32 %v2540, %v2623
  %v2626 = vld [vmem:[%s2447 + $0x4] sm:$0xf]
  %v2627 = vld [vmem:[%s2447 + $0x14] sm:$0xf]
  %v2628 = vunpack.c.l.bf16 %v2626
  %v2629 = vunpack.c.l.bf16 %v2627
  %2630 = vmatprep.subr.mxu0 0.0
  %2631 = vmatpush1.msra.mxu0 %v253
  %2632 = vmatprep.subr.mxu0 0.0
  %2633 = vmatpush1.msra.mxu0 %v254
  %2634 = vmatprep.subr.mxu0 0.0
  %2635 = vmatpush1.msra.mxu0 %v255
  %2636 = vmatprep.subr.mxu0 0.0
  %2637 = vmatpush1.msra.mxu0 %v256
  %2638 = vmatprep.subr.mxu0 0.0
  %2639 = vmatpush1.msra.mxu0 %v257
  %2640 = vmatprep.subr.mxu0 0.0
  %2641 = vmatpush1.msra.mxu0 %v258
  %2642 = vmatprep.subr.mxu0 0.0
  %2643 = vmatpush1.msra.mxu0 %v259
  %2644 = vmatprep.subr.mxu0 0.0
  %2645 = vmatpush1.msra.mxu0 %v260
  %2646 = vmatprep.subr.mxu0 0.0
  %2647 = vmatpush1.msra.mxu0 %v261
  %2648 = vmatprep.subr.mxu0 0.0
  %2649 = vmatpush1.msra.mxu0 %v262
  %2650 = vmatprep.subr.mxu0 0.0
  %2651 = vmatpush1.msra.mxu0 %v263
  %2652 = vmatprep.subr.mxu0 0.0
  %2653 = vmatpush1.msra.mxu0 %v264
  %2654 = vmatprep.subr.mxu0 0.0
  %2655 = vmatpush1.msra.mxu0 %v265
  %2656 = vmatprep.subr.mxu0 0.0
  %2657 = vmatpush1.msra.mxu0 %v266
  %2658 = vmatprep.subr.mxu0 0.0
  %2659 = vmatpush1.msra.mxu0 %v267
  %2660 = vmatprep.subr.mxu0 0.0
  %2661 = vmatpush1.msra.mxu0 %v268
  %2662 = vmatprep.subr.mxu0 0.0
  %2663 = vmatpush1.msra.mxu0 0.0
  %2664 = vmatprep.subr.mxu0 0.0
  %2665 = vmatpush1.msra.mxu0 0.0
  %2666 = vmatprep.subr.mxu0 0.0
  %2667 = vmatpush1.msra.mxu0 0.0
  %2668 = vmatprep.subr.mxu0 0.0
  %2669 = vmatpush1.msra.mxu0 0.0
  %2670 = vmatprep.subr.mxu0 0.0
  %2671 = vmatpush1.msra.mxu0 0.0
  %2672 = vmatprep.subr.mxu0 0.0
  %2673 = vmatpush1.msra.mxu0 0.0
  %2674 = vmatprep.subr.mxu0 0.0
  %2675 = vmatpush1.msra.mxu0 0.0
  %2676 = vmatprep.subr.mxu0 0.0
  %2677 = vmatpush1.msra.mxu0 0.0
  %2678 = vmatprep.subr.mxu0 0.0
  %2679 = vmatpush1.msra.mxu0 0.0
  %2680 = vmatprep.subr.mxu0 0.0
  %2681 = vmatpush1.msra.mxu0 0.0
  %2682 = vmatprep.subr.mxu0 0.0
  %2683 = vmatpush1.msra.mxu0 0.0
  %2684 = vmatprep.subr.mxu0 0.0
  %2685 = vmatpush1.msra.mxu0 0.0
  %2686 = vmatprep.subr.mxu0 0.0
  %2687 = vmatpush1.msra.mxu0 0.0
  %2688 = vmatprep.subr.mxu0 0.0
  %2689 = vmatpush1.msra.mxu0 0.0
  %2690 = vmatprep.subr.mxu0 0.0
  %2691 = vmatpush1.msra.mxu0 0.0
  %2692 = vmatprep.subr.mxu0 0.0
  %2693 = vmatpush1.msra.mxu0 0.0
  %2694 = vmatprep.mubr.f32.mxu0 0.0
  %2695 = vmatmul.mubr.f32.gmra.mrb[0].mxu0 %v2427
  %v2696 = vpop.f32.mrb[0].mxu0
  %v2697 = vadd.f32 0.0, %v2696
  %v2698 = vpop.f32.mrb[0].mxu0
  %2699 = vmatprep.mubr.f32.mxu0 0.0
  %2700 = vmatmul.mubr.f32.gmra.mrb[0].mxu0 %v2428
  %v2701 = vpop.f32.mrb[0].mxu0
  %v2702 = vadd.f32 0.0, %v2701
  %v2703 = vpop.f32.mrb[0].mxu0
  %2704 = vdwg.mxu0
  %v2705 = vadd.f32 %v2628, %v2697
  %v2706 = vadd.f32 %v2629, %v2702
  %v2707 = vxor.u32 %v2705, 2147483648
  %v2708 = vxor.u32 %v2706, 2147483648
  %v2709 = vmul.f32 %v2707, 1.442695
  %v2710 = vpow.pop %v2709
  %v2711 = vmul.f32 %v2708, 1.442695
  %v2712 = vpow.pop %v2711
  %v2713 = vadd.f32 %v2710, 1.0
  %v2714 = vadd.f32 %v2712, 1.0
  %v2715 = vrcp.pop %v2713
  %v2716 = vmul.f32 1.0, %v2715
  %v2717 = vrcp.pop %v2714
  %v2718 = vmul.f32 1.0, %v2717
  %v2719 = vmul.f32 %v2716, %v2330
  %v2720 = vmul.f32 %v2718, %v2331
  %v2721 = vadd.f32 %v2719, %v2624
  %v2722 = vadd.f32 %v2720, %v2625
  %v2723 = vld [vmem:[%s2447 + $0xc] sm:$0xf]
  %v2724 = vld [vmem:[%s2447 + $0x1c] sm:$0xf]
  %v2725 = vunpack.c.l.bf16 %v2723
  %v2726 = vunpack.c.l.bf16 %v2724
  %2727 = vmatprep.subr.mxu0 0.0
  %2728 = vmatpush1.msra.mxu0 %v366
  %2729 = vmatprep.subr.mxu0 0.0
  %2730 = vmatpush1.msra.mxu0 %v367
  %2731 = vmatprep.subr.mxu0 0.0
  %2732 = vmatpush1.msra.mxu0 %v368
  %2733 = vmatprep.subr.mxu0 0.0
  %2734 = vmatpush1.msra.mxu0 %v369
  %2735 = vmatprep.subr.mxu0 0.0
  %2736 = vmatpush1.msra.mxu0 %v370
  %2737 = vmatprep.subr.mxu0 0.0
  %2738 = vmatpush1.msra.mxu0 %v371
  %2739 = vmatprep.subr.mxu0 0.0
  %2740 = vmatpush1.msra.mxu0 %v372
  %2741 = vmatprep.subr.mxu0 0.0
  %2742 = vmatpush1.msra.mxu0 %v373
  %2743 = vmatprep.subr.mxu0 0.0
  %2744 = vmatpush1.msra.mxu0 %v374
  %2745 = vmatprep.subr.mxu0 0.0
  %2746 = vmatpush1.msra.mxu0 %v375
  %2747 = vmatprep.subr.mxu0 0.0
  %2748 = vmatpush1.msra.mxu0 %v376
  %2749 = vmatprep.subr.mxu0 0.0
  %2750 = vmatpush1.msra.mxu0 %v377
  %2751 = vmatprep.subr.mxu0 0.0
  %2752 = vmatpush1.msra.mxu0 %v378
  %2753 = vmatprep.subr.mxu0 0.0
  %2754 = vmatpush1.msra.mxu0 %v379
  %2755 = vmatprep.subr.mxu0 0.0
  %2756 = vmatpush1.msra.mxu0 %v380
  %2757 = vmatprep.subr.mxu0 0.0
  %2758 = vmatpush1.msra.mxu0 %v381
  %2759 = vmatprep.subr.mxu0 0.0
  %2760 = vmatpush1.msra.mxu0 0.0
  %2761 = vmatprep.subr.mxu0 0.0
  %2762 = vmatpush1.msra.mxu0 0.0
  %2763 = vmatprep.subr.mxu0 0.0
  %2764 = vmatpush1.msra.mxu0 0.0
  %2765 = vmatprep.subr.mxu0 0.0
  %2766 = vmatpush1.msra.mxu0 0.0
  %2767 = vmatprep.subr.mxu0 0.0
  %2768 = vmatpush1.msra.mxu0 0.0
  %2769 = vmatprep.subr.mxu0 0.0
  %2770 = vmatpush1.msra.mxu0 0.0
  %2771 = vmatprep.subr.mxu0 0.0
  %2772 = vmatpush1.msra.mxu0 0.0
  %2773 = vmatprep.subr.mxu0 0.0
  %2774 = vmatpush1.msra.mxu0 0.0
  %2775 = vmatprep.subr.mxu0 0.0
  %2776 = vmatpush1.msra.mxu0 0.0
  %2777 = vmatprep.subr.mxu0 0.0
  %2778 = vmatpush1.msra.mxu0 0.0
  %2779 = vmatprep.subr.mxu0 0.0
  %2780 = vmatpush1.msra.mxu0 0.0
  %2781 = vmatprep.subr.mxu0 0.0
  %2782 = vmatpush1.msra.mxu0 0.0
  %2783 = vmatprep.subr.mxu0 0.0
  %2784 = vmatpush1.msra.mxu0 0.0
  %2785 = vmatprep.subr.mxu0 0.0
  %2786 = vmatpush1.msra.mxu0 0.0
  %2787 = vmatprep.subr.mxu0 0.0
  %2788 = vmatpush1.msra.mxu0 0.0
  %2789 = vmatprep.subr.mxu0 0.0
  %2790 = vmatpush1.msra.mxu0 0.0
  %2791 = vmatprep.mubr.f32.mxu0 0.0
  %2792 = vmatmul.mubr.f32.gmra.mrb[0].mxu0 %v2427
  %v2793 = vpop.f32.mrb[0].mxu0
  %v2794 = vadd.f32 0.0, %v2793
  %v2795 = vpop.f32.mrb[0].mxu0
  %2796 = vmatprep.mubr.f32.mxu0 0.0
  %2797 = vmatmul.mubr.f32.gmra.mrb[0].mxu0 %v2428
  %v2798 = vpop.f32.mrb[0].mxu0
  %v2799 = vadd.f32 0.0, %v2798
  %v2800 = vpop.f32.mrb[0].mxu0
  %2801 = vdwg.mxu0
  %v2802 = vadd.f32 %v2725, %v2794
  %v2803 = vadd.f32 %v2726, %v2799
  %v2804 = vxor.u32 %v2802, 2147483648
  %v2805 = vxor.u32 %v2803, 2147483648
  %v2806 = vmul.f32 %v2804, 1.442695
  %v2807 = vpow.pop %v2806
  %v2808 = vmul.f32 %v2805, 1.442695
  %v2809 = vpow.pop %v2808
  %v2810 = vadd.f32 %v2807, 1.0
  %v2811 = vadd.f32 %v2809, 1.0
  %v2812 = vrcp.pop %v2810
  %v2813 = vmul.f32 1.0, %v2812
  %v2814 = vrcp.pop %v2811
  %v2815 = vmul.f32 1.0, %v2814
  %v2816 = vtanh.pop %v2721
  %v2817 = vtanh.pop %v2722
  %v2818 = vmul.f32 %v2813, %v2816
  %v2819 = vmul.f32 %v2815, %v2817
  %s2820 = sadd.s32 %s32, 6
  %v2821 = vstv %s2820
  %vm2822 = vcmp.lt.s32.totalorder %v2821, %v30
  %vm2823 = vcmp.lt.s32.totalorder %v2821, %v31
  %v2824 = vsel %vm2822, 1, 0
  %v2825 = vsel %vm2823, 1, 0
  %2826 = vset.pattern.permute.xlu0 0
  %2827 = vperm.xlu0 %2826, %v2824
  %v2828 = vpop.permute.xlu0 %2827
  %2829 = vset.pattern.permute.xlu0 0
  %2830 = vperm.xlu0 %2829, %v2825
  %v2831 = vpop.permute.xlu0 %2830
  %vm2832 = vcmp.eq.s32.totalorder %v2828, 1
  %vm2833 = vcmp.eq.s32.totalorder %v2831, 1
  %v2834 = vsel %vm2832, %v2818, 0.0
  %v2835 = vsel %vm2833, %v2819, 0.0
  %v2836 = vadd.f32 %v2445, %v2834
  %v2837 = vadd.f32 %v2446, %v2835
  %s2838 = scalar_lea.vmem %s0, 224
  %v2839 = vld [vmem:[%s2838] sm:$0xf]
  %v2840 = vld [vmem:[%s2838 + $0x10] sm:$0xf]
  %v2841 = vunpack.c.l.bf16 %v2839
  %v2842 = vunpack.c.l.bf16 %v2840
  %2843 = vmatprep.subr.mxu0 0.0
  %2844 = vmatpush1.msra.mxu0 %v43
  %2845 = vmatprep.subr.mxu0 0.0
  %2846 = vmatpush1.msra.mxu0 %v44
  %2847 = vmatprep.subr.mxu0 0.0
  %2848 = vmatpush1.msra.mxu0 %v45
  %2849 = vmatprep.subr.mxu0 0.0
  %2850 = vmatpush1.msra.mxu0 %v46
  %2851 = vmatprep.subr.mxu0 0.0
  %2852 = vmatpush1.msra.mxu0 %v47
  %2853 = vmatprep.subr.mxu0 0.0
  %2854 = vmatpush1.msra.mxu0 %v48
  %2855 = vmatprep.subr.mxu0 0.0
  %2856 = vmatpush1.msra.mxu0 %v49
  %2857 = vmatprep.subr.mxu0 0.0
  %2858 = vmatpush1.msra.mxu0 %v50
  %2859 = vmatprep.subr.mxu0 0.0
  %2860 = vmatpush1.msra.mxu0 %v51
  %2861 = vmatprep.subr.mxu0 0.0
  %2862 = vmatpush1.msra.mxu0 %v52
  %2863 = vmatprep.subr.mxu0 0.0
  %2864 = vmatpush1.msra.mxu0 %v53
  %2865 = vmatprep.subr.mxu0 0.0
  %2866 = vmatpush1.msra.mxu0 %v54
  %2867 = vmatprep.subr.mxu0 0.0
  %2868 = vmatpush1.msra.mxu0 %v55
  %2869 = vmatprep.subr.mxu0 0.0
  %2870 = vmatpush1.msra.mxu0 %v56
  %2871 = vmatprep.subr.mxu0 0.0
  %2872 = vmatpush1.msra.mxu0 %v57
  %2873 = vmatprep.subr.mxu0 0.0
  %2874 = vmatpush1.msra.mxu0 %v58
  %2875 = vmatprep.subr.mxu0 0.0
  %2876 = vmatpush1.msra.mxu0 0.0
  %2877 = vmatprep.subr.mxu0 0.0
  %2878 = vmatpush1.msra.mxu0 0.0
  %2879 = vmatprep.subr.mxu0 0.0
  %2880 = vmatpush1.msra.mxu0 0.0
  %2881 = vmatprep.subr.mxu0 0.0
  %2882 = vmatpush1.msra.mxu0 0.0
  %2883 = vmatprep.subr.mxu0 0.0
  %2884 = vmatpush1.msra.mxu0 0.0
  %2885 = vmatprep.subr.mxu0 0.0
  %2886 = vmatpush1.msra.mxu0 0.0
  %2887 = vmatprep.subr.mxu0 0.0
  %2888 = vmatpush1.msra.mxu0 0.0
  %2889 = vmatprep.subr.mxu0 0.0
  %2890 = vmatpush1.msra.mxu0 0.0
  %2891 = vmatprep.subr.mxu0 0.0
  %2892 = vmatpush1.msra.mxu0 0.0
  %2893 = vmatprep.subr.mxu0 0.0
  %2894 = vmatpush1.msra.mxu0 0.0
  %2895 = vmatprep.subr.mxu0 0.0
  %2896 = vmatpush1.msra.mxu0 0.0
  %2897 = vmatprep.subr.mxu0 0.0
  %2898 = vmatpush1.msra.mxu0 0.0
  %2899 = vmatprep.subr.mxu0 0.0
  %2900 = vmatpush1.msra.mxu0 0.0
  %2901 = vmatprep.subr.mxu0 0.0
  %2902 = vmatpush1.msra.mxu0 0.0
  %2903 = vmatprep.subr.mxu0 0.0
  %2904 = vmatpush1.msra.mxu0 0.0
  %2905 = vmatprep.subr.mxu0 0.0
  %2906 = vmatpush1.msra.mxu0 0.0
  %2907 = vmatprep.mubr.f32.mxu0 0.0
  %2908 = vmatmul.mubr.f32.gmra.mrb[0].mxu0 %v2818
  %v2909 = vpop.f32.mrb[0].mxu0
  %v2910 = vadd.f32 0.0, %v2909
  %v2911 = vpop.f32.mrb[0].mxu0
  %2912 = vmatprep.mubr.f32.mxu0 0.0
  %2913 = vmatmul.mubr.f32.gmra.mrb[0].mxu0 %v2819
  %v2914 = vpop.f32.mrb[0].mxu0
  %v2915 = vadd.f32 0.0, %v2914
  %v2916 = vpop.f32.mrb[0].mxu0
  %2917 = vdwg.mxu0
  %v2918 = vadd.f32 %v2841, %v2910
  %v2919 = vadd.f32 %v2842, %v2915
  %v2920 = vxor.u32 %v2918, 2147483648
  %v2921 = vxor.u32 %v2919, 2147483648
  %v2922 = vmul.f32 %v2920, 1.442695
  %v2923 = vpow.pop %v2922
  %v2924 = vmul.f32 %v2921, 1.442695
  %v2925 = vpow.pop %v2924
  %v2926 = vadd.f32 %v2923, 1.0
  %v2927 = vadd.f32 %v2925, 1.0
  %v2928 = vrcp.pop %v2926
  %v2929 = vmul.f32 1.0, %v2928
  %v2930 = vrcp.pop %v2927
  %v2931 = vmul.f32 1.0, %v2930
  %v2932 = vld [vmem:[%s2838 + $0x8] sm:$0xf]
  %v2933 = vld [vmem:[%s2838 + $0x18] sm:$0xf]
  %v2934 = vunpack.c.l.bf16 %v2932
  %v2935 = vunpack.c.l.bf16 %v2933
  %2936 = vmatprep.subr.mxu0 0.0
  %2937 = vmatpush1.msra.mxu0 %v152
  %2938 = vmatprep.subr.mxu0 0.0
  %2939 = vmatpush1.msra.mxu0 %v153
  %2940 = vmatprep.subr.mxu0 0.0
  %2941 = vmatpush1.msra.mxu0 %v154
  %2942 = vmatprep.subr.mxu0 0.0
  %2943 = vmatpush1.msra.mxu0 %v155
  %2944 = vmatprep.subr.mxu0 0.0
  %2945 = vmatpush1.msra.mxu0 %v156
  %2946 = vmatprep.subr.mxu0 0.0
  %2947 = vmatpush1.msra.mxu0 %v157
  %2948 = vmatprep.subr.mxu0 0.0
  %2949 = vmatpush1.msra.mxu0 %v158
  %2950 = vmatprep.subr.mxu0 0.0
  %2951 = vmatpush1.msra.mxu0 %v159
  %2952 = vmatprep.subr.mxu0 0.0
  %2953 = vmatpush1.msra.mxu0 %v160
  %2954 = vmatprep.subr.mxu0 0.0
  %2955 = vmatpush1.msra.mxu0 %v161
  %2956 = vmatprep.subr.mxu0 0.0
  %2957 = vmatpush1.msra.mxu0 %v162
  %2958 = vmatprep.subr.mxu0 0.0
  %2959 = vmatpush1.msra.mxu0 %v163
  %2960 = vmatprep.subr.mxu0 0.0
  %2961 = vmatpush1.msra.mxu0 %v164
  %2962 = vmatprep.subr.mxu0 0.0
  %2963 = vmatpush1.msra.mxu0 %v165
  %2964 = vmatprep.subr.mxu0 0.0
  %2965 = vmatpush1.msra.mxu0 %v166
  %2966 = vmatprep.subr.mxu0 0.0
  %2967 = vmatpush1.msra.mxu0 %v167
  %2968 = vmatprep.subr.mxu0 0.0
  %2969 = vmatpush1.msra.mxu0 0.0
  %2970 = vmatprep.subr.mxu0 0.0
  %2971 = vmatpush1.msra.mxu0 0.0
  %2972 = vmatprep.subr.mxu0 0.0
  %2973 = vmatpush1.msra.mxu0 0.0
  %2974 = vmatprep.subr.mxu0 0.0
  %2975 = vmatpush1.msra.mxu0 0.0
  %2976 = vmatprep.subr.mxu0 0.0
  %2977 = vmatpush1.msra.mxu0 0.0
  %2978 = vmatprep.subr.mxu0 0.0
  %2979 = vmatpush1.msra.mxu0 0.0
  %2980 = vmatprep.subr.mxu0 0.0
  %2981 = vmatpush1.msra.mxu0 0.0
  %2982 = vmatprep.subr.mxu0 0.0
  %2983 = vmatpush1.msra.mxu0 0.0
  %2984 = vmatprep.subr.mxu0 0.0
  %2985 = vmatpush1.msra.mxu0 0.0
  %2986 = vmatprep.subr.mxu0 0.0
  %2987 = vmatpush1.msra.mxu0 0.0
  %2988 = vmatprep.subr.mxu0 0.0
  %2989 = vmatpush1.msra.mxu0 0.0
  %2990 = vmatprep.subr.mxu0 0.0
  %2991 = vmatpush1.msra.mxu0 0.0
  %2992 = vmatprep.subr.mxu0 0.0
  %2993 = vmatpush1.msra.mxu0 0.0
  %2994 = vmatprep.subr.mxu0 0.0
  %2995 = vmatpush1.msra.mxu0 0.0
  %2996 = vmatprep.subr.mxu0 0.0
  %2997 = vmatpush1.msra.mxu0 0.0
  %2998 = vmatprep.subr.mxu0 0.0
  %2999 = vmatpush1.msra.mxu0 0.0
  %3000 = vmatprep.mubr.f32.mxu0 0.0
  %3001 = vmatmul.mubr.f32.gmra.mrb[0].mxu0 %v2818
  %v3002 = vpop.f32.mrb[0].mxu0
  %v3003 = vadd.f32 0.0, %v3002
  %v3004 = vpop.f32.mrb[0].mxu0
  %3005 = vmatprep.mubr.f32.mxu0 0.0
  %3006 = vmatmul.mubr.f32.gmra.mrb[0].mxu0 %v2819
  %v3007 = vpop.f32.mrb[0].mxu0
  %v3008 = vadd.f32 0.0, %v3007
  %v3009 = vpop.f32.mrb[0].mxu0
  %3010 = vdwg.mxu0
  %v3011 = vadd.f32 %v2934, %v3003
  %v3012 = vadd.f32 %v2935, %v3008
  %v3013 = vtanh.pop %v3011
  %v3014 = vtanh.pop %v3012
  %v3015 = vmul.f32 %v2929, %v3013
  %v3016 = vmul.f32 %v2931, %v3014
  %v3017 = vld [vmem:[%s2838 + $0x4] sm:$0xf]
  %v3018 = vld [vmem:[%s2838 + $0x14] sm:$0xf]
  %v3019 = vunpack.c.l.bf16 %v3017
  %v3020 = vunpack.c.l.bf16 %v3018
  %3021 = vmatprep.subr.mxu0 0.0
  %3022 = vmatpush1.msra.mxu0 %v253
  %3023 = vmatprep.subr.mxu0 0.0
  %3024 = vmatpush1.msra.mxu0 %v254
  %3025 = vmatprep.subr.mxu0 0.0
  %3026 = vmatpush1.msra.mxu0 %v255
  %3027 = vmatprep.subr.mxu0 0.0
  %3028 = vmatpush1.msra.mxu0 %v256
  %3029 = vmatprep.subr.mxu0 0.0
  %3030 = vmatpush1.msra.mxu0 %v257
  %3031 = vmatprep.subr.mxu0 0.0
  %3032 = vmatpush1.msra.mxu0 %v258
  %3033 = vmatprep.subr.mxu0 0.0
  %3034 = vmatpush1.msra.mxu0 %v259
  %3035 = vmatprep.subr.mxu0 0.0
  %3036 = vmatpush1.msra.mxu0 %v260
  %3037 = vmatprep.subr.mxu0 0.0
  %3038 = vmatpush1.msra.mxu0 %v261
  %3039 = vmatprep.subr.mxu0 0.0
  %3040 = vmatpush1.msra.mxu0 %v262
  %3041 = vmatprep.subr.mxu0 0.0
  %3042 = vmatpush1.msra.mxu0 %v263
  %3043 = vmatprep.subr.mxu0 0.0
  %3044 = vmatpush1.msra.mxu0 %v264
  %3045 = vmatprep.subr.mxu0 0.0
  %3046 = vmatpush1.msra.mxu0 %v265
  %3047 = vmatprep.subr.mxu0 0.0
  %3048 = vmatpush1.msra.mxu0 %v266
  %3049 = vmatprep.subr.mxu0 0.0
  %3050 = vmatpush1.msra.mxu0 %v267
  %3051 = vmatprep.subr.mxu0 0.0
  %3052 = vmatpush1.msra.mxu0 %v268
  %3053 = vmatprep.subr.mxu0 0.0
  %3054 = vmatpush1.msra.mxu0 0.0
  %3055 = vmatprep.subr.mxu0 0.0
  %3056 = vmatpush1.msra.mxu0 0.0
  %3057 = vmatprep.subr.mxu0 0.0
  %3058 = vmatpush1.msra.mxu0 0.0
  %3059 = vmatprep.subr.mxu0 0.0
  %3060 = vmatpush1.msra.mxu0 0.0
  %3061 = vmatprep.subr.mxu0 0.0
  %3062 = vmatpush1.msra.mxu0 0.0
  %3063 = vmatprep.subr.mxu0 0.0
  %3064 = vmatpush1.msra.mxu0 0.0
  %3065 = vmatprep.subr.mxu0 0.0
  %3066 = vmatpush1.msra.mxu0 0.0
  %3067 = vmatprep.subr.mxu0 0.0
  %3068 = vmatpush1.msra.mxu0 0.0
  %3069 = vmatprep.subr.mxu0 0.0
  %3070 = vmatpush1.msra.mxu0 0.0
  %3071 = vmatprep.subr.mxu0 0.0
  %3072 = vmatpush1.msra.mxu0 0.0
  %3073 = vmatprep.subr.mxu0 0.0
  %3074 = vmatpush1.msra.mxu0 0.0
  %3075 = vmatprep.subr.mxu0 0.0
  %3076 = vmatpush1.msra.mxu0 0.0
  %3077 = vmatprep.subr.mxu0 0.0
  %3078 = vmatpush1.msra.mxu0 0.0
  %3079 = vmatprep.subr.mxu0 0.0
  %3080 = vmatpush1.msra.mxu0 0.0
  %3081 = vmatprep.subr.mxu0 0.0
  %3082 = vmatpush1.msra.mxu0 0.0
  %3083 = vmatprep.subr.mxu0 0.0
  %3084 = vmatpush1.msra.mxu0 0.0
  %3085 = vmatprep.mubr.f32.mxu0 0.0
  %3086 = vmatmul.mubr.f32.gmra.mrb[0].mxu0 %v2818
  %v3087 = vpop.f32.mrb[0].mxu0
  %v3088 = vadd.f32 0.0, %v3087
  %v3089 = vpop.f32.mrb[0].mxu0
  %3090 = vmatprep.mubr.f32.mxu0 0.0
  %3091 = vmatmul.mubr.f32.gmra.mrb[0].mxu0 %v2819
  %v3092 = vpop.f32.mrb[0].mxu0
  %v3093 = vadd.f32 0.0, %v3092
  %v3094 = vpop.f32.mrb[0].mxu0
  %3095 = vdwg.mxu0
  %v3096 = vadd.f32 %v3019, %v3088
  %v3097 = vadd.f32 %v3020, %v3093
  %v3098 = vxor.u32 %v3096, 2147483648
  %v3099 = vxor.u32 %v3097, 2147483648
  %v3100 = vmul.f32 %v3098, 1.442695
  %v3101 = vpow.pop %v3100
  %v3102 = vmul.f32 %v3099, 1.442695
  %v3103 = vpow.pop %v3102
  %v3104 = vadd.f32 %v3101, 1.0
  %v3105 = vadd.f32 %v3103, 1.0
  %v3106 = vrcp.pop %v3104
  %v3107 = vmul.f32 1.0, %v3106
  %v3108 = vrcp.pop %v3105
  %v3109 = vmul.f32 1.0, %v3108
  %v3110 = vmul.f32 %v3107, %v2721
  %v3111 = vmul.f32 %v3109, %v2722
  %v3112 = vadd.f32 %v3110, %v3015
  %v3113 = vadd.f32 %v3111, %v3016
  %v3114 = vld [vmem:[%s2838 + $0xc] sm:$0xf]
  %v3115 = vld [vmem:[%s2838 + $0x1c] sm:$0xf]
  %v3116 = vunpack.c.l.bf16 %v3114
  %v3117 = vunpack.c.l.bf16 %v3115
  %3118 = vmatprep.subr.mxu0 0.0
  %3119 = vmatpush1.msra.mxu0 %v366
  %3120 = vmatprep.subr.mxu0 0.0
  %3121 = vmatpush1.msra.mxu0 %v367
  %3122 = vmatprep.subr.mxu0 0.0
  %3123 = vmatpush1.msra.mxu0 %v368
  %3124 = vmatprep.subr.mxu0 0.0
  %3125 = vmatpush1.msra.mxu0 %v369
  %3126 = vmatprep.subr.mxu0 0.0
  %3127 = vmatpush1.msra.mxu0 %v370
  %3128 = vmatprep.subr.mxu0 0.0
  %3129 = vmatpush1.msra.mxu0 %v371
  %3130 = vmatprep.subr.mxu0 0.0
  %3131 = vmatpush1.msra.mxu0 %v372
  %3132 = vmatprep.subr.mxu0 0.0
  %3133 = vmatpush1.msra.mxu0 %v373
  %3134 = vmatprep.subr.mxu0 0.0
  %3135 = vmatpush1.msra.mxu0 %v374
  %3136 = vmatprep.subr.mxu0 0.0
  %3137 = vmatpush1.msra.mxu0 %v375
  %3138 = vmatprep.subr.mxu0 0.0
  %3139 = vmatpush1.msra.mxu0 %v376
  %3140 = vmatprep.subr.mxu0 0.0
  %3141 = vmatpush1.msra.mxu0 %v377
  %3142 = vmatprep.subr.mxu0 0.0
  %3143 = vmatpush1.msra.mxu0 %v378
  %3144 = vmatprep.subr.mxu0 0.0
  %3145 = vmatpush1.msra.mxu0 %v379
  %3146 = vmatprep.subr.mxu0 0.0
  %3147 = vmatpush1.msra.mxu0 %v380
  %3148 = vmatprep.subr.mxu0 0.0
  %3149 = vmatpush1.msra.mxu0 %v381
  %3150 = vmatprep.subr.mxu0 0.0
  %3151 = vmatpush1.msra.mxu0 0.0
  %3152 = vmatprep.subr.mxu0 0.0
  %3153 = vmatpush1.msra.mxu0 0.0
  %3154 = vmatprep.subr.mxu0 0.0
  %3155 = vmatpush1.msra.mxu0 0.0
  %3156 = vmatprep.subr.mxu0 0.0
  %3157 = vmatpush1.msra.mxu0 0.0
  %3158 = vmatprep.subr.mxu0 0.0
  %3159 = vmatpush1.msra.mxu0 0.0
  %3160 = vmatprep.subr.mxu0 0.0
  %3161 = vmatpush1.msra.mxu0 0.0
  %3162 = vmatprep.subr.mxu0 0.0
  %3163 = vmatpush1.msra.mxu0 0.0
  %3164 = vmatprep.subr.mxu0 0.0
  %3165 = vmatpush1.msra.mxu0 0.0
  %3166 = vmatprep.subr.mxu0 0.0
  %3167 = vmatpush1.msra.mxu0 0.0
  %3168 = vmatprep.subr.mxu0 0.0
  %3169 = vmatpush1.msra.mxu0 0.0
  %3170 = vmatprep.subr.mxu0 0.0
  %3171 = vmatpush1.msra.mxu0 0.0
  %3172 = vmatprep.subr.mxu0 0.0
  %3173 = vmatpush1.msra.mxu0 0.0
  %3174 = vmatprep.subr.mxu0 0.0
  %3175 = vmatpush1.msra.mxu0 0.0
  %3176 = vmatprep.subr.mxu0 0.0
  %3177 = vmatpush1.msra.mxu0 0.0
  %3178 = vmatprep.subr.mxu0 0.0
  %3179 = vmatpush1.msra.mxu0 0.0
  %3180 = vmatprep.subr.mxu0 0.0
  %3181 = vmatpush1.msra.mxu0 0.0
  %3182 = vmatprep.mubr.f32.mxu0 0.0
  %3183 = vmatmul.mubr.f32.gmra.mrb[0].mxu0 %v2818
  %v3184 = vpop.f32.mrb[0].mxu0
  %v3185 = vadd.f32 0.0, %v3184
  %v3186 = vpop.f32.mrb[0].mxu0
  %3187 = vmatprep.mubr.f32.mxu0 0.0
  %3188 = vmatmul.mubr.f32.gmra.mrb[0].mxu0 %v2819
  %v3189 = vpop.f32.mrb[0].mxu0
  %v3190 = vadd.f32 0.0, %v3189
  %v3191 = vpop.f32.mrb[0].mxu0
  %3192 = vdwg.mxu0
  %v3193 = vadd.f32 %v3116, %v3185
  %v3194 = vadd.f32 %v3117, %v3190
  %v3195 = vxor.u32 %v3193, 2147483648
  %v3196 = vxor.u32 %v3194, 2147483648
  %v3197 = vmul.f32 %v3195, 1.442695
  %v3198 = vpow.pop %v3197
  %v3199 = vmul.f32 %v3196, 1.442695
  %v3200 = vpow.pop %v3199
  %v3201 = vadd.f32 %v3198, 1.0
  %v3202 = vadd.f32 %v3200, 1.0
  %v3203 = vrcp.pop %v3201
  %v3204 = vmul.f32 1.0, %v3203
  %v3205 = vrcp.pop %v3202
  %v3206 = vmul.f32 1.0, %v3205
  %v3207 = vtanh.pop %v3112
  %v3208 = vtanh.pop %v3113
  %v3209 = vmul.f32 %v3204, %v3207
  %v3210 = vmul.f32 %v3206, %v3208
  %s3211 = sadd.s32 %s32, 7
  %v3212 = vstv %s3211
  %vm3213 = vcmp.lt.s32.totalorder %v3212, %v30
  %vm3214 = vcmp.lt.s32.totalorder %v3212, %v31
  %v3215 = vsel %vm3213, 1, 0
  %v3216 = vsel %vm3214, 1, 0
  %3217 = vset.pattern.permute.xlu0 0
  %3218 = vperm.xlu0 %3217, %v3215
  %v3219 = vpop.permute.xlu0 %3218
  %3220 = vset.pattern.permute.xlu0 0
  %3221 = vperm.xlu0 %3220, %v3216
  %v3222 = vpop.permute.xlu0 %3221
  %vm3223 = vcmp.eq.s32.totalorder %v3219, 1
  %vm3224 = vcmp.eq.s32.totalorder %v3222, 1
  %v3225 = vsel %vm3223, %v3209, 0.0
  %v3226 = vsel %vm3224, %v3210, 0.0
  %v3227 = vadd.f32 %v2836, %v3225
  %v3228 = vadd.f32 %v2837, %v3226
  %3229 = vst [vmem:[#allocation2] sm:$0xff] %v3209
  %3230 = vst [vmem:[#allocation2 + $0x8] sm:$0xff] %v3210
  %3231 = vst [vmem:[#allocation3] sm:$0xff] %v3112
  %3232 = vst [vmem:[#allocation3 + $0x8] sm:$0xff] %v3113
  %3233 = vst [vmem:[#allocation4] sm:$0xff] %v3227
  %3234 = vst [vmem:[#allocation4 + $0x8] sm:$0xff] %v3228
  // Predicated region
  $region26: #{imdb_net_forward.1} parent=0 // pred_check
    %p3235 = pneg %p20
  $region27: #{imdb_net_forward.1} parent=0 // pred_check_branch
    %3237 = sbr.rel (%p3235) target = $region29
  $region28: #{imdb_net_forward.1} parent=0 // pred_region
    %vm3238 = vcmp.gt.s32.totalorder %v30, 1
    %v3239 = vsel %vm3238, %v30, 1
    %vm3240 = vcmp.gt.s32.totalorder %v31, 1
    %v3241 = vsel %vm3240, %v31, 1
    %v3242 = vcvt.s32.f32 %v3239
    %v3243 = vcvt.s32.f32 %v3241
    %v3244 = vrcp.pop %v3242
    %v3245 = vmul.f32 1.0, %v3244
    %v3246 = vrcp.pop %v3243
    %v3247 = vmul.f32 1.0, %v3246
    %v3248 = vld [vmem:[#allocation4] sm:$0xff]
    %v3249 = vld [vmem:[#allocation4 + $0x8] sm:$0xff]
    %3251 = vset.pattern.permute.xlu0 0
    %3252 = vperm.xlu0 %3251, %v3245
    %v3253 = vpop.permute.xlu0 %3252
    %3256 = vset.pattern.permute.xlu0 0
    %3257 = vperm.xlu0 %3256, %v3247
    %v3258 = vpop.permute.xlu0 %3257
    %v3260 = vmul.f32 %v3248, %v3253
    %v3261 = vmul.f32 %v3249, %v3258
    %v3262 = vld [vmem:[%s3] sm:$0xff]
    %v3263 = vld [vmem:[%s3 + $0x8] sm:$0xff]
    %v3264 = vld [vmem:[%s3 + $0x10] sm:$0xff]
    %v3265 = vld [vmem:[%s3 + $0x18] sm:$0xff]
    %v3266 = vld [vmem:[%s3 + $0x20] sm:$0xff]
    %v3267 = vld [vmem:[%s3 + $0x28] sm:$0xff]
    %v3268 = vld [vmem:[%s3 + $0x30] sm:$0xff]
    %v3269 = vld [vmem:[%s3 + $0x38] sm:$0xff]
    %v3270 = vld [vmem:[%s3 + $0x40] sm:$0xff]
    %v3271 = vld [vmem:[%s3 + $0x48] sm:$0xff]
    %v3272 = vld [vmem:[%s3 + $0x50] sm:$0xff]
    %v3273 = vld [vmem:[%s3 + $0x58] sm:$0xff]
    %v3274 = vld [vmem:[%s3 + $0x60] sm:$0xff]
    %v3275 = vld [vmem:[%s3 + $0x68] sm:$0xff]
    %v3276 = vld [vmem:[%s3 + $0x70] sm:$0xff]
    %v3277 = vld [vmem:[%s3 + $0x78] sm:$0xff]
    %v3278 = vld [vmem:[%s4] sm:$0x1]
    %v3280 = vlaneseq
    %v3281 = vshrl.u32 %v3280, 7
    %v3282 = vsub.s32 0, %v3281
    %v3283 = vrot.slane %v3278, %v3282
    %3285 = vmatprep.subr.mxu0 0.0
    %3286 = vmatpush1.msra.mxu0 %v3262
    %3287 = vmatprep.subr.mxu0 0.0
    %3288 = vmatpush1.msra.mxu0 %v3263
    %3289 = vmatprep.subr.mxu0 0.0
    %3290 = vmatpush1.msra.mxu0 %v3264
    %3291 = vmatprep.subr.mxu0 0.0
    %3292 = vmatpush1.msra.mxu0 %v3265
    %3293 = vmatprep.subr.mxu0 0.0
    %3294 = vmatpush1.msra.mxu0 %v3266
    %3295 = vmatprep.subr.mxu0 0.0
    %3296 = vmatpush1.msra.mxu0 %v3267
    %3297 = vmatprep.subr.mxu0 0.0
    %3298 = vmatpush1.msra.mxu0 %v3268
    %3299 = vmatprep.subr.mxu0 0.0
    %3300 = vmatpush1.msra.mxu0 %v3269
    %3301 = vmatprep.subr.mxu0 0.0
    %3302 = vmatpush1.msra.mxu0 %v3270
    %3303 = vmatprep.subr.mxu0 0.0
    %3304 = vmatpush1.msra.mxu0 %v3271
    %3305 = vmatprep.subr.mxu0 0.0
    %3306 = vmatpush1.msra.mxu0 %v3272
    %3307 = vmatprep.subr.mxu0 0.0
    %3308 = vmatpush1.msra.mxu0 %v3273
    %3309 = vmatprep.subr.mxu0 0.0
    %3310 = vmatpush1.msra.mxu0 %v3274
    %3311 = vmatprep.subr.mxu0 0.0
    %3312 = vmatpush1.msra.mxu0 %v3275
    %3313 = vmatprep.subr.mxu0 0.0
    %3314 = vmatpush1.msra.mxu0 %v3276
    %3315 = vmatprep.subr.mxu0 0.0
    %3316 = vmatpush1.msra.mxu0 %v3277
    %3317 = vmatprep.subr.mxu0 0.0
    %3318 = vmatpush1.msra.mxu0 0.0
    %3319 = vmatprep.subr.mxu0 0.0
    %3320 = vmatpush1.msra.mxu0 0.0
    %3321 = vmatprep.subr.mxu0 0.0
    %3322 = vmatpush1.msra.mxu0 0.0
    %3323 = vmatprep.subr.mxu0 0.0
    %3324 = vmatpush1.msra.mxu0 0.0
    %3325 = vmatprep.subr.mxu0 0.0
    %3326 = vmatpush1.msra.mxu0 0.0
    %3327 = vmatprep.subr.mxu0 0.0
    %3328 = vmatpush1.msra.mxu0 0.0
    %3329 = vmatprep.subr.mxu0 0.0
    %3330 = vmatpush1.msra.mxu0 0.0
    %3331 = vmatprep.subr.mxu0 0.0
    %3332 = vmatpush1.msra.mxu0 0.0
    %3333 = vmatprep.subr.mxu0 0.0
    %3334 = vmatpush1.msra.mxu0 0.0
    %3335 = vmatprep.subr.mxu0 0.0
    %3336 = vmatpush1.msra.mxu0 0.0
    %3337 = vmatprep.subr.mxu0 0.0
    %3338 = vmatpush1.msra.mxu0 0.0
    %3339 = vmatprep.subr.mxu0 0.0
    %3340 = vmatpush1.msra.mxu0 0.0
    %3341 = vmatprep.subr.mxu0 0.0
    %3342 = vmatpush1.msra.mxu0 0.0
    %3343 = vmatprep.subr.mxu0 0.0
    %3344 = vmatpush1.msra.mxu0 0.0
    %3345 = vmatprep.subr.mxu0 0.0
    %3346 = vmatpush1.msra.mxu0 0.0
    %3347 = vmatprep.subr.mxu0 0.0
    %3348 = vmatpush1.msra.mxu0 0.0
    %3349 = vmatprep.mubr.f32.mxu0 0.0
    %3350 = vmatmul.mubr.f32.gmra.mrb[0].mxu0 %v3260
    %v3351 = vpop.f32.mrb[0].mxu0
    %v3352 = vadd.f32 %v3283, %v3351
    %v3353 = vpop.f32.mrb[0].mxu0
    %3354 = vmatprep.mubr.f32.mxu0 0.0
    %3355 = vmatmul.mubr.f32.gmra.mrb[0].mxu0 %v3261
    %v3356 = vpop.f32.mrb[0].mxu0
    %v3357 = vadd.f32 %v3283, %v3356
    %v3358 = vpop.f32.mrb[0].mxu0
    %3359 = vdwg.mxu0
    %v3360 = vxor.u32 %v3352, 2147483648
    %v3361 = vxor.u32 %v3357, 2147483648
    %v3362 = vmul.f32 %v3360, 1.442695
    %v3363 = vpow.pop %v3362
    %v3364 = vmul.f32 %v3361, 1.442695
    %v3365 = vpow.pop %v3364
    %v3366 = vadd.f32 %v3363, 1.0
    %v3367 = vadd.f32 %v3365, 1.0
    %v3368 = vrcp.pop %v3366
    %v3369 = vmul.f32 1.0, %v3368
    %v3370 = vrcp.pop %v3367
    %v3371 = vmul.f32 1.0, %v3370
    %3372 = vst [vmem:[%s5] sm:$0xff] %v3369
    %3373 = vst [vmem:[%s5 + $0x8] sm:$0xff] %v3371
  $region29: #{imdb_net_forward.1} parent=0 // pred_fallthru
    _
  // Predicated region
  $region30: #{imdb_net_forward.1} parent=0 // pred_check
    _
  $region31: #{imdb_net_forward.1} parent=0 // pred_check_branch
    %3375 = sbr.rel (0) target = $region33
  $region32: #{imdb_net_forward.1} parent=0 // pred_region
    _
  $region33: #{imdb_net_forward.1} parent=0 // pred_fallthru
    _
  // Predicated region
  $region34: #{imdb_net_forward.1} parent=0 // pred_check
    _
  $region35: #{imdb_net_forward.1} parent=0 // pred_check_branch
    %3377 = sbr.rel (0) target = $region37
  $region36: #{imdb_net_forward.1} parent=0 // pred_region
    _
  $region37: #{imdb_net_forward.1} parent=0 // pred_fallthru
    _

</llo_original>
